<compile_context>
chip_gen: v5e
topology: v5e:2x2
jax: 0.10.0
libtpu: 0.0.40
codegen_flags: <defaults>
</compile_context>

<pallas_src>
import functools

import jax
import jax.numpy as jnp
from jax.experimental import pallas as pl
from jax.experimental.pallas import tpu as pltpu


# ------------------------------ fused kernel ------------------------------- #

def _fused_kernel(x_mid_ref, x_top_ref, x_bot_ref,
                  w1_ref, b1_ref, wh_ref, bh_ref, whd_ref, bhd_ref,
                  wo_ref, bo_ref, out_ref, feat_ref, pb_in, pb_head):
    """Whole residual block for one (batch, row-slab) grid point.

    x_mid_ref : (1, TH, W, Cin)  f32   slab rows [r0, r0+TH)
    x_top_ref : (1, 4,  W, Cin)  f32   rows [r0-4, r0)   (garbage when j == 0)
    x_bot_ref : (1, 4,  W, Cin)  f32   rows [r0+TH, r0+TH+4) (garbage at last j)
    w*_ref    : (3, 3*Cin, Cout) bf16  weights packed per kernel row (ky)
    b*_ref    : (1, Cout)        f32   biases
    out_ref   : (1, TH, W, 3*c3) f32   concat(conv_o, conv_dif_left, conv_dif_right)
    feat_ref  : (1, TH, W, Cin)  f32   residual feature output
    pb_in     : (TH+8, W, 3*Cin)  bf16 dx-pre-shifted activation scratch
    pb_head   : (TH+2, W, 3*Chead) bf16 dx-pre-shifted activation scratch (heads)
    """
    _, th, w, cin = x_mid_ref.shape
    chead = whd_ref.shape[-1]
    cout = wo_ref.shape[-1]
    j = pl.program_id(1)
    last = pl.num_programs(1) - 1

    def dx_pack(a):
        """(R, W, C) -> (R, W, 3C): kx-shifted copies with zero W-edge padding."""
        r, _, c = a.shape
        z = jnp.zeros((r, 1, c), a.dtype)
        left = jnp.concatenate([z, a[:, :w - 1, :]], axis=1)    # in[.., x-1, :]
        right = jnp.concatenate([a[:, 1:, :], z], axis=1)       # in[.., x+1, :]
        return jnp.concatenate([left, a, right], axis=-1)

    def fill(pb, act_f32):
        pb[0:act_f32.shape[0]] = dx_pack(act_f32).astype(pb.dtype)

    def conv3x3(pb, rows_out, wk_ref, bk_ref):
        """3x3 SAME conv from a dx-pre-shifted scratch: 3 MXU matmuls, K=3C."""
        kdim = pb.shape[-1]
        co = wk_ref.shape[-1]
        acc = jnp.broadcast_to(bk_ref[...].astype(jnp.float32), (rows_out * w, co))
        for ky in range(3):
            patch = pb[ky:ky + rows_out, :, :].reshape(rows_out * w, kdim)
            acc = acc + jnp.dot(patch, wk_ref[ky],
                                preferred_element_type=jnp.float32)
        return acc  # (rows_out*W, Cout) f32

    def zero_outside_image(v, n_rows):
        """Zero the n_rows slab rows that fall outside the image (top/bottom)."""
        r = v.shape[0]
        rows = jax.lax.broadcasted_iota(jnp.int32, (r, 1, 1), 0)
        keep = jnp.logical_and(jnp.logical_or(j > 0, rows >= n_rows),
                               jnp.logical_or(j < last, rows < r - n_rows))
        return jnp.where(keep, v, 0.0)

    # x slab with a 4-row halo on each side; out-of-image halos are zero.
    x_top = jnp.where(j > 0, x_top_ref[0], 0.0)
    x_bot = jnp.where(j < last, x_bot_ref[0], 0.0)
    x_slab = jnp.concatenate([x_top, x_mid_ref[0], x_bot], axis=0)  # (TH+8, W, Cin)

    # conv1 + ReLU                       (slab rows [-3, TH+3))
    fill(pb_in, x_slab)
    t = jnp.maximum(conv3x3(pb_in, th + 6, w1_ref, b1_ref), 0.0)
    t = zero_outside_image(t.reshape(th + 6, w, cin), 3)

    # convh + residual add               (slab rows [-2, TH+2))
    fill(pb_in, t)
    ch = conv3x3(pb_in, th + 4, wh_ref, bh_ref).reshape(th + 4, w, cin)
    feat = zero_outside_image(ch + x_slab[2:th + 6], 2)
    feat_ref[0] = feat[2:th + 2].astype(feat_ref.dtype)

    # fused branch heads (Cin -> 3*Cin) + ReLU   (slab rows [-1, TH+1))
    fill(pb_in, feat)
    hh = jnp.maximum(conv3x3(pb_in, th + 2, whd_ref, bhd_ref), 0.0)
    hh = zero_outside_image(hh.reshape(th + 2, w, chead), 1)

    # fused (block-diagonal) branch output convs (3*Cin -> 3*c3)   (rows [0, TH))
    fill(pb_head, hh)
    out = conv3x3(pb_head, th, wo_ref, bo_ref)
    out_ref[0] = out.reshape(th, w, cout).astype(out_ref.dtype)


# ------------------------------ pallas wrapper ----------------------------- #

def _choose_tile_h(h):
    """Largest multiple of 8 that divides H, capped at 64 rows per slab."""
    best = None
    for th in range(8, min(h, 64) + 1, 8):
        if h % th == 0:
            best = th
    return best if best is not None else h


def fused_forward_nhwc(x_nhwc, pp, tile_h=None):
    n, h, w, cin = x_nhwc.shape
    chead = pp["w_head"].shape[-1]     # 3 * nf
    cout = pp["w_out"].shape[-1]       # 3 * scale*scale*3

    th = int(tile_h) if tile_h is not None else _choose_tile_h(h)
    assert h % 4 == 0, "H must be a multiple of 4"
    assert h % th == 0, "tile_h must divide H"
    assert th % 4 == 0 and (th % 8 == 0 or th == h), \
        "tile_h must be a multiple of 8 (or equal H)"
    nbh = h // th
    hb4 = th // 4                      # halo blocks are 4 rows tall

    # Honest cost estimate (no block-diagonal zero MACs, no halo recompute).
    flops = 2 * n * h * w * 9 * cin * (2 * cin + chead + cout)
    weight_bytes = 2 * sum(int(pp[k].size) for k in ("w1", "wh", "w_head", "w_out"))
    bytes_accessed = (4 * (int(x_nhwc.size) + n * h * w * (cout + cin))
                      + 4 * n * nbh * 8 * w * cin            # halo re-reads
                      + weight_bytes)

    # VMEM budget: double-buffered blocks + scratches + f32 temporaries.
    blk_bytes = 2 * 4 * (th * w * cin + 8 * w * cin + th * w * (cout + cin))
    scratch_bytes = 2 * ((th + 8) * w * 3 * cin + (th + 2) * w * 3 * chead)
    temp_bytes = 6 * (th + 8) * w * chead * 4
    vmem_limit = int(min(max(2 * (blk_bytes + scratch_bytes + 2 * weight_bytes
                                  + temp_bytes), 32 * 1024 * 1024),
                         100 * 1024 * 1024))

    grid_spec = pltpu.PrefetchScalarGridSpec(
        num_scalar_prefetch=0,
        grid=(n, nbh),
        in_specs=[
            pl.BlockSpec((1, th, w, cin), lambda b, j: (b, j, 0, 0)),
            pl.BlockSpec((1, 4, w, cin),
                         lambda b, j: (b, jnp.maximum(j * hb4 - 1, 0), 0, 0)),
            pl.BlockSpec((1, 4, w, cin),
                         lambda b, j: (b, jnp.minimum((j + 1) * hb4,
                                                      h // 4 - 1), 0, 0)),
            pl.BlockSpec(pp["w1"].shape, lambda b, j: (0, 0, 0)),
            pl.BlockSpec(pp["b1"].shape, lambda b, j: (0, 0)),
            pl.BlockSpec(pp["wh"].shape, lambda b, j: (0, 0, 0)),
            pl.BlockSpec(pp["bh"].shape, lambda b, j: (0, 0)),
            pl.BlockSpec(pp["w_head"].shape, lambda b, j: (0, 0, 0)),
            pl.BlockSpec(pp["b_head"].shape, lambda b, j: (0, 0)),
            pl.BlockSpec(pp["w_out"].shape, lambda b, j: (0, 0, 0)),
            pl.BlockSpec(pp["b_out"].shape, lambda b, j: (0, 0)),
        ],
        out_specs=[
            pl.BlockSpec((1, th, w, cout), lambda b, j: (b, j, 0, 0)),
            pl.BlockSpec((1, th, w, cin), lambda b, j: (b, j, 0, 0)),
        ],
        scratch_shapes=[
            pltpu.VMEM((th + 8, w, 3 * cin), jnp.bfloat16),
            pltpu.VMEM((th + 2, w, 3 * chead), jnp.bfloat16),
        ],
    )
    return pl.pallas_call(
        _fused_kernel,
        out_shape=(jax.ShapeDtypeStruct((n, h, w, cout), jnp.float32),
                   jax.ShapeDtypeStruct((n, h, w, cin), jnp.float32)),
        grid_spec=grid_spec,
        compiler_params=pltpu.CompilerParams(
            dimension_semantics=("parallel", "parallel"),
            vmem_limit_bytes=vmem_limit),
        cost_estimate=pl.CostEstimate(flops=flops, transcendentals=0,
                                      bytes_accessed=bytes_accessed),
    )(x_nhwc, x_nhwc, x_nhwc, pp["w1"], pp["b1"], pp["wh"], pp["bh"],
      pp["w_head"], pp["b_head"], pp["w_out"], pp["b_out"])


# -------------------------- parameter initialization ----------------------- #

def _conv_params(key, c_in, c_out):
    # kaiming_normal_(a=0, mode='fan_in') then *0.1 ; bias zero.
    fan_in = c_in * 3 * 3
    std = (2.0 / fan_in) ** 0.5
    w = jax.random.normal(key, (3, 3, c_in, c_out), jnp.float32) * std * 0.1
    b = jnp.zeros((c_out,), jnp.float32)
    return w, b


def init_params(key, nf, scale):
    names = ["conv1", "convh", "conv_head_o", "conv_head_dif_left",
             "conv_head_dif_right", "conv_o", "conv_dif_left",
             "conv_dif_right"]
    keys = jax.random.split(key, len(names))
    c3 = scale * scale * 3
    outs = {"conv1": nf, "convh": nf, "conv_head_o": nf,
            "conv_head_dif_left": nf, "conv_head_dif_right": nf,
            "conv_o": c3, "conv_dif_left": c3, "conv_dif_right": c3}
    return {nm: _conv_params(k, nf, outs[nm]) for nm, k in zip(names, keys)}


def pack_params(params, nf, scale):
    """Branch-concat / block-diag the weights, pack taps per ky, cast bf16."""
    c3 = scale * scale * 3

    def pack_w(w):          # (3,3,Cin,Cout) -> (3, 3*Cin, Cout) bf16
        cin, cout = w.shape[2], w.shape[3]
        return w.reshape(3, 3 * cin, cout).astype(jnp.bfloat16)

    def pack_b(b):
        return b.reshape(1, -1).astype(jnp.float32)

    w1, b1 = params["conv1"]
    wh, bh = params["convh"]
    w_head = jnp.concatenate([params["conv_head_o"][0],
                              params["conv_head_dif_left"][0],
                              params["conv_head_dif_right"][0]], axis=3)
    b_head = jnp.concatenate([params["conv_head_o"][1],
                              params["conv_head_dif_left"][1],
                              params["conv_head_dif_right"][1]])
    w_out = jnp.zeros((3, 3, 3 * nf, 3 * c3), jnp.float32)
    w_out = w_out.at[:, :, 0 * nf:1 * nf, 0 * c3:1 * c3].set(params["conv_o"][0])
    w_out = w_out.at[:, :, 1 * nf:2 * nf, 1 * c3:2 * c3].set(params["conv_dif_left"][0])
    w_out = w_out.at[:, :, 2 * nf:3 * nf, 2 * c3:3 * c3].set(params["conv_dif_right"][0])
    b_out = jnp.concatenate([params["conv_o"][1],
                             params["conv_dif_left"][1],
                             params["conv_dif_right"][1]])
    return {"w1": pack_w(w1), "b1": pack_b(b1),
            "wh": pack_w(wh), "bh": pack_b(bh),
            "w_head": pack_w(w_head), "b_head": pack_b(b_head),
            "w_out": pack_w(w_out), "b_out": pack_b(b_out)}


# ------------------------------ forward pass ------------------------------- #

@functools.partial(jax.jit, static_argnames=("tile_h",))
def residual_block_nobn_last(x_nchw, packed, tile_h=None):
    """Matches ResidualBlock_noBN_last.forward; in/out are NCHW like PyTorch."""
    x = jnp.transpose(x_nchw, (0, 2, 3, 1))          # -> NHWC
    out_cat, feat = fused_forward_nhwc(x, packed, tile_h)
    c3 = out_cat.shape[-1] // 3
    to_nchw = lambda a: jnp.transpose(a, (0, 3, 1, 2))
    return (to_nchw(out_cat[..., :c3]),
            to_nchw(out_cat[..., c3:2 * c3]),
            to_nchw(out_cat[..., 2 * c3:]),
            to_nchw(feat))


# ------------------------------ references --------------------------------- #

def _conv_ref(x, w, b, *, bf16):
    if bf16:
        x = x.astype(jnp.bfloat16)
        w = w.astype(jnp.bfloat16)
    y = jax.lax.conv_general_dilated(
        x, w, window_strides=(1, 1), padding="SAME",
        dimension_numbers=("NHWC", "HWIO", "NHWC"),
        preferred_element_type=jnp.float32)
    return y + b


def _forward_ref(x_nchw, params, *, bf16):
    x = jnp.transpose(x_nchw, (0, 2, 3, 1))
    feat = jax.nn.relu(_conv_ref(x, *params["conv1"], bf16=bf16))
    feat = _conv_ref(feat, *params["convh"], bf16=bf16)
    feat = x + feat
    out = _conv_ref(jax.nn.relu(_conv_ref(feat, *params["conv_head_o"], bf16=bf16)),
                    *params["conv_o"], bf16=bf16)
    out_l = _conv_ref(
        jax.nn.relu(_conv_ref(feat, *params["conv_head_dif_left"], bf16=bf16)),
        *params["conv_dif_left"], bf16=bf16)
    out_r = _conv_ref(
        jax.nn.relu(_conv_ref(feat, *params["conv_head_dif_right"], bf16=bf16)),
        *params["conv_dif_right"], bf16=bf16)
    to_nchw = lambda a: jnp.transpose(a, (0, 3, 1, 2))
    return to_nchw(out), to_nchw(out_l), to_nchw(out_r), to_nchw(feat)


# ---------------------------------- main ----------------------------------- #

if __name__ == "__main__":
    nf, scale = 32, 2          # nf channels; output convs -> scale*scale*3 = 12
    N, H, W = 2, 16, 16

    key = jax.random.PRNGKey(0)
    kx, kp = jax.random.split(key)
    x = jax.random.normal(kx, (N, nf, H, W), jnp.float32)
    params = init_params(kp, nf, scale)
    packed = pack_params(params, nf, scale)

    # tile_h=8 -> two row-slabs per image, exercising the halo/tiling path.
    outs = residual_block_nobn_last(x, packed, tile_h=8)
    outs = jax.block_until_ready(outs)

    # shape checks (PyTorch semantics)
    c3 = scale * scale * 3
    assert outs[0].shape == (N, c3, H, W)
    assert outs[1].shape == (N, c3, H, W)
    assert outs[2].shape == (N, c3, H, W)
    assert outs[3].shape == (N, nf, H, W)

    # tight check vs a bf16-matmul-consistent reference
    refs_bf16 = jax.jit(functools.partial(_forward_ref, bf16=True))(x, params)
    for got, ref in zip(outs, refs_bf16):
        if not jnp.allclose(got, ref, atol=2e-3, rtol=2e-3):
            err = float(jnp.max(jnp.abs(got - ref)))
            raise AssertionError(f"mismatch vs bf16 reference (max err {err})")

    # loose sanity check vs the pure-f32 reference
    refs_f32 = jax.jit(functools.partial(_forward_ref, bf16=False))(x, params)
    for got, ref in zip(outs, refs_f32):
        if not jnp.allclose(got, ref, atol=2e-2, rtol=2e-2):
            err = float(jnp.max(jnp.abs(got - ref)))
            raise AssertionError(f"mismatch vs f32 reference (max err {err})")

    print("KERNEL_OK")
</pallas_src>

<mosaic_0001>
module attributes {stable_mosaic.version = 11 : i64} {
  func.func @_fused_kernel(%arg0: i32, %arg1: i32, %arg2: memref<1x8x16x32xf32, #tpu.memory_space<vmem>>, %arg3: memref<1x4x16x32xf32, #tpu.memory_space<vmem>>, %arg4: memref<1x4x16x32xf32, #tpu.memory_space<vmem>>, %arg5: memref<3x96x32xbf16, #tpu.memory_space<vmem>>, %arg6: memref<1x32xf32, #tpu.memory_space<vmem>>, %arg7: memref<3x96x32xbf16, #tpu.memory_space<vmem>>, %arg8: memref<1x32xf32, #tpu.memory_space<vmem>>, %arg9: memref<3x96x96xbf16, #tpu.memory_space<vmem>>, %arg10: memref<1x96xf32, #tpu.memory_space<vmem>>, %arg11: memref<3x288x36xbf16, #tpu.memory_space<vmem>>, %arg12: memref<1x36xf32, #tpu.memory_space<vmem>>, %arg13: memref<1x8x16x36xf32, #tpu.memory_space<vmem>>, %arg14: memref<1x8x16x32xf32, #tpu.memory_space<vmem>>, %arg15: memref<16x16x96xbf16, #tpu.memory_space<vmem>>, %arg16: memref<10x16x288xbf16, #tpu.memory_space<vmem>>) attributes {dimension_semantics = [#tpu.dimension_semantics<parallel>, #tpu.dimension_semantics<parallel>], iteration_bounds = array<i64: 2, 2>, scalar_prefetch = 0 : i64, scratch_operands = 2 : i64, tpu.core_type = #tpu.core_type<tc>, window_params = [{transform_indices = @transform_0, window_bounds = array<i64: 1, 8, 16, 32>}, {transform_indices = @transform_1, window_bounds = array<i64: 1, 4, 16, 32>}, {transform_indices = @transform_2, window_bounds = array<i64: 1, 4, 16, 32>}, {pipeline_mode = #tpu.pipeline_mode<synchronous>, transform_indices = @transform_3, window_bounds = array<i64: 3, 96, 32>}, {pipeline_mode = #tpu.pipeline_mode<synchronous>, transform_indices = @transform_4, window_bounds = array<i64: 1, 32>}, {pipeline_mode = #tpu.pipeline_mode<synchronous>, transform_indices = @transform_5, window_bounds = array<i64: 3, 96, 32>}, {pipeline_mode = #tpu.pipeline_mode<synchronous>, transform_indices = @transform_6, window_bounds = array<i64: 1, 32>}, {pipeline_mode = #tpu.pipeline_mode<synchronous>, transform_indices = @transform_7, window_bounds = array<i64: 3, 96, 96>}, {pipeline_mode = #tpu.pipeline_mode<synchronous>, transform_indices = @transform_8, window_bounds = array<i64: 1, 96>}, {pipeline_mode = #tpu.pipeline_mode<synchronous>, transform_indices = @transform_9, window_bounds = array<i64: 3, 288, 36>}, {pipeline_mode = #tpu.pipeline_mode<synchronous>, transform_indices = @transform_10, window_bounds = array<i64: 1, 36>}, {transform_indices = @transform_11, window_bounds = array<i64: 1, 8, 16, 36>}, {transform_indices = @transform_12, window_bounds = array<i64: 1, 8, 16, 32>}]} {
    %c0_i32 = arith.constant 0 : i32
    %0 = arith.cmpi sgt, %arg1, %c0_i32 : i32
    %c0 = arith.constant 0 : index
    %c0_0 = arith.constant 0 : index
    %c0_1 = arith.constant 0 : index
    %c0_2 = arith.constant 0 : index
    %1 = vector.load %arg3[%c0, %c0_0, %c0_1, %c0_2] : memref<1x4x16x32xf32, #tpu.memory_space<vmem>>, vector<1x4x16x32xf32>
    %2 = vector.shape_cast %1 : vector<1x4x16x32xf32> to vector<4x16x32xf32>
    %cst = arith.constant 0.000000e+00 : f32
    %3 = vector.broadcast %cst : f32 to vector<4x16x32xf32>
    %4 = arith.select %0, %2, %3 : vector<4x16x32xf32>
    %c1_i32 = arith.constant 1 : i32
    %5 = arith.cmpi slt, %arg1, %c1_i32 : i32
    %c0_3 = arith.constant 0 : index
    %c0_4 = arith.constant 0 : index
    %c0_5 = arith.constant 0 : index
    %c0_6 = arith.constant 0 : index
    %6 = vector.load %arg4[%c0_3, %c0_4, %c0_5, %c0_6] : memref<1x4x16x32xf32, #tpu.memory_space<vmem>>, vector<1x4x16x32xf32>
    %7 = vector.shape_cast %6 : vector<1x4x16x32xf32> to vector<4x16x32xf32>
    %cst_7 = arith.constant 0.000000e+00 : f32
    %8 = vector.broadcast %cst_7 : f32 to vector<4x16x32xf32>
    %9 = arith.select %5, %7, %8 : vector<4x16x32xf32>
    %c0_8 = arith.constant 0 : index
    %c0_9 = arith.constant 0 : index
    %c0_10 = arith.constant 0 : index
    %c0_11 = arith.constant 0 : index
    %10 = vector.load %arg2[%c0_8, %c0_9, %c0_10, %c0_11] : memref<1x8x16x32xf32, #tpu.memory_space<vmem>>, vector<1x8x16x32xf32>
    %11 = vector.shape_cast %10 : vector<1x8x16x32xf32> to vector<8x16x32xf32>
    %12 = tpu.concatenate %4, %11, %9 in 0 : vector<4x16x32xf32>, vector<8x16x32xf32>, vector<4x16x32xf32> -> vector<16x16x32xf32>
    %cst_12 = arith.constant 0.000000e+00 : f32
    %13 = vector.broadcast %cst_12 : f32 to vector<16x1x32xf32>
    %14 = vector.extract_strided_slice %12 {offsets = [0, 0, 0], sizes = [16, 15, 32], strides = [1, 1, 1]} : vector<16x16x32xf32> to vector<16x15x32xf32>
    %15 = tpu.concatenate %13, %14 in 1 : vector<16x1x32xf32>, vector<16x15x32xf32> -> vector<16x16x32xf32>
    %16 = vector.extract_strided_slice %12 {offsets = [0, 1, 0], sizes = [16, 15, 32], strides = [1, 1, 1]} : vector<16x16x32xf32> to vector<16x15x32xf32>
    %17 = tpu.concatenate %16, %13 in 1 : vector<16x15x32xf32>, vector<16x1x32xf32> -> vector<16x16x32xf32>
    %18 = tpu.concatenate %15, %12, %17 in 2 : vector<16x16x32xf32>, vector<16x16x32xf32>, vector<16x16x32xf32> -> vector<16x16x96xf32>
    %19 = arith.truncf %18 : vector<16x16x96xf32> to vector<16x16x96xbf16>
    %c0_13 = arith.constant 0 : index
    %c0_14 = arith.constant 0 : index
    %c0_15 = arith.constant 0 : index
    %20 = vector.load %arg15[%c0_13, %c0_14, %c0_15] : memref<16x16x96xbf16, #tpu.memory_space<vmem>>, vector<16x16x96xbf16>
    tpu.vector_store %arg15[%c0_13, %c0_14, %c0_15], %19 {strides = array<i32>} : memref<16x16x96xbf16, #tpu.memory_space<vmem>>, vector<16x16x96xbf16>,
    %c0_16 = arith.constant 0 : index
    %c0_17 = arith.constant 0 : index
    %21 = vector.load %arg6[%c0_16, %c0_17] : memref<1x32xf32, #tpu.memory_space<vmem>>, vector<1x32xf32>
    %22 = vector.shape_cast %21 : vector<1x32xf32> to vector<1x32xf32>
    %23 = vector.broadcast %22 : vector<1x32xf32> to vector<224x32xf32>
    %c0_18 = arith.constant 0 : index
    %c0_19 = arith.constant 0 : index
    %c0_20 = arith.constant 0 : index
    %24 = vector.load %arg15[%c0_18, %c0_19, %c0_20] : memref<16x16x96xbf16, #tpu.memory_space<vmem>>, vector<14x16x96xbf16>
    %25 = vector.shape_cast %24 : vector<14x16x96xbf16> to vector<224x96xbf16>
    %c0_21 = arith.constant 0 : index
    %c0_22 = arith.constant 0 : index
    %c0_23 = arith.constant 0 : index
    %26 = vector.load %arg5[%c0_21, %c0_22, %c0_23] : memref<3x96x32xbf16, #tpu.memory_space<vmem>>, vector<1x96x32xbf16>
    %27 = vector.shape_cast %26 : vector<1x96x32xbf16> to vector<96x32xbf16>
    %cst_24 = arith.constant dense<0.000000e+00> : vector<224x32xf32>
    %28 = tpu.matmul %25, %27, %cst_24 {dimension_numbers = #tpu.dot_dimension_numbers<[1], [0], [0], [1], [0, 0, 1, 1], [], []>} : vector<224x96xbf16>, vector<96x32xbf16>, vector<224x32xf32> -> vector<224x32xf32>
    %29 = arith.addf %23, %28 : vector<224x32xf32>
    %c1 = arith.constant 1 : index
    %c0_25 = arith.constant 0 : index
    %c0_26 = arith.constant 0 : index
    %30 = vector.load %arg15[%c1, %c0_25, %c0_26] : memref<16x16x96xbf16, #tpu.memory_space<vmem>>, vector<14x16x96xbf16>
    %31 = vector.shape_cast %30 : vector<14x16x96xbf16> to vector<224x96xbf16>
    %c1_27 = arith.constant 1 : index
    %c0_28 = arith.constant 0 : index
    %c0_29 = arith.constant 0 : index
    %32 = vector.load %arg5[%c1_27, %c0_28, %c0_29] : memref<3x96x32xbf16, #tpu.memory_space<vmem>>, vector<1x96x32xbf16>
    %33 = vector.shape_cast %32 : vector<1x96x32xbf16> to vector<96x32xbf16>
    %cst_30 = arith.constant dense<0.000000e+00> : vector<224x32xf32>
    %34 = tpu.matmul %31, %33, %cst_30 {dimension_numbers = #tpu.dot_dimension_numbers<[1], [0], [0], [1], [0, 0, 1, 1], [], []>} : vector<224x96xbf16>, vector<96x32xbf16>, vector<224x32xf32> -> vector<224x32xf32>
    %35 = arith.addf %29, %34 : vector<224x32xf32>
    %c2 = arith.constant 2 : index
    %c0_31 = arith.constant 0 : index
    %c0_32 = arith.constant 0 : index
    %36 = vector.load %arg15[%c2, %c0_31, %c0_32] : memref<16x16x96xbf16, #tpu.memory_space<vmem>>, vector<14x16x96xbf16>
    %37 = vector.shape_cast %36 : vector<14x16x96xbf16> to vector<224x96xbf16>
    %c2_33 = arith.constant 2 : index
    %c0_34 = arith.constant 0 : index
    %c0_35 = arith.constant 0 : index
    %38 = vector.load %arg5[%c2_33, %c0_34, %c0_35] : memref<3x96x32xbf16, #tpu.memory_space<vmem>>, vector<1x96x32xbf16>
    %39 = vector.shape_cast %38 : vector<1x96x32xbf16> to vector<96x32xbf16>
    %cst_36 = arith.constant dense<0.000000e+00> : vector<224x32xf32>
    %40 = tpu.matmul %37, %39, %cst_36 {dimension_numbers = #tpu.dot_dimension_numbers<[1], [0], [0], [1], [0, 0, 1, 1], [], []>} : vector<224x96xbf16>, vector<96x32xbf16>, vector<224x32xf32> -> vector<224x32xf32>
    %41 = arith.addf %35, %40 : vector<224x32xf32>
    %cst_37 = arith.constant 0.000000e+00 : f32
    %42 = vector.broadcast %cst_37 : f32 to vector<224x32xf32>
    %43 = arith.maximumf %41, %42 : vector<224x32xf32>
    %44 = vector.shape_cast %43 : vector<224x32xf32> to vector<14x16x32xf32>
    %45 = tpu.iota {dimensions = array<i32: 0>} : vector<14x1x1xi32>
    %c0_i32_38 = arith.constant 0 : i32
    %46 = arith.cmpi sgt, %arg1, %c0_i32_38 : i32
    %c3_i32 = arith.constant 3 : i32
    %47 = vector.broadcast %c3_i32 : i32 to vector<14x1x1xi32>
    %48 = arith.cmpi sge, %45, %47 : vector<14x1x1xi32>
    %49 = vector.broadcast %46 : i1 to vector<14x1x1xi1>
    %50 = arith.ori %49, %48 : vector<14x1x1xi1>
    %c1_i32_39 = arith.constant 1 : i32
    %51 = arith.cmpi slt, %arg1, %c1_i32_39 : i32
    %c11_i32 = arith.constant 11 : i32
    %52 = vector.broadcast %c11_i32 : i32 to vector<14x1x1xi32>
    %53 = arith.cmpi slt, %45, %52 : vector<14x1x1xi32>
    %54 = vector.broadcast %51 : i1 to vector<14x1x1xi1>
    %55 = arith.ori %54, %53 : vector<14x1x1xi1>
    %56 = arith.andi %50, %55 : vector<14x1x1xi1>
    %cst_40 = arith.constant 0.000000e+00 : f32
    %57 = vector.shape_cast %56 : vector<14x1x1xi1> to vector<14x1x1xi1>
    %58 = vector.broadcast %57 : vector<14x1x1xi1> to vector<14x16x32xi1>
    %59 = vector.broadcast %cst_40 : f32 to vector<14x16x32xf32>
    %60 = arith.select %58, %44, %59 : vector<14x16x32xi1>, vector<14x16x32xf32>
    %cst_41 = arith.constant 0.000000e+00 : f32
    %61 = vector.broadcast %cst_41 : f32 to vector<14x1x32xf32>
    %62 = vector.extract_strided_slice %60 {offsets = [0, 0, 0], sizes = [14, 15, 32], strides = [1, 1, 1]} : vector<14x16x32xf32> to vector<14x15x32xf32>
    %63 = tpu.concatenate %61, %62 in 1 : vector<14x1x32xf32>, vector<14x15x32xf32> -> vector<14x16x32xf32>
    %64 = vector.extract_strided_slice %60 {offsets = [0, 1, 0], sizes = [14, 15, 32], strides = [1, 1, 1]} : vector<14x16x32xf32> to vector<14x15x32xf32>
    %65 = tpu.concatenate %64, %61 in 1 : vector<14x15x32xf32>, vector<14x1x32xf32> -> vector<14x16x32xf32>
    %66 = tpu.concatenate %63, %60, %65 in 2 : vector<14x16x32xf32>, vector<14x16x32xf32>, vector<14x16x32xf32> -> vector<14x16x96xf32>
    %67 = arith.truncf %66 : vector<14x16x96xf32> to vector<14x16x96xbf16>
    %c0_42 = arith.constant 0 : index
    %c0_43 = arith.constant 0 : index
    %c0_44 = arith.constant 0 : index
    %68 = vector.load %arg15[%c0_42, %c0_43, %c0_44] : memref<16x16x96xbf16, #tpu.memory_space<vmem>>, vector<14x16x96xbf16>
    tpu.vector_store %arg15[%c0_42, %c0_43, %c0_44], %67 {strides = array<i32>} : memref<16x16x96xbf16, #tpu.memory_space<vmem>>, vector<14x16x96xbf16>,
    %c0_45 = arith.constant 0 : index
    %c0_46 = arith.constant 0 : index
    %69 = vector.load %arg8[%c0_45, %c0_46] : memref<1x32xf32, #tpu.memory_space<vmem>>, vector<1x32xf32>
    %70 = vector.shape_cast %69 : vector<1x32xf32> to vector<1x32xf32>
    %71 = vector.broadcast %70 : vector<1x32xf32> to vector<192x32xf32>
    %c0_47 = arith.constant 0 : index
    %c0_48 = arith.constant 0 : index
    %c0_49 = arith.constant 0 : index
    %72 = vector.load %arg15[%c0_47, %c0_48, %c0_49] : memref<16x16x96xbf16, #tpu.memory_space<vmem>>, vector<12x16x96xbf16>
    %73 = vector.shape_cast %72 : vector<12x16x96xbf16> to vector<192x96xbf16>
    %c0_50 = arith.constant 0 : index
    %c0_51 = arith.constant 0 : index
    %c0_52 = arith.constant 0 : index
    %74 = vector.load %arg7[%c0_50, %c0_51, %c0_52] : memref<3x96x32xbf16, #tpu.memory_space<vmem>>, vector<1x96x32xbf16>
    %75 = vector.shape_cast %74 : vector<1x96x32xbf16> to vector<96x32xbf16>
    %cst_53 = arith.constant dense<0.000000e+00> : vector<192x32xf32>
    %76 = tpu.matmul %73, %75, %cst_53 {dimension_numbers = #tpu.dot_dimension_numbers<[1], [0], [0], [1], [0, 0, 1, 1], [], []>} : vector<192x96xbf16>, vector<96x32xbf16>, vector<192x32xf32> -> vector<192x32xf32>
    %77 = arith.addf %71, %76 : vector<192x32xf32>
    %c1_54 = arith.constant 1 : index
    %c0_55 = arith.constant 0 : index
    %c0_56 = arith.constant 0 : index
    %78 = vector.load %arg15[%c1_54, %c0_55, %c0_56] : memref<16x16x96xbf16, #tpu.memory_space<vmem>>, vector<12x16x96xbf16>
    %79 = vector.shape_cast %78 : vector<12x16x96xbf16> to vector<192x96xbf16>
    %c1_57 = arith.constant 1 : index
    %c0_58 = arith.constant 0 : index
    %c0_59 = arith.constant 0 : index
    %80 = vector.load %arg7[%c1_57, %c0_58, %c0_59] : memref<3x96x32xbf16, #tpu.memory_space<vmem>>, vector<1x96x32xbf16>
    %81 = vector.shape_cast %80 : vector<1x96x32xbf16> to vector<96x32xbf16>
    %cst_60 = arith.constant dense<0.000000e+00> : vector<192x32xf32>
    %82 = tpu.matmul %79, %81, %cst_60 {dimension_numbers = #tpu.dot_dimension_numbers<[1], [0], [0], [1], [0, 0, 1, 1], [], []>} : vector<192x96xbf16>, vector<96x32xbf16>, vector<192x32xf32> -> vector<192x32xf32>
    %83 = arith.addf %77, %82 : vector<192x32xf32>
    %c2_61 = arith.constant 2 : index
    %c0_62 = arith.constant 0 : index
    %c0_63 = arith.constant 0 : index
    %84 = vector.load %arg15[%c2_61, %c0_62, %c0_63] : memref<16x16x96xbf16, #tpu.memory_space<vmem>>, vector<12x16x96xbf16>
    %85 = vector.shape_cast %84 : vector<12x16x96xbf16> to vector<192x96xbf16>
    %c2_64 = arith.constant 2 : index
    %c0_65 = arith.constant 0 : index
    %c0_66 = arith.constant 0 : index
    %86 = vector.load %arg7[%c2_64, %c0_65, %c0_66] : memref<3x96x32xbf16, #tpu.memory_space<vmem>>, vector<1x96x32xbf16>
    %87 = vector.shape_cast %86 : vector<1x96x32xbf16> to vector<96x32xbf16>
    %cst_67 = arith.constant dense<0.000000e+00> : vector<192x32xf32>
    %88 = tpu.matmul %85, %87, %cst_67 {dimension_numbers = #tpu.dot_dimension_numbers<[1], [0], [0], [1], [0, 0, 1, 1], [], []>} : vector<192x96xbf16>, vector<96x32xbf16>, vector<192x32xf32> -> vector<192x32xf32>
    %89 = arith.addf %83, %88 : vector<192x32xf32>
    %90 = vector.shape_cast %89 : vector<192x32xf32> to vector<12x16x32xf32>
    %91 = vector.extract_strided_slice %12 {offsets = [2, 0, 0], sizes = [12, 16, 32], strides = [1, 1, 1]} : vector<16x16x32xf32> to vector<12x16x32xf32>
    %92 = arith.addf %90, %91 : vector<12x16x32xf32>
    %93 = tpu.iota {dimensions = array<i32: 0>} : vector<12x1x1xi32>
    %c0_i32_68 = arith.constant 0 : i32
    %94 = arith.cmpi sgt, %arg1, %c0_i32_68 : i32
    %c2_i32 = arith.constant 2 : i32
    %95 = vector.broadcast %c2_i32 : i32 to vector<12x1x1xi32>
    %96 = arith.cmpi sge, %93, %95 : vector<12x1x1xi32>
    %97 = vector.broadcast %94 : i1 to vector<12x1x1xi1>
    %98 = arith.ori %97, %96 : vector<12x1x1xi1>
    %c1_i32_69 = arith.constant 1 : i32
    %99 = arith.cmpi slt, %arg1, %c1_i32_69 : i32
    %c10_i32 = arith.constant 10 : i32
    %100 = vector.broadcast %c10_i32 : i32 to vector<12x1x1xi32>
    %101 = arith.cmpi slt, %93, %100 : vector<12x1x1xi32>
    %102 = vector.broadcast %99 : i1 to vector<12x1x1xi1>
    %103 = arith.ori %102, %101 : vector<12x1x1xi1>
    %104 = arith.andi %98, %103 : vector<12x1x1xi1>
    %cst_70 = arith.constant 0.000000e+00 : f32
    %105 = vector.shape_cast %104 : vector<12x1x1xi1> to vector<12x1x1xi1>
    %106 = vector.broadcast %105 : vector<12x1x1xi1> to vector<12x16x32xi1>
    %107 = vector.broadcast %cst_70 : f32 to vector<12x16x32xf32>
    %108 = arith.select %106, %92, %107 : vector<12x16x32xi1>, vector<12x16x32xf32>
    %109 = vector.extract_strided_slice %108 {offsets = [2, 0, 0], sizes = [8, 16, 32], strides = [1, 1, 1]} : vector<12x16x32xf32> to vector<8x16x32xf32>
    %c0_71 = arith.constant 0 : index
    %c0_72 = arith.constant 0 : index
    %c0_73 = arith.constant 0 : index
    %c0_74 = arith.constant 0 : index
    %110 = vector.load %arg14[%c0_71, %c0_72, %c0_73, %c0_74] : memref<1x8x16x32xf32, #tpu.memory_space<vmem>>, vector<1x8x16x32xf32>
    %111 = vector.shape_cast %110 : vector<1x8x16x32xf32> to vector<8x16x32xf32>
    %112 = vector.shape_cast %109 : vector<8x16x32xf32> to vector<1x8x16x32xf32>
    tpu.vector_store %arg14[%c0_71, %c0_72, %c0_73, %c0_74], %112 {strides = array<i32>} : memref<1x8x16x32xf32, #tpu.memory_space<vmem>>, vector<1x8x16x32xf32>,
    %cst_75 = arith.constant 0.000000e+00 : f32
    %113 = vector.broadcast %cst_75 : f32 to vector<12x1x32xf32>
    %114 = vector.extract_strided_slice %108 {offsets = [0, 0, 0], sizes = [12, 15, 32], strides = [1, 1, 1]} : vector<12x16x32xf32> to vector<12x15x32xf32>
    %115 = tpu.concatenate %113, %114 in 1 : vector<12x1x32xf32>, vector<12x15x32xf32> -> vector<12x16x32xf32>
    %116 = vector.extract_strided_slice %108 {offsets = [0, 1, 0], sizes = [12, 15, 32], strides = [1, 1, 1]} : vector<12x16x32xf32> to vector<12x15x32xf32>
    %117 = tpu.concatenate %116, %113 in 1 : vector<12x15x32xf32>, vector<12x1x32xf32> -> vector<12x16x32xf32>
    %118 = tpu.concatenate %115, %108, %117 in 2 : vector<12x16x32xf32>, vector<12x16x32xf32>, vector<12x16x32xf32> -> vector<12x16x96xf32>
    %119 = arith.truncf %118 : vector<12x16x96xf32> to vector<12x16x96xbf16>
    %c0_76 = arith.constant 0 : index
    %c0_77 = arith.constant 0 : index
    %c0_78 = arith.constant 0 : index
    %120 = vector.load %arg15[%c0_76, %c0_77, %c0_78] : memref<16x16x96xbf16, #tpu.memory_space<vmem>>, vector<12x16x96xbf16>
    tpu.vector_store %arg15[%c0_76, %c0_77, %c0_78], %119 {strides = array<i32>} : memref<16x16x96xbf16, #tpu.memory_space<vmem>>, vector<12x16x96xbf16>,
    %c0_79 = arith.constant 0 : index
    %c0_80 = arith.constant 0 : index
    %121 = vector.load %arg10[%c0_79, %c0_80] : memref<1x96xf32, #tpu.memory_space<vmem>>, vector<1x96xf32>
    %122 = vector.shape_cast %121 : vector<1x96xf32> to vector<1x96xf32>
    %123 = vector.broadcast %122 : vector<1x96xf32> to vector<160x96xf32>
    %c0_81 = arith.constant 0 : index
    %c0_82 = arith.constant 0 : index
    %c0_83 = arith.constant 0 : index
    %124 = vector.load %arg15[%c0_81, %c0_82, %c0_83] : memref<16x16x96xbf16, #tpu.memory_space<vmem>>, vector<10x16x96xbf16>
    %125 = vector.shape_cast %124 : vector<10x16x96xbf16> to vector<160x96xbf16>
    %c0_84 = arith.constant 0 : index
    %c0_85 = arith.constant 0 : index
    %c0_86 = arith.constant 0 : index
    %126 = vector.load %arg9[%c0_84, %c0_85, %c0_86] : memref<3x96x96xbf16, #tpu.memory_space<vmem>>, vector<1x96x96xbf16>
    %127 = vector.shape_cast %126 : vector<1x96x96xbf16> to vector<96x96xbf16>
    %cst_87 = arith.constant dense<0.000000e+00> : vector<160x96xf32>
    %128 = tpu.matmul %125, %127, %cst_87 {dimension_numbers = #tpu.dot_dimension_numbers<[1], [0], [0], [1], [0, 0, 1, 1], [], []>} : vector<160x96xbf16>, vector<96x96xbf16>, vector<160x96xf32> -> vector<160x96xf32>
    %129 = arith.addf %123, %128 : vector<160x96xf32>
    %c1_88 = arith.constant 1 : index
    %c0_89 = arith.constant 0 : index
    %c0_90 = arith.constant 0 : index
    %130 = vector.load %arg15[%c1_88, %c0_89, %c0_90] : memref<16x16x96xbf16, #tpu.memory_space<vmem>>, vector<10x16x96xbf16>
    %131 = vector.shape_cast %130 : vector<10x16x96xbf16> to vector<160x96xbf16>
    %c1_91 = arith.constant 1 : index
    %c0_92 = arith.constant 0 : index
    %c0_93 = arith.constant 0 : index
    %132 = vector.load %arg9[%c1_91, %c0_92, %c0_93] : memref<3x96x96xbf16, #tpu.memory_space<vmem>>, vector<1x96x96xbf16>
    %133 = vector.shape_cast %132 : vector<1x96x96xbf16> to vector<96x96xbf16>
    %cst_94 = arith.constant dense<0.000000e+00> : vector<160x96xf32>
    %134 = tpu.matmul %131, %133, %cst_94 {dimension_numbers = #tpu.dot_dimension_numbers<[1], [0], [0], [1], [0, 0, 1, 1], [], []>} : vector<160x96xbf16>, vector<96x96xbf16>, vector<160x96xf32> -> vector<160x96xf32>
    %135 = arith.addf %129, %134 : vector<160x96xf32>
    %c2_95 = arith.constant 2 : index
    %c0_96 = arith.constant 0 : index
    %c0_97 = arith.constant 0 : index
    %136 = vector.load %arg15[%c2_95, %c0_96, %c0_97] : memref<16x16x96xbf16, #tpu.memory_space<vmem>>, vector<10x16x96xbf16>
    %137 = vector.shape_cast %136 : vector<10x16x96xbf16> to vector<160x96xbf16>
    %c2_98 = arith.constant 2 : index
    %c0_99 = arith.constant 0 : index
    %c0_100 = arith.constant 0 : index
    %138 = vector.load %arg9[%c2_98, %c0_99, %c0_100] : memref<3x96x96xbf16, #tpu.memory_space<vmem>>, vector<1x96x96xbf16>
    %139 = vector.shape_cast %138 : vector<1x96x96xbf16> to vector<96x96xbf16>
    %cst_101 = arith.constant dense<0.000000e+00> : vector<160x96xf32>
    %140 = tpu.matmul %137, %139, %cst_101 {dimension_numbers = #tpu.dot_dimension_numbers<[1], [0], [0], [1], [0, 0, 1, 1], [], []>} : vector<160x96xbf16>, vector<96x96xbf16>, vector<160x96xf32> -> vector<160x96xf32>
    %141 = arith.addf %135, %140 : vector<160x96xf32>
    %cst_102 = arith.constant 0.000000e+00 : f32
    %142 = vector.broadcast %cst_102 : f32 to vector<160x96xf32>
    %143 = arith.maximumf %141, %142 : vector<160x96xf32>
    %144 = vector.shape_cast %143 : vector<160x96xf32> to vector<10x16x96xf32>
    %145 = tpu.iota {dimensions = array<i32: 0>} : vector<10x1x1xi32>
    %c0_i32_103 = arith.constant 0 : i32
    %146 = arith.cmpi sgt, %arg1, %c0_i32_103 : i32
    %c1_i32_104 = arith.constant 1 : i32
    %147 = vector.broadcast %c1_i32_104 : i32 to vector<10x1x1xi32>
    %148 = arith.cmpi sge, %145, %147 : vector<10x1x1xi32>
    %149 = vector.broadcast %146 : i1 to vector<10x1x1xi1>
    %150 = arith.ori %149, %148 : vector<10x1x1xi1>
    %c1_i32_105 = arith.constant 1 : i32
    %151 = arith.cmpi slt, %arg1, %c1_i32_105 : i32
    %c9_i32 = arith.constant 9 : i32
    %152 = vector.broadcast %c9_i32 : i32 to vector<10x1x1xi32>
    %153 = arith.cmpi slt, %145, %152 : vector<10x1x1xi32>
    %154 = vector.broadcast %151 : i1 to vector<10x1x1xi1>
    %155 = arith.ori %154, %153 : vector<10x1x1xi1>
    %156 = arith.andi %150, %155 : vector<10x1x1xi1>
    %cst_106 = arith.constant 0.000000e+00 : f32
    %157 = vector.shape_cast %156 : vector<10x1x1xi1> to vector<10x1x1xi1>
    %158 = vector.broadcast %157 : vector<10x1x1xi1> to vector<10x16x96xi1>
    %159 = vector.broadcast %cst_106 : f32 to vector<10x16x96xf32>
    %160 = arith.select %158, %144, %159 : vector<10x16x96xi1>, vector<10x16x96xf32>
    %cst_107 = arith.constant 0.000000e+00 : f32
    %161 = vector.broadcast %cst_107 : f32 to vector<10x1x96xf32>
    %162 = vector.extract_strided_slice %160 {offsets = [0, 0, 0], sizes = [10, 15, 96], strides = [1, 1, 1]} : vector<10x16x96xf32> to vector<10x15x96xf32>
    %163 = tpu.concatenate %161, %162 in 1 : vector<10x1x96xf32>, vector<10x15x96xf32> -> vector<10x16x96xf32>
    %164 = vector.extract_strided_slice %160 {offsets = [0, 1, 0], sizes = [10, 15, 96], strides = [1, 1, 1]} : vector<10x16x96xf32> to vector<10x15x96xf32>
    %165 = tpu.concatenate %164, %161 in 1 : vector<10x15x96xf32>, vector<10x1x96xf32> -> vector<10x16x96xf32>
    %166 = tpu.concatenate %163, %160, %165 in 2 : vector<10x16x96xf32>, vector<10x16x96xf32>, vector<10x16x96xf32> -> vector<10x16x288xf32>
    %167 = arith.truncf %166 : vector<10x16x288xf32> to vector<10x16x288xbf16>
    %c0_108 = arith.constant 0 : index
    %c0_109 = arith.constant 0 : index
    %c0_110 = arith.constant 0 : index
    %168 = vector.load %arg16[%c0_108, %c0_109, %c0_110] : memref<10x16x288xbf16, #tpu.memory_space<vmem>>, vector<10x16x288xbf16>
    tpu.vector_store %arg16[%c0_108, %c0_109, %c0_110], %167 {strides = array<i32>} : memref<10x16x288xbf16, #tpu.memory_space<vmem>>, vector<10x16x288xbf16>,
    %c0_111 = arith.constant 0 : index
    %c0_112 = arith.constant 0 : index
    %169 = vector.load %arg12[%c0_111, %c0_112] : memref<1x36xf32, #tpu.memory_space<vmem>>, vector<1x36xf32>
    %170 = vector.shape_cast %169 : vector<1x36xf32> to vector<1x36xf32>
    %171 = vector.broadcast %170 : vector<1x36xf32> to vector<128x36xf32>
    %c0_113 = arith.constant 0 : index
    %c0_114 = arith.constant 0 : index
    %c0_115 = arith.constant 0 : index
    %172 = vector.load %arg16[%c0_113, %c0_114, %c0_115] : memref<10x16x288xbf16, #tpu.memory_space<vmem>>, vector<8x16x288xbf16>
    %173 = vector.shape_cast %172 : vector<8x16x288xbf16> to vector<128x288xbf16>
    %c0_116 = arith.constant 0 : index
    %c0_117 = arith.constant 0 : index
    %c0_118 = arith.constant 0 : index
    %174 = vector.load %arg11[%c0_116, %c0_117, %c0_118] : memref<3x288x36xbf16, #tpu.memory_space<vmem>>, vector<1x288x36xbf16>
    %175 = vector.shape_cast %174 : vector<1x288x36xbf16> to vector<288x36xbf16>
    %cst_119 = arith.constant dense<0.000000e+00> : vector<128x36xf32>
    %176 = tpu.matmul %173, %175, %cst_119 {dimension_numbers = #tpu.dot_dimension_numbers<[1], [0], [0], [1], [0, 0, 1, 1], [], []>} : vector<128x288xbf16>, vector<288x36xbf16>, vector<128x36xf32> -> vector<128x36xf32>
    %177 = arith.addf %171, %176 : vector<128x36xf32>
    %c1_120 = arith.constant 1 : index
    %c0_121 = arith.constant 0 : index
    %c0_122 = arith.constant 0 : index
    %178 = vector.load %arg16[%c1_120, %c0_121, %c0_122] : memref<10x16x288xbf16, #tpu.memory_space<vmem>>, vector<8x16x288xbf16>
    %179 = vector.shape_cast %178 : vector<8x16x288xbf16> to vector<128x288xbf16>
    %c1_123 = arith.constant 1 : index
    %c0_124 = arith.constant 0 : index
    %c0_125 = arith.constant 0 : index
    %180 = vector.load %arg11[%c1_123, %c0_124, %c0_125] : memref<3x288x36xbf16, #tpu.memory_space<vmem>>, vector<1x288x36xbf16>
    %181 = vector.shape_cast %180 : vector<1x288x36xbf16> to vector<288x36xbf16>
    %cst_126 = arith.constant dense<0.000000e+00> : vector<128x36xf32>
    %182 = tpu.matmul %179, %181, %cst_126 {dimension_numbers = #tpu.dot_dimension_numbers<[1], [0], [0], [1], [0, 0, 1, 1], [], []>} : vector<128x288xbf16>, vector<288x36xbf16>, vector<128x36xf32> -> vector<128x36xf32>
    %183 = arith.addf %177, %182 : vector<128x36xf32>
    %c2_127 = arith.constant 2 : index
    %c0_128 = arith.constant 0 : index
    %c0_129 = arith.constant 0 : index
    %184 = vector.load %arg16[%c2_127, %c0_128, %c0_129] : memref<10x16x288xbf16, #tpu.memory_space<vmem>>, vector<8x16x288xbf16>
    %185 = vector.shape_cast %184 : vector<8x16x288xbf16> to vector<128x288xbf16>
    %c2_130 = arith.constant 2 : index
    %c0_131 = arith.constant 0 : index
    %c0_132 = arith.constant 0 : index
    %186 = vector.load %arg11[%c2_130, %c0_131, %c0_132] : memref<3x288x36xbf16, #tpu.memory_space<vmem>>, vector<1x288x36xbf16>
    %187 = vector.shape_cast %186 : vector<1x288x36xbf16> to vector<288x36xbf16>
    %cst_133 = arith.constant dense<0.000000e+00> : vector<128x36xf32>
    %188 = tpu.matmul %185, %187, %cst_133 {dimension_numbers = #tpu.dot_dimension_numbers<[1], [0], [0], [1], [0, 0, 1, 1], [], []>} : vector<128x288xbf16>, vector<288x36xbf16>, vector<128x36xf32> -> vector<128x36xf32>
    %189 = arith.addf %183, %188 : vector<128x36xf32>
    %190 = vector.shape_cast %189 : vector<128x36xf32> to vector<8x16x36xf32>
    %c0_134 = arith.constant 0 : index
    %c0_135 = arith.constant 0 : index
    %c0_136 = arith.constant 0 : index
    %c0_137 = arith.constant 0 : index
    %191 = vector.load %arg13[%c0_134, %c0_135, %c0_136, %c0_137] : memref<1x8x16x36xf32, #tpu.memory_space<vmem>>, vector<1x8x16x36xf32>
    %192 = vector.shape_cast %191 : vector<1x8x16x36xf32> to vector<8x16x36xf32>
    %193 = vector.shape_cast %190 : vector<8x16x36xf32> to vector<1x8x16x36xf32>
    tpu.vector_store %arg13[%c0_134, %c0_135, %c0_136, %c0_137], %193 {strides = array<i32>} : memref<1x8x16x36xf32, #tpu.memory_space<vmem>>, vector<1x8x16x36xf32>,
    return
  }
  func.func @transform_0(%arg0: i32, %arg1: i32) -> (i32, i32, i32, i32) {
    %c0_i32 = arith.constant 0 : i32
    %c0_i32_0 = arith.constant 0 : i32
    %c0_i32_1 = arith.constant 0 : i32
    return %arg0, %arg1, %c0_i32, %c0_i32_0 : i32, i32, i32, i32
  }
  func.func @transform_1(%arg0: i32, %arg1: i32) -> (i32, i32, i32, i32) {
    %c2_i32 = arith.constant 2 : i32
    %0 = arith.muli %arg1, %c2_i32 : i32
    %c1_i32 = arith.constant 1 : i32
    %1 = arith.subi %0, %c1_i32 : i32
    %c0_i32 = arith.constant 0 : i32
    %2 = arith.maxsi %1, %c0_i32 : i32
    %c0_i32_0 = arith.constant 0 : i32
    %c0_i32_1 = arith.constant 0 : i32
    %c0_i32_2 = arith.constant 0 : i32
    return %arg0, %2, %c0_i32_0, %c0_i32_1 : i32, i32, i32, i32
  }
  func.func @transform_2(%arg0: i32, %arg1: i32) -> (i32, i32, i32, i32) {
    %c1_i32 = arith.constant 1 : i32
    %0 = arith.addi %arg1, %c1_i32 : i32
    %c2_i32 = arith.constant 2 : i32
    %1 = arith.muli %0, %c2_i32 : i32
    %c3_i32 = arith.constant 3 : i32
    %2 = arith.minsi %1, %c3_i32 : i32
    %c0_i32 = arith.constant 0 : i32
    %c0_i32_0 = arith.constant 0 : i32
    %c0_i32_1 = arith.constant 0 : i32
    return %arg0, %2, %c0_i32, %c0_i32_0 : i32, i32, i32, i32
  }
  func.func @transform_3(%arg0: i32, %arg1: i32) -> (i32, i32, i32) {
    %c0_i32 = arith.constant 0 : i32
    %c0_i32_0 = arith.constant 0 : i32
    %c0_i32_1 = arith.constant 0 : i32
    %c0_i32_2 = arith.constant 0 : i32
    return %c0_i32, %c0_i32_0, %c0_i32_1 : i32, i32, i32
  }
  func.func @transform_4(%arg0: i32, %arg1: i32) -> (i32, i32) {
    %c0_i32 = arith.constant 0 : i32
    %c0_i32_0 = arith.constant 0 : i32
    %c0_i32_1 = arith.constant 0 : i32
    return %c0_i32, %c0_i32_0 : i32, i32
  }
  func.func @transform_5(%arg0: i32, %arg1: i32) -> (i32, i32, i32) {
    %c0_i32 = arith.constant 0 : i32
    %c0_i32_0 = arith.constant 0 : i32
    %c0_i32_1 = arith.constant 0 : i32
    %c0_i32_2 = arith.constant 0 : i32
    return %c0_i32, %c0_i32_0, %c0_i32_1 : i32, i32, i32
  }
  func.func @transform_6(%arg0: i32, %arg1: i32) -> (i32, i32) {
    %c0_i32 = arith.constant 0 : i32
    %c0_i32_0 = arith.constant 0 : i32
    %c0_i32_1 = arith.constant 0 : i32
    return %c0_i32, %c0_i32_0 : i32, i32
  }
  func.func @transform_7(%arg0: i32, %arg1: i32) -> (i32, i32, i32) {
    %c0_i32 = arith.constant 0 : i32
    %c0_i32_0 = arith.constant 0 : i32
    %c0_i32_1 = arith.constant 0 : i32
    %c0_i32_2 = arith.constant 0 : i32
    return %c0_i32, %c0_i32_0, %c0_i32_1 : i32, i32, i32
  }
  func.func @transform_8(%arg0: i32, %arg1: i32) -> (i32, i32) {
    %c0_i32 = arith.constant 0 : i32
    %c0_i32_0 = arith.constant 0 : i32
    %c0_i32_1 = arith.constant 0 : i32
    return %c0_i32, %c0_i32_0 : i32, i32
  }
  func.func @transform_9(%arg0: i32, %arg1: i32) -> (i32, i32, i32) {
    %c0_i32 = arith.constant 0 : i32
    %c0_i32_0 = arith.constant 0 : i32
    %c0_i32_1 = arith.constant 0 : i32
    %c0_i32_2 = arith.constant 0 : i32
    return %c0_i32, %c0_i32_0, %c0_i32_1 : i32, i32, i32
  }
  func.func @transform_10(%arg0: i32, %arg1: i32) -> (i32, i32) {
    %c0_i32 = arith.constant 0 : i32
    %c0_i32_0 = arith.constant 0 : i32
    %c0_i32_1 = arith.constant 0 : i32
    return %c0_i32, %c0_i32_0 : i32, i32
  }
  func.func @transform_11(%arg0: i32, %arg1: i32) -> (i32, i32, i32, i32) {
    %c0_i32 = arith.constant 0 : i32
    %c0_i32_0 = arith.constant 0 : i32
    %c0_i32_1 = arith.constant 0 : i32
    return %arg0, %arg1, %c0_i32, %c0_i32_0 : i32, i32, i32, i32
  }
  func.func @transform_12(%arg0: i32, %arg1: i32) -> (i32, i32, i32, i32) {
    %c0_i32 = arith.constant 0 : i32
    %c0_i32_0 = arith.constant 0 : i32
    %c0_i32_1 = arith.constant 0 : i32
    return %arg0, %arg1, %c0_i32, %c0_i32_0 : i32, i32, i32, i32
  }
}

</mosaic_0001>

<llo_original>
// kernel: residual_block_nobn_last.1
$region0: #{residual_block_nobn_last.1}
  #allocation0 [shape = 'u32[]', space=smem, size = 0x4, offset = 0x4, fixed_abs, tag = 'smem constant byte address 0x4 - core index']
  #allocation1 [shape = 'u32[72,128]{1,0:T(1,128)}', space=vmem, size = 0x9000, scoped, tag = 'internal scratch']
  #allocation2 [shape = 'bf16[16,16,96]{2,1,0:T(8,128)(2,1)}', space=vmem, size = 0x10000, scoped, tag = 'scratch operand']
  #allocation3 [shape = 'bf16[10,16,288]{2,1,0:T(8,128)(2,1)}', space=vmem, size = 0x1e000, scoped, tag = 'scratch operand']
  %s0 = inlined_call_operand.vmem [shape: f32[2,16,16,32], index: 0, kind: input, shape index: {}, may-alias: {0,1,2}]
  %s1 = inlined_call_operand.vmem [shape: f32[2,16,16,32], index: 1, kind: input, shape index: {}, may-alias: {0,1,2}]
  %s2 = inlined_call_operand.vmem [shape: f32[2,16,16,32], index: 2, kind: input, shape index: {}, may-alias: {0,1,2}]
  %s3 = inlined_call_operand.vmem [shape: bf16[3,96,32], index: 3, kind: input, shape index: {}]
  %s4 = inlined_call_operand.vmem [shape: f32[1,32], index: 4, kind: input, shape index: {}]
  %s5 = inlined_call_operand.vmem [shape: bf16[3,96,32], index: 5, kind: input, shape index: {}]
  %s6 = inlined_call_operand.vmem [shape: f32[1,32], index: 6, kind: input, shape index: {}]
  %s7 = inlined_call_operand.vmem [shape: bf16[3,96,96], index: 7, kind: input, shape index: {}]
  %s8 = inlined_call_operand.vmem [shape: f32[1,96], index: 8, kind: input, shape index: {}]
  %s9 = inlined_call_operand.vmem [shape: bf16[3,288,36], index: 9, kind: input, shape index: {}]
  %s10 = inlined_call_operand.vmem [shape: f32[1,36], index: 10, kind: input, shape index: {}]
  %s11 = inlined_call_operand.vmem [shape: f32[2,16,16,36], index: 11, kind: output, shape index: {0}]
  %s12 = inlined_call_operand.hbm [shape: f32[2,16,16,32], index: 12, kind: output, shape index: {1}]
  %13 = xla_tuple %s11, %s12
  %s14 = sld [smem:[#allocation0]]
  $region85: #{residual_block_nobn_last.1} parent=0
    _
  %s16 = ssub.s32 1, %s14
  %s17 = scalar_select 0, %s16, %s14
  $region1: #{residual_block_nobn_last.1} parent=0
    #allocation4 [shape = 'u8[131072]{0}', space=vmem, size = 0x20000, scoped, tag = 'output window, operand 1']
    #allocation5 [shape = 's32[2]{0}', space=sflag, size = 0x8, scoped, tag = 'scoped memory for residual_block_nobn_last.1']
    %18 = vsyncpa [#allocation5], 0
    %s19 = scalar_lea.sflag [#allocation5], 1
    %20 = vsyncpa %s19, 0
    loop: start=0, step=1, limit=6
    $region2: #{residual_block_nobn_last.1} parent=1 // loop_pre_header
      _
    $region3: #{residual_block_nobn_last.1} parent=1 // loop_header
      %s22 = sphi 0, %s26
      %p23 = scmp.ge.s32.totalorder %s22, 6
      %s29 = sphi 0, %s41
      %s30 = sphi 0, %s37
      %s31 = sphi 0, %s29
      %s32 = sphi 0, %s30
      %s33 = sphi 0, %s31
      %s34 = sphi 0, %s32
      %s46 = sphi 0, %s48
      %s49 = sphi 0, %s46
      %s50 = sphi 0, %s49
      %s66 = sphi 0, %s50
      %s82 = sphi 0, %s84
      %s85 = sphi 0, %s82
      %s86 = sphi 0, %s85
      %s102 = sphi 0, %s86
      %s118 = sphi 0, %s120
      %s121 = sphi 0, %s118
      %s122 = sphi 0, %s121
      %s138 = sphi 0, %s122
      %s142 = sphi 0, %s142
      %s144 = sphi 0, %s142
      %s145 = sphi 0, %s144
      %s159 = sphi 0, %s145
      %s163 = sphi 0, %s163
      %s165 = sphi 0, %s163
      %s166 = sphi 0, %s165
      %s180 = sphi 0, %s166
      %s184 = sphi 0, %s184
      %s186 = sphi 0, %s184
      %s187 = sphi 0, %s186
      %s201 = sphi 0, %s187
      %s205 = sphi 0, %s205
      %s207 = sphi 0, %s205
      %s208 = sphi 0, %s207
      %s222 = sphi 0, %s208
      %s226 = sphi 0, %s226
      %s228 = sphi 0, %s226
      %s229 = sphi 0, %s228
      %s243 = sphi 0, %s229
      %s247 = sphi 0, %s247
      %s249 = sphi 0, %s247
      %s250 = sphi 0, %s249
      %s264 = sphi 0, %s250
      %s268 = sphi 0, %s268
      %s270 = sphi 0, %s268
      %s271 = sphi 0, %s270
      %s285 = sphi 0, %s271
      %s289 = sphi 0, %s289
      %s291 = sphi 0, %s289
      %s292 = sphi 0, %s291
      %s306 = sphi 0, %s292
      %s314 = sphi 0, %s316
      %s317 = sphi 0, %s314
      %s318 = sphi 0, %s317
      %s334 = sphi 0, %s318
      %s342 = sphi 0, %s344
      %s345 = sphi 0, %s342
      %s346 = sphi 0, %s345
      %s362 = sphi 0, %s346
    $region4: #{residual_block_nobn_last.1} parent=1 // loop_header_branch
      %25 = sbr.rel (%p23) target = $region8
    $region5: #{residual_block_nobn_last.1} parent=1 // loop_body
      %s27 = ssub.s32 %s22, 1
      %s28 = ssub.s32 %s22, 2
      %s35 = sadd.s32 1, %s30
      %p36 = scmp.ge.s32.totalorder %s35, 2
      %s37 = scalar_select %p36, 0, %s35
      %s38 = sadd.s32 1, %s29
      %s39 = scalar_select %p36, %s38, %s29
      %p40 = scmp.ge.s32.totalorder %s39, 2
      %s41 = scalar_select %p40, 0, %s39
      %s42 = ssub.s32 %s29, %s41
      %s43 = ssub.s32 %s30, %s37
      %s44 = sor.u32 %s42, %s43
      %p45 = scmp.eq.s32.totalorder %s44, 0
      %s47 = sadd.s32 %s46, 1
      %s48 = scalar_select %p45, %s46, %s47
      %p51 = pneg %p45
      %p52 = scmp.eq.s32.totalorder %s22, 3
      %p53 = por %p51, %p52
      %p54 = scmp.ne.s32.totalorder %s46, %s49
      %p55 = scmp.eq.s32.totalorder %s22, 0
      %p56 = por %p54, %p55
      %p57 = scmp.ne.s32.totalorder %s46, %s49
      %p58 = scmp.eq.s32.totalorder %s27, 3
      %p59 = por %p57, %p58
      %p60 = scmp.ne.s32.totalorder %s49, %s50
      %p61 = scmp.eq.s32.totalorder %s27, 0
      %p62 = por %p60, %p61
      %p63 = scmp.ne.s32.totalorder %s49, %s50
      %p64 = scmp.eq.s32.totalorder %s28, 3
      %p65 = por %p63, %p64
      %p67 = scmp.ne.s32.totalorder %s50, %s66
      %p68 = scmp.eq.s32.totalorder %s28, 0
      %p69 = por %p67, %p68
      %s70 = smul.u32 %s30, 2
      %s71 = ssub.s32 %s70, 1
      %p72 = scmp.gt.s32.totalorder %s71, 0
      %s73 = scalar_select %p72, %s71, 0
      %s74 = smul.u32 %s37, 2
      %s75 = ssub.s32 %s74, 1
      %p76 = scmp.gt.s32.totalorder %s75, 0
      %s77 = scalar_select %p76, %s75, 0
      %s78 = ssub.s32 %s29, %s41
      %s79 = ssub.s32 %s73, %s77
      %s80 = sor.u32 %s78, %s79
      %p81 = scmp.eq.s32.totalorder %s80, 0
      %s83 = sadd.s32 %s82, 1
      %s84 = scalar_select %p81, %s82, %s83
      %p87 = pneg %p81
      %p88 = scmp.eq.s32.totalorder %s22, 3
      %p89 = por %p87, %p88
      %p90 = scmp.ne.s32.totalorder %s82, %s85
      %p91 = scmp.eq.s32.totalorder %s22, 0
      %p92 = por %p90, %p91
      %p93 = scmp.ne.s32.totalorder %s82, %s85
      %p94 = scmp.eq.s32.totalorder %s27, 3
      %p95 = por %p93, %p94
      %p96 = scmp.ne.s32.totalorder %s85, %s86
      %p97 = scmp.eq.s32.totalorder %s27, 0
      %p98 = por %p96, %p97
      %p99 = scmp.ne.s32.totalorder %s85, %s86
      %p100 = scmp.eq.s32.totalorder %s28, 3
      %p101 = por %p99, %p100
      %p103 = scmp.ne.s32.totalorder %s86, %s102
      %p104 = scmp.eq.s32.totalorder %s28, 0
      %p105 = por %p103, %p104
      %s106 = sadd.s32 %s30, 1
      %s107 = smul.u32 %s106, 2
      %p108 = scmp.lt.s32.totalorder %s107, 3
      %s109 = scalar_select %p108, %s107, 3
      %s110 = sadd.s32 %s37, 1
      %s111 = smul.u32 %s110, 2
      %p112 = scmp.lt.s32.totalorder %s111, 3
      %s113 = scalar_select %p112, %s111, 3
      %s114 = ssub.s32 %s29, %s41
      %s115 = ssub.s32 %s109, %s113
      %s116 = sor.u32 %s114, %s115
      %p117 = scmp.eq.s32.totalorder %s116, 0
      %s119 = sadd.s32 %s118, 1
      %s120 = scalar_select %p117, %s118, %s119
      %p123 = pneg %p117
      %p124 = scmp.eq.s32.totalorder %s22, 3
      %p125 = por %p123, %p124
      %p126 = scmp.ne.s32.totalorder %s118, %s121
      %p127 = scmp.eq.s32.totalorder %s22, 0
      %p128 = por %p126, %p127
      %p129 = scmp.ne.s32.totalorder %s118, %s121
      %p130 = scmp.eq.s32.totalorder %s27, 3
      %p131 = por %p129, %p130
      %p132 = scmp.ne.s32.totalorder %s121, %s122
      %p133 = scmp.eq.s32.totalorder %s27, 0
      %p134 = por %p132, %p133
      %p135 = scmp.ne.s32.totalorder %s121, %s122
      %p136 = scmp.eq.s32.totalorder %s28, 3
      %p137 = por %p135, %p136
      %p139 = scmp.ne.s32.totalorder %s122, %s138
      %p140 = scmp.eq.s32.totalorder %s28, 0
      %p141 = por %p139, %p140
      %s143 = sadd.s32 %s142, 1
      %p146 = scmp.eq.s32.totalorder %s22, 3
      %p147 = scmp.ne.s32.totalorder %s142, %s144
      %p148 = scmp.eq.s32.totalorder %s22, 0
      %p149 = por %p147, %p148
      %p150 = scmp.ne.s32.totalorder %s142, %s144
      %p151 = scmp.eq.s32.totalorder %s27, 3
      %p152 = por %p150, %p151
      %p153 = scmp.ne.s32.totalorder %s144, %s145
      %p154 = scmp.eq.s32.totalorder %s27, 0
      %p155 = por %p153, %p154
      %p156 = scmp.ne.s32.totalorder %s144, %s145
      %p157 = scmp.eq.s32.totalorder %s28, 3
      %p158 = por %p156, %p157
      %p160 = scmp.ne.s32.totalorder %s145, %s159
      %p161 = scmp.eq.s32.totalorder %s28, 0
      %p162 = por %p160, %p161
      %s164 = sadd.s32 %s163, 1
      %p167 = scmp.eq.s32.totalorder %s22, 3
      %p168 = scmp.ne.s32.totalorder %s163, %s165
      %p169 = scmp.eq.s32.totalorder %s22, 0
      %p170 = por %p168, %p169
      %p171 = scmp.ne.s32.totalorder %s163, %s165
      %p172 = scmp.eq.s32.totalorder %s27, 3
      %p173 = por %p171, %p172
      %p174 = scmp.ne.s32.totalorder %s165, %s166
      %p175 = scmp.eq.s32.totalorder %s27, 0
      %p176 = por %p174, %p175
      %p177 = scmp.ne.s32.totalorder %s165, %s166
      %p178 = scmp.eq.s32.totalorder %s28, 3
      %p179 = por %p177, %p178
      %p181 = scmp.ne.s32.totalorder %s166, %s180
      %p182 = scmp.eq.s32.totalorder %s28, 0
      %p183 = por %p181, %p182
      %s185 = sadd.s32 %s184, 1
      %p188 = scmp.eq.s32.totalorder %s22, 3
      %p189 = scmp.ne.s32.totalorder %s184, %s186
      %p190 = scmp.eq.s32.totalorder %s22, 0
      %p191 = por %p189, %p190
      %p192 = scmp.ne.s32.totalorder %s184, %s186
      %p193 = scmp.eq.s32.totalorder %s27, 3
      %p194 = por %p192, %p193
      %p195 = scmp.ne.s32.totalorder %s186, %s187
      %p196 = scmp.eq.s32.totalorder %s27, 0
      %p197 = por %p195, %p196
      %p198 = scmp.ne.s32.totalorder %s186, %s187
      %p199 = scmp.eq.s32.totalorder %s28, 3
      %p200 = por %p198, %p199
      %p202 = scmp.ne.s32.totalorder %s187, %s201
      %p203 = scmp.eq.s32.totalorder %s28, 0
      %p204 = por %p202, %p203
      %s206 = sadd.s32 %s205, 1
      %p209 = scmp.eq.s32.totalorder %s22, 3
      %p210 = scmp.ne.s32.totalorder %s205, %s207
      %p211 = scmp.eq.s32.totalorder %s22, 0
      %p212 = por %p210, %p211
      %p213 = scmp.ne.s32.totalorder %s205, %s207
      %p214 = scmp.eq.s32.totalorder %s27, 3
      %p215 = por %p213, %p214
      %p216 = scmp.ne.s32.totalorder %s207, %s208
      %p217 = scmp.eq.s32.totalorder %s27, 0
      %p218 = por %p216, %p217
      %p219 = scmp.ne.s32.totalorder %s207, %s208
      %p220 = scmp.eq.s32.totalorder %s28, 3
      %p221 = por %p219, %p220
      %p223 = scmp.ne.s32.totalorder %s208, %s222
      %p224 = scmp.eq.s32.totalorder %s28, 0
      %p225 = por %p223, %p224
      %s227 = sadd.s32 %s226, 1
      %p230 = scmp.eq.s32.totalorder %s22, 3
      %p231 = scmp.ne.s32.totalorder %s226, %s228
      %p232 = scmp.eq.s32.totalorder %s22, 0
      %p233 = por %p231, %p232
      %p234 = scmp.ne.s32.totalorder %s226, %s228
      %p235 = scmp.eq.s32.totalorder %s27, 3
      %p236 = por %p234, %p235
      %p237 = scmp.ne.s32.totalorder %s228, %s229
      %p238 = scmp.eq.s32.totalorder %s27, 0
      %p239 = por %p237, %p238
      %p240 = scmp.ne.s32.totalorder %s228, %s229
      %p241 = scmp.eq.s32.totalorder %s28, 3
      %p242 = por %p240, %p241
      %p244 = scmp.ne.s32.totalorder %s229, %s243
      %p245 = scmp.eq.s32.totalorder %s28, 0
      %p246 = por %p244, %p245
      %s248 = sadd.s32 %s247, 1
      %p251 = scmp.eq.s32.totalorder %s22, 3
      %p252 = scmp.ne.s32.totalorder %s247, %s249
      %p253 = scmp.eq.s32.totalorder %s22, 0
      %p254 = por %p252, %p253
      %p255 = scmp.ne.s32.totalorder %s247, %s249
      %p256 = scmp.eq.s32.totalorder %s27, 3
      %p257 = por %p255, %p256
      %p258 = scmp.ne.s32.totalorder %s249, %s250
      %p259 = scmp.eq.s32.totalorder %s27, 0
      %p260 = por %p258, %p259
      %p261 = scmp.ne.s32.totalorder %s249, %s250
      %p262 = scmp.eq.s32.totalorder %s28, 3
      %p263 = por %p261, %p262
      %p265 = scmp.ne.s32.totalorder %s250, %s264
      %p266 = scmp.eq.s32.totalorder %s28, 0
      %p267 = por %p265, %p266
      %s269 = sadd.s32 %s268, 1
      %p272 = scmp.eq.s32.totalorder %s22, 3
      %p273 = scmp.ne.s32.totalorder %s268, %s270
      %p274 = scmp.eq.s32.totalorder %s22, 0
      %p275 = por %p273, %p274
      %p276 = scmp.ne.s32.totalorder %s268, %s270
      %p277 = scmp.eq.s32.totalorder %s27, 3
      %p278 = por %p276, %p277
      %p279 = scmp.ne.s32.totalorder %s270, %s271
      %p280 = scmp.eq.s32.totalorder %s27, 0
      %p281 = por %p279, %p280
      %p282 = scmp.ne.s32.totalorder %s270, %s271
      %p283 = scmp.eq.s32.totalorder %s28, 3
      %p284 = por %p282, %p283
      %p286 = scmp.ne.s32.totalorder %s271, %s285
      %p287 = scmp.eq.s32.totalorder %s28, 0
      %p288 = por %p286, %p287
      %s290 = sadd.s32 %s289, 1
      %p293 = scmp.eq.s32.totalorder %s22, 3
      %p294 = scmp.ne.s32.totalorder %s289, %s291
      %p295 = scmp.eq.s32.totalorder %s22, 0
      %p296 = por %p294, %p295
      %p297 = scmp.ne.s32.totalorder %s289, %s291
      %p298 = scmp.eq.s32.totalorder %s27, 3
      %p299 = por %p297, %p298
      %p300 = scmp.ne.s32.totalorder %s291, %s292
      %p301 = scmp.eq.s32.totalorder %s27, 0
      %p302 = por %p300, %p301
      %p303 = scmp.ne.s32.totalorder %s291, %s292
      %p304 = scmp.eq.s32.totalorder %s28, 3
      %p305 = por %p303, %p304
      %p307 = scmp.ne.s32.totalorder %s292, %s306
      %p308 = scmp.eq.s32.totalorder %s28, 0
      %p309 = por %p307, %p308
      %s310 = ssub.s32 %s29, %s41
      %s311 = ssub.s32 %s30, %s37
      %s312 = sor.u32 %s310, %s311
      %p313 = scmp.eq.s32.totalorder %s312, 0
      %s315 = sadd.s32 %s314, 1
      %s316 = scalar_select %p313, %s314, %s315
      %p319 = pneg %p313
      %p320 = scmp.eq.s32.totalorder %s22, 3
      %p321 = por %p319, %p320
      %p322 = scmp.ne.s32.totalorder %s314, %s317
      %p323 = scmp.eq.s32.totalorder %s22, 0
      %p324 = por %p322, %p323
      %p325 = scmp.ne.s32.totalorder %s314, %s317
      %p326 = scmp.eq.s32.totalorder %s27, 3
      %p327 = por %p325, %p326
      %p328 = scmp.ne.s32.totalorder %s317, %s318
      %p329 = scmp.eq.s32.totalorder %s27, 0
      %p330 = por %p328, %p329
      %p331 = scmp.ne.s32.totalorder %s317, %s318
      %p332 = scmp.eq.s32.totalorder %s28, 3
      %p333 = por %p331, %p332
      %p335 = scmp.ne.s32.totalorder %s318, %s334
      %p336 = scmp.eq.s32.totalorder %s28, 0
      %p337 = por %p335, %p336
      %s338 = ssub.s32 %s29, %s41
      %s339 = ssub.s32 %s30, %s37
      %s340 = sor.u32 %s338, %s339
      %p341 = scmp.eq.s32.totalorder %s340, 0
      %s343 = sadd.s32 %s342, 1
      %s344 = scalar_select %p341, %s342, %s343
      %p347 = pneg %p341
      %p348 = scmp.eq.s32.totalorder %s22, 3
      %p349 = por %p347, %p348
      %p350 = scmp.ne.s32.totalorder %s342, %s345
      %p351 = scmp.eq.s32.totalorder %s22, 0
      %p352 = por %p350, %p351
      %p353 = scmp.ne.s32.totalorder %s342, %s345
      %p354 = scmp.eq.s32.totalorder %s27, 3
      %p355 = por %p353, %p354
      %p356 = scmp.ne.s32.totalorder %s345, %s346
      %p357 = scmp.eq.s32.totalorder %s27, 0
      %p358 = por %p356, %p357
      %p359 = scmp.ne.s32.totalorder %s345, %s346
      %p360 = scmp.eq.s32.totalorder %s28, 3
      %p361 = por %p359, %p360
      %p363 = scmp.ne.s32.totalorder %s346, %s362
      %p364 = scmp.eq.s32.totalorder %s28, 0
      %p365 = por %p363, %p364
      %p366 = scmp.le.s32.totalorder 1, %s22
      %p367 = scmp.lt.s32.totalorder %s22, 5
      %p368 = pnand %p366, %p367
      %p369 = pneg %p368
      // Predicated region
      $region9: #{residual_block_nobn_last.1} parent=5 // pred_check
        _
      $region10: #{residual_block_nobn_last.1} parent=5 // pred_check_branch
        %371 = sbr.rel (%p368) target = $region12
      $region11: #{residual_block_nobn_last.1} parent=5 // pred_region
        %s372 = ssub.s32 %s22, 1
        // Predicated region
        $region13: #{residual_block_nobn_last.1} parent=11 // pred_check
          %p373 = pneg %p155
        $region14: #{residual_block_nobn_last.1} parent=11 // pred_check_branch
          %375 = sbr.rel (%p373) target = $region16
        $region15: #{residual_block_nobn_last.1} parent=11 // pred_region
          _
        $region16: #{residual_block_nobn_last.1} parent=11 // pred_fallthru
          _
        // Predicated region
        $region17: #{residual_block_nobn_last.1} parent=11 // pred_check
          %p376 = pneg %p176
        $region18: #{residual_block_nobn_last.1} parent=11 // pred_check_branch
          %378 = sbr.rel (%p376) target = $region20
        $region19: #{residual_block_nobn_last.1} parent=11 // pred_region
          _
        $region20: #{residual_block_nobn_last.1} parent=11 // pred_fallthru
          _
        // Predicated region
        $region21: #{residual_block_nobn_last.1} parent=11 // pred_check
          %p379 = pneg %p197
        $region22: #{residual_block_nobn_last.1} parent=11 // pred_check_branch
          %381 = sbr.rel (%p379) target = $region24
        $region23: #{residual_block_nobn_last.1} parent=11 // pred_region
          _
        $region24: #{residual_block_nobn_last.1} parent=11 // pred_fallthru
          _
        // Predicated region
        $region25: #{residual_block_nobn_last.1} parent=11 // pred_check
          %p382 = pneg %p218
        $region26: #{residual_block_nobn_last.1} parent=11 // pred_check_branch
          %384 = sbr.rel (%p382) target = $region28
        $region27: #{residual_block_nobn_last.1} parent=11 // pred_region
          _
        $region28: #{residual_block_nobn_last.1} parent=11 // pred_fallthru
          _
        // Predicated region
        $region29: #{residual_block_nobn_last.1} parent=11 // pred_check
          %p385 = pneg %p239
        $region30: #{residual_block_nobn_last.1} parent=11 // pred_check_branch
          %387 = sbr.rel (%p385) target = $region32
        $region31: #{residual_block_nobn_last.1} parent=11 // pred_region
          _
        $region32: #{residual_block_nobn_last.1} parent=11 // pred_fallthru
          _
        // Predicated region
        $region33: #{residual_block_nobn_last.1} parent=11 // pred_check
          %p388 = pneg %p260
        $region34: #{residual_block_nobn_last.1} parent=11 // pred_check_branch
          %390 = sbr.rel (%p388) target = $region36
        $region35: #{residual_block_nobn_last.1} parent=11 // pred_region
          _
        $region36: #{residual_block_nobn_last.1} parent=11 // pred_fallthru
          _
        // Predicated region
        $region37: #{residual_block_nobn_last.1} parent=11 // pred_check
          %p391 = pneg %p281
        $region38: #{residual_block_nobn_last.1} parent=11 // pred_check_branch
          %393 = sbr.rel (%p391) target = $region40
        $region39: #{residual_block_nobn_last.1} parent=11 // pred_region
          _
        $region40: #{residual_block_nobn_last.1} parent=11 // pred_fallthru
          _
        // Predicated region
        $region41: #{residual_block_nobn_last.1} parent=11 // pred_check
          %p394 = pneg %p302
        $region42: #{residual_block_nobn_last.1} parent=11 // pred_check_branch
          %396 = sbr.rel (%p394) target = $region44
        $region43: #{residual_block_nobn_last.1} parent=11 // pred_region
          _
        $region44: #{residual_block_nobn_last.1} parent=11 // pred_fallthru
          _
      $region12: #{residual_block_nobn_last.1} parent=5 // pred_fallthru
        _
      %p397 = scmp.lt.s32.totalorder %s22, 4
      // Predicated region
      $region45: #{residual_block_nobn_last.1} parent=5 // pred_check
        %p398 = pneg %p397
      $region46: #{residual_block_nobn_last.1} parent=5 // pred_check_branch
        %400 = sbr.rel (%p398) target = $region48
      $region47: #{residual_block_nobn_last.1} parent=5 // pred_region
        // Predicated region
        $region49: #{residual_block_nobn_last.1} parent=47 // pred_check
          %p401 = pneg %p56
        $region50: #{residual_block_nobn_last.1} parent=47 // pred_check_branch
          %403 = sbr.rel (%p401) target = $region52
        $region51: #{residual_block_nobn_last.1} parent=47 // pred_region
          %s404 = smul.u32 8, %s30
          %p405 = scmp.lt.s32.totalorder %s29, 1
          %s406 = scalar_select %p405, %s29, 1
          %p407 = scmp.lt.s32.totalorder %s404, 15
          %s408 = scalar_select %p407, %s404, 15
          %s409 = smul.addr %s408, 2
          %s410 = smul.addr %s406, 32
          %s411 = sadd.s32 %s409, %s410
          %s412 = smul.addr %s411, 8
          %s413 = scalar_lea.vmem %s0, %s412
          %s414 = smul.u32 8, %s30
        $region52: #{residual_block_nobn_last.1} parent=47 // pred_fallthru
          _
        // Predicated region
        $region53: #{residual_block_nobn_last.1} parent=47 // pred_check
          %p415 = pneg %p92
        $region54: #{residual_block_nobn_last.1} parent=47 // pred_check_branch
          %417 = sbr.rel (%p415) target = $region56
        $region55: #{residual_block_nobn_last.1} parent=47 // pred_region
          %s418 = smul.u32 %s30, 2
          %s419 = ssub.s32 %s418, 1
          %p420 = scmp.gt.s32.totalorder %s419, 0
          %s421 = scalar_select %p420, %s419, 0
          %s422 = smul.u32 4, %s421
          %p423 = scmp.lt.s32.totalorder %s29, 1
          %s424 = scalar_select %p423, %s29, 1
          %p425 = scmp.lt.s32.totalorder %s422, 15
          %s426 = scalar_select %p425, %s422, 15
          %s427 = smul.addr %s426, 2
          %s428 = smul.addr %s424, 32
          %s429 = sadd.s32 %s427, %s428
          %s430 = smul.addr %s429, 8
          %s431 = scalar_lea.vmem %s1, %s430
          %s432 = smul.u32 %s30, 2
          %s433 = ssub.s32 %s432, 1
          %p434 = scmp.gt.s32.totalorder %s433, 0
          %s435 = scalar_select %p434, %s433, 0
          %s436 = smul.u32 4, %s435
        $region56: #{residual_block_nobn_last.1} parent=47 // pred_fallthru
          _
        // Predicated region
        $region57: #{residual_block_nobn_last.1} parent=47 // pred_check
          %p437 = pneg %p128
        $region58: #{residual_block_nobn_last.1} parent=47 // pred_check_branch
          %439 = sbr.rel (%p437) target = $region60
        $region59: #{residual_block_nobn_last.1} parent=47 // pred_region
          %s440 = sadd.s32 %s30, 1
          %s441 = smul.u32 %s440, 2
          %p442 = scmp.lt.s32.totalorder %s441, 3
          %s443 = scalar_select %p442, %s441, 3
          %s444 = smul.u32 4, %s443
          %p445 = scmp.lt.s32.totalorder %s29, 1
          %s446 = scalar_select %p445, %s29, 1
          %p447 = scmp.lt.s32.totalorder %s444, 15
          %s448 = scalar_select %p447, %s444, 15
          %s449 = smul.addr %s448, 2
          %s450 = smul.addr %s446, 32
          %s451 = sadd.s32 %s449, %s450
          %s452 = smul.addr %s451, 8
          %s453 = scalar_lea.vmem %s2, %s452
          %s454 = sadd.s32 %s30, 1
          %s455 = smul.u32 %s454, 2
          %p456 = scmp.lt.s32.totalorder %s455, 3
          %s457 = scalar_select %p456, %s455, 3
          %s458 = smul.u32 4, %s457
        $region60: #{residual_block_nobn_last.1} parent=47 // pred_fallthru
          _
      $region48: #{residual_block_nobn_last.1} parent=5 // pred_fallthru
        _
      %p459 = scmp.le.s32.totalorder 1, %s22
      %p460 = scmp.lt.s32.totalorder %s22, 5
      %p461 = pnand %p459, %p460
      %p462 = pneg %p461
      // Predicated region
      $region61: #{residual_block_nobn_last.1} parent=5 // pred_check
        _
      $region62: #{residual_block_nobn_last.1} parent=5 // pred_check_branch
        %464 = sbr.rel (%p461) target = $region64
      $region63: #{residual_block_nobn_last.1} parent=5 // pred_region
        %s465 = ssub.s32 %s22, 1
        %s466 = smul.u32 8, %s32
        %p467 = scmp.lt.s32.totalorder %s31, 1
        %s468 = scalar_select %p467, %s31, 1
        %p469 = scmp.lt.s32.totalorder %s466, 15
        %s470 = scalar_select %p469, %s466, 15
        %s471 = smul.addr %s470, 2
        %s472 = smul.addr %s468, 32
        %s473 = sadd.s32 %s471, %s472
        %s474 = smul.addr %s473, 8
        %s475 = scalar_lea.vmem %s0, %s474
        %p476 = pneg %p62
        %p477 = pneg %p59
        %s478 = smul.u32 %s32, 2
        %s479 = ssub.s32 %s478, 1
        %p480 = scmp.gt.s32.totalorder %s479, 0
        %s481 = scalar_select %p480, %s479, 0
        %s482 = smul.u32 4, %s481
        %p483 = scmp.lt.s32.totalorder %s31, 1
        %s484 = scalar_select %p483, %s31, 1
        %p485 = scmp.lt.s32.totalorder %s482, 15
        %s486 = scalar_select %p485, %s482, 15
        %s487 = smul.addr %s486, 2
        %s488 = smul.addr %s484, 32
        %s489 = sadd.s32 %s487, %s488
        %s490 = smul.addr %s489, 8
        %s491 = scalar_lea.vmem %s1, %s490
        %p492 = pneg %p98
        %p493 = pneg %p95
        %s494 = sadd.s32 %s32, 1
        %s495 = smul.u32 %s494, 2
        %p496 = scmp.lt.s32.totalorder %s495, 3
        %s497 = scalar_select %p496, %s495, 3
        %s498 = smul.u32 4, %s497
        %p499 = scmp.lt.s32.totalorder %s31, 1
        %s500 = scalar_select %p499, %s31, 1
        %p501 = scmp.lt.s32.totalorder %s498, 15
        %s502 = scalar_select %p501, %s498, 15
        %s503 = smul.addr %s502, 2
        %s504 = smul.addr %s500, 32
        %s505 = sadd.s32 %s503, %s504
        %s506 = smul.addr %s505, 8
        %s507 = scalar_lea.vmem %s2, %s506
        %p508 = pneg %p134
        %p509 = pneg %p131
        %p510 = pneg %p155
        %p511 = pneg %p152
        %p512 = pneg %p176
        %p513 = pneg %p173
        %p514 = pneg %p197
        %p515 = pneg %p194
        %p516 = pneg %p218
        %p517 = pneg %p215
        %p518 = pneg %p239
        %p519 = pneg %p236
        %p520 = pneg %p260
        %p521 = pneg %p257
        %p522 = pneg %p281
        %p523 = pneg %p278
        %p524 = pneg %p302
        %p525 = pneg %p299
        %p526 = pneg %p330
        %p527 = pneg %p327
        %s528 = smul.u32 8, %s32
        %p529 = scmp.lt.s32.totalorder %s31, 1
        %s530 = scalar_select %p529, %s31, 1
        %p531 = scmp.lt.s32.totalorder %s528, 15
        %s532 = scalar_select %p531, %s528, 15
        %s533 = smul.addr %s532, 2
        %s534 = smul.addr %s530, 32
        %s535 = sadd.s32 %s533, %s534
        %s536 = smul.addr %s535, 8
        %s537 = scalar_lea.vmem %s11, %s536
        %p538 = pneg %p358
        %p539 = pneg %p355
        %s540 = sand.u32 %s345, 1
        %s541 = scalar_lea.sflag [#allocation5], %s540
        %s542 = sand.u32 %s345, 1
        %s543 = smul.addr %s542, 128
        %s544 = scalar_lea.vmem [#allocation4], %s543
        %s545 = smul.u32 8, %s32
        %p546 = scmp.lt.s32.totalorder %s31, 1
        %s547 = scalar_select %p546, %s31, 1
        %p548 = scmp.lt.s32.totalorder %s545, 15
        %s549 = scalar_select %p548, %s545, 15
        %s550 = smul.addr %s549, 2
        %s551 = smul.addr %s547, 32
        %s552 = sadd.s32 %s550, %s551
        %s553 = smul.addr %s552, 8
        %s554 = scalar_lea.vmem %s0, %s553
        %s555 = smul.u32 8, %s32
        %s556 = smul.u32 %s32, 2
        %s557 = ssub.s32 %s556, 1
        %p558 = scmp.gt.s32.totalorder %s557, 0
        %s559 = scalar_select %p558, %s557, 0
        %s560 = smul.u32 4, %s559
        %p561 = scmp.lt.s32.totalorder %s31, 1
        %s562 = scalar_select %p561, %s31, 1
        %p563 = scmp.lt.s32.totalorder %s560, 15
        %s564 = scalar_select %p563, %s560, 15
        %s565 = smul.addr %s564, 2
        %s566 = smul.addr %s562, 32
        %s567 = sadd.s32 %s565, %s566
        %s568 = smul.addr %s567, 8
        %s569 = scalar_lea.vmem %s1, %s568
        %s570 = smul.u32 %s32, 2
        %s571 = ssub.s32 %s570, 1
        %p572 = scmp.gt.s32.totalorder %s571, 0
        %s573 = scalar_select %p572, %s571, 0
        %s574 = smul.u32 4, %s573
        %s575 = sadd.s32 %s32, 1
        %s576 = smul.u32 %s575, 2
        %p577 = scmp.lt.s32.totalorder %s576, 3
        %s578 = scalar_select %p577, %s576, 3
        %s579 = smul.u32 4, %s578
        %p580 = scmp.lt.s32.totalorder %s31, 1
        %s581 = scalar_select %p580, %s31, 1
        %p582 = scmp.lt.s32.totalorder %s579, 15
        %s583 = scalar_select %p582, %s579, 15
        %s584 = smul.addr %s583, 2
        %s585 = smul.addr %s581, 32
        %s586 = sadd.s32 %s584, %s585
        %s587 = smul.addr %s586, 8
        %s588 = scalar_lea.vmem %s2, %s587
        %s589 = sadd.s32 %s32, 1
        %s590 = smul.u32 %s589, 2
        %p591 = scmp.lt.s32.totalorder %s590, 3
        %s592 = scalar_select %p591, %s590, 3
        %s593 = smul.u32 4, %s592
        %s594 = smul.u32 8, %s32
        %p595 = scmp.lt.s32.totalorder %s31, 1
        %s596 = scalar_select %p595, %s31, 1
        %p597 = scmp.lt.s32.totalorder %s594, 15
        %s598 = scalar_select %p597, %s594, 15
        %s599 = smul.addr %s598, 2
        %s600 = smul.addr %s596, 32
        %s601 = sadd.s32 %s599, %s600
        %s602 = smul.addr %s601, 8
        %s603 = scalar_lea.vmem %s11, %s602
        %s604 = smul.u32 8, %s32
        %s605 = smul.u32 8, %s32
        %p607 = scmp.gt.s32.totalorder %s32, 0
        %v608 = vld [vmem:[%s569] sm:$0xff]
        %v609 = vld [vmem:[%s569 + $0x8] sm:$0xff]
        %v610 = vld [vmem:[%s569 + $0x10] sm:$0xff]
        %v611 = vld [vmem:[%s569 + $0x18] sm:$0xff]
        %v612 = vld [vmem:[%s569 + $0x20] sm:$0xff]
        %v613 = vld [vmem:[%s569 + $0x28] sm:$0xff]
        %v614 = vld [vmem:[%s569 + $0x30] sm:$0xff]
        %v615 = vld [vmem:[%s569 + $0x38] sm:$0xff]
        %s616 = scalar_select %p607, 1, 0
        %v617 = vstv %s616
        %vm618 = vcmp.eq.s32.totalorder %v617, 1
        %v619 = vsel %vm618, %v608, 0.0
        %v620 = vsel %vm618, %v609, 0.0
        %v621 = vsel %vm618, %v610, 0.0
        %v622 = vsel %vm618, %v611, 0.0
        %v623 = vsel %vm618, %v612, 0.0
        %v624 = vsel %vm618, %v613, 0.0
        %v625 = vsel %vm618, %v614, 0.0
        %v626 = vsel %vm618, %v615, 0.0
        %p627 = scmp.lt.s32.totalorder %s32, 1
        %v628 = vld [vmem:[%s588] sm:$0xff]
        %v629 = vld [vmem:[%s588 + $0x8] sm:$0xff]
        %v630 = vld [vmem:[%s588 + $0x10] sm:$0xff]
        %v631 = vld [vmem:[%s588 + $0x18] sm:$0xff]
        %v632 = vld [vmem:[%s588 + $0x20] sm:$0xff]
        %v633 = vld [vmem:[%s588 + $0x28] sm:$0xff]
        %v634 = vld [vmem:[%s588 + $0x30] sm:$0xff]
        %v635 = vld [vmem:[%s588 + $0x38] sm:$0xff]
        %s636 = scalar_select %p627, 1, 0
        %v637 = vstv %s636
        %vm638 = vcmp.eq.s32.totalorder %v637, 1
        %v639 = vsel %vm638, %v628, 0.0
        %v640 = vsel %vm638, %v629, 0.0
        %v641 = vsel %vm638, %v630, 0.0
        %v642 = vsel %vm638, %v631, 0.0
        %v643 = vsel %vm638, %v632, 0.0
        %v644 = vsel %vm638, %v633, 0.0
        %v645 = vsel %vm638, %v634, 0.0
        %v646 = vsel %vm638, %v635, 0.0
        %v647 = vld [vmem:[%s554] sm:$0xff]
        %v648 = vld [vmem:[%s554 + $0x8] sm:$0xff]
        %v649 = vld [vmem:[%s554 + $0x10] sm:$0xff]
        %v650 = vld [vmem:[%s554 + $0x18] sm:$0xff]
        %v651 = vld [vmem:[%s554 + $0x20] sm:$0xff]
        %v652 = vld [vmem:[%s554 + $0x28] sm:$0xff]
        %v653 = vld [vmem:[%s554 + $0x30] sm:$0xff]
        %v654 = vld [vmem:[%s554 + $0x38] sm:$0xff]
        %v655 = vld [vmem:[%s554 + $0x40] sm:$0xff]
        %v656 = vld [vmem:[%s554 + $0x48] sm:$0xff]
        %v657 = vld [vmem:[%s554 + $0x50] sm:$0xff]
        %v658 = vld [vmem:[%s554 + $0x58] sm:$0xff]
        %v659 = vld [vmem:[%s554 + $0x60] sm:$0xff]
        %v660 = vld [vmem:[%s554 + $0x68] sm:$0xff]
        %v661 = vld [vmem:[%s554 + $0x70] sm:$0xff]
        %v662 = vld [vmem:[%s554 + $0x78] sm:$0xff]
        %vm695 = vcmask 1040384
        %v696 = vrot.slane %v619, 7
        %v697 = vrot.slane %v620, 7
        %v698 = vsel %vm695, %v696, %v697
        %v699 = vrot.slane %v621, 7
        %v700 = vrot.slane %v622, 7
        %v701 = vsel %vm695, %v699, %v700
        %v702 = vrot.slane %v623, 7
        %v703 = vrot.slane %v624, 7
        %v704 = vsel %vm695, %v702, %v703
        %v705 = vrot.slane %v625, 7
        %v706 = vrot.slane %v626, 7
        %v707 = vsel %vm695, %v705, %v706
        %v708 = vrot.slane %v647, 7
        %v709 = vrot.slane %v648, 7
        %v710 = vsel %vm695, %v708, %v709
        %v711 = vrot.slane %v649, 7
        %v712 = vrot.slane %v650, 7
        %v713 = vsel %vm695, %v711, %v712
        %v714 = vrot.slane %v651, 7
        %v715 = vrot.slane %v652, 7
        %v716 = vsel %vm695, %v714, %v715
        %v717 = vrot.slane %v653, 7
        %v718 = vrot.slane %v654, 7
        %v719 = vsel %vm695, %v717, %v718
        %v720 = vrot.slane %v655, 7
        %v721 = vrot.slane %v656, 7
        %v722 = vsel %vm695, %v720, %v721
        %v723 = vrot.slane %v657, 7
        %v724 = vrot.slane %v658, 7
        %v725 = vsel %vm695, %v723, %v724
        %v726 = vrot.slane %v659, 7
        %v727 = vrot.slane %v660, 7
        %v728 = vsel %vm695, %v726, %v727
        %v729 = vrot.slane %v661, 7
        %v730 = vrot.slane %v662, 7
        %v731 = vsel %vm695, %v729, %v730
        %v732 = vrot.slane %v639, 7
        %v733 = vrot.slane %v640, 7
        %v734 = vsel %vm695, %v732, %v733
        %v735 = vrot.slane %v641, 7
        %v736 = vrot.slane %v642, 7
        %v737 = vsel %vm695, %v735, %v736
        %v738 = vrot.slane %v643, 7
        %v739 = vrot.slane %v644, 7
        %v740 = vsel %vm695, %v738, %v739
        %v741 = vrot.slane %v645, 7
        %v742 = vrot.slane %v646, 7
        %v743 = vsel %vm695, %v741, %v742
        %v776 = vsel %vm695, 0.0, %v696
        %v777 = vsel %vm695, 0.0, %v699
        %v778 = vsel %vm695, 0.0, %v702
        %v779 = vsel %vm695, 0.0, %v705
        %v780 = vsel %vm695, 0.0, %v708
        %v781 = vsel %vm695, 0.0, %v711
        %v782 = vsel %vm695, 0.0, %v714
        %v783 = vsel %vm695, 0.0, %v717
        %v784 = vsel %vm695, 0.0, %v720
        %v785 = vsel %vm695, 0.0, %v723
        %v786 = vsel %vm695, 0.0, %v726
        %v787 = vsel %vm695, 0.0, %v729
        %v788 = vsel %vm695, 0.0, %v732
        %v789 = vsel %vm695, 0.0, %v735
        %v790 = vsel %vm695, 0.0, %v738
        %v791 = vsel %vm695, 0.0, %v741
        %vm792 = vcmask 1046528
        %v793 = vrot.slane %v619, 1
        %v794 = vrot.slane %v620, 1
        %v795 = vsel %vm792, %v793, %v794
        %v796 = vrot.slane %v621, 1
        %v797 = vrot.slane %v622, 1
        %v798 = vsel %vm792, %v796, %v797
        %v799 = vrot.slane %v623, 1
        %v800 = vrot.slane %v624, 1
        %v801 = vsel %vm792, %v799, %v800
        %v802 = vrot.slane %v625, 1
        %v803 = vrot.slane %v626, 1
        %v804 = vsel %vm792, %v802, %v803
        %v805 = vrot.slane %v647, 1
        %v806 = vrot.slane %v648, 1
        %v807 = vsel %vm792, %v805, %v806
        %v808 = vrot.slane %v649, 1
        %v809 = vrot.slane %v650, 1
        %v810 = vsel %vm792, %v808, %v809
        %v811 = vrot.slane %v651, 1
        %v812 = vrot.slane %v652, 1
        %v813 = vsel %vm792, %v811, %v812
        %v814 = vrot.slane %v653, 1
        %v815 = vrot.slane %v654, 1
        %v816 = vsel %vm792, %v814, %v815
        %v817 = vrot.slane %v655, 1
        %v818 = vrot.slane %v656, 1
        %v819 = vsel %vm792, %v817, %v818
        %v820 = vrot.slane %v657, 1
        %v821 = vrot.slane %v658, 1
        %v822 = vsel %vm792, %v820, %v821
        %v823 = vrot.slane %v659, 1
        %v824 = vrot.slane %v660, 1
        %v825 = vsel %vm792, %v823, %v824
        %v826 = vrot.slane %v661, 1
        %v827 = vrot.slane %v662, 1
        %v828 = vsel %vm792, %v826, %v827
        %v829 = vrot.slane %v639, 1
        %v830 = vrot.slane %v640, 1
        %v831 = vsel %vm792, %v829, %v830
        %v832 = vrot.slane %v641, 1
        %v833 = vrot.slane %v642, 1
        %v834 = vsel %vm792, %v832, %v833
        %v835 = vrot.slane %v643, 1
        %v836 = vrot.slane %v644, 1
        %v837 = vsel %vm792, %v835, %v836
        %v838 = vrot.slane %v645, 1
        %v839 = vrot.slane %v646, 1
        %v840 = vsel %vm792, %v838, %v839
        %v857 = vsel %vm792, %v794, 0.0
        %v858 = vsel %vm792, %v797, 0.0
        %v859 = vsel %vm792, %v800, 0.0
        %v860 = vsel %vm792, %v803, 0.0
        %v861 = vsel %vm792, %v806, 0.0
        %v862 = vsel %vm792, %v809, 0.0
        %v863 = vsel %vm792, %v812, 0.0
        %v864 = vsel %vm792, %v815, 0.0
        %v865 = vsel %vm792, %v818, 0.0
        %v866 = vsel %vm792, %v821, 0.0
        %v867 = vsel %vm792, %v824, 0.0
        %v868 = vsel %vm792, %v827, 0.0
        %v869 = vsel %vm792, %v830, 0.0
        %v870 = vsel %vm792, %v833, 0.0
        %v871 = vsel %vm792, %v836, 0.0
        %v872 = vsel %vm792, %v839, 0.0
        %873 = vrot.lane.b32.xlu0 %v619, 32
        %v874 = vpop.permute.xlu0 %873
        %875 = vrot.lane.b32.xlu0 %v620, 32
        %v876 = vpop.permute.xlu0 %875
        %877 = vrot.lane.b32.xlu0 %v621, 32
        %v878 = vpop.permute.xlu0 %877
        %879 = vrot.lane.b32.xlu0 %v622, 32
        %v880 = vpop.permute.xlu0 %879
        %881 = vrot.lane.b32.xlu0 %v623, 32
        %v882 = vpop.permute.xlu0 %881
        %883 = vrot.lane.b32.xlu0 %v624, 32
        %v884 = vpop.permute.xlu0 %883
        %885 = vrot.lane.b32.xlu0 %v625, 32
        %v886 = vpop.permute.xlu0 %885
        %887 = vrot.lane.b32.xlu0 %v626, 32
        %v888 = vpop.permute.xlu0 %887
        %889 = vrot.lane.b32.xlu0 %v647, 32
        %v890 = vpop.permute.xlu0 %889
        %891 = vrot.lane.b32.xlu0 %v648, 32
        %v892 = vpop.permute.xlu0 %891
        %893 = vrot.lane.b32.xlu0 %v649, 32
        %v894 = vpop.permute.xlu0 %893
        %895 = vrot.lane.b32.xlu0 %v650, 32
        %v896 = vpop.permute.xlu0 %895
        %897 = vrot.lane.b32.xlu0 %v651, 32
        %v898 = vpop.permute.xlu0 %897
        %899 = vrot.lane.b32.xlu0 %v652, 32
        %v900 = vpop.permute.xlu0 %899
        %901 = vrot.lane.b32.xlu0 %v653, 32
        %v902 = vpop.permute.xlu0 %901
        %903 = vrot.lane.b32.xlu0 %v654, 32
        %v904 = vpop.permute.xlu0 %903
        %905 = vrot.lane.b32.xlu0 %v655, 32
        %v906 = vpop.permute.xlu0 %905
        %907 = vrot.lane.b32.xlu0 %v656, 32
        %v908 = vpop.permute.xlu0 %907
        %909 = vrot.lane.b32.xlu0 %v657, 32
        %v910 = vpop.permute.xlu0 %909
        %911 = vrot.lane.b32.xlu0 %v658, 32
        %v912 = vpop.permute.xlu0 %911
        %913 = vrot.lane.b32.xlu0 %v659, 32
        %v914 = vpop.permute.xlu0 %913
        %915 = vrot.lane.b32.xlu0 %v660, 32
        %v916 = vpop.permute.xlu0 %915
        %917 = vrot.lane.b32.xlu0 %v661, 32
        %v918 = vpop.permute.xlu0 %917
        %919 = vrot.lane.b32.xlu0 %v662, 32
        %v920 = vpop.permute.xlu0 %919
        %921 = vrot.lane.b32.xlu0 %v639, 32
        %v922 = vpop.permute.xlu0 %921
        %923 = vrot.lane.b32.xlu0 %v640, 32
        %v924 = vpop.permute.xlu0 %923
        %925 = vrot.lane.b32.xlu0 %v641, 32
        %v926 = vpop.permute.xlu0 %925
        %927 = vrot.lane.b32.xlu0 %v642, 32
        %v928 = vpop.permute.xlu0 %927
        %929 = vrot.lane.b32.xlu0 %v643, 32
        %v930 = vpop.permute.xlu0 %929
        %931 = vrot.lane.b32.xlu0 %v644, 32
        %v932 = vpop.permute.xlu0 %931
        %933 = vrot.lane.b32.xlu0 %v645, 32
        %v934 = vpop.permute.xlu0 %933
        %935 = vrot.lane.b32.xlu0 %v646, 32
        %v936 = vpop.permute.xlu0 %935
        %985 = vrot.lane.b32.xlu0 %v795, 64
        %v986 = vpop.permute.xlu0 %985
        %987 = vrot.lane.b32.xlu0 %v857, 64
        %v988 = vpop.permute.xlu0 %987
        %989 = vrot.lane.b32.xlu0 %v798, 64
        %v990 = vpop.permute.xlu0 %989
        %991 = vrot.lane.b32.xlu0 %v858, 64
        %v992 = vpop.permute.xlu0 %991
        %993 = vrot.lane.b32.xlu0 %v801, 64
        %v994 = vpop.permute.xlu0 %993
        %995 = vrot.lane.b32.xlu0 %v859, 64
        %v996 = vpop.permute.xlu0 %995
        %997 = vrot.lane.b32.xlu0 %v804, 64
        %v998 = vpop.permute.xlu0 %997
        %999 = vrot.lane.b32.xlu0 %v860, 64
        %v1000 = vpop.permute.xlu0 %999
        %1001 = vrot.lane.b32.xlu0 %v807, 64
        %v1002 = vpop.permute.xlu0 %1001
        %1003 = vrot.lane.b32.xlu0 %v861, 64
        %v1004 = vpop.permute.xlu0 %1003
        %1005 = vrot.lane.b32.xlu0 %v810, 64
        %v1006 = vpop.permute.xlu0 %1005
        %1007 = vrot.lane.b32.xlu0 %v862, 64
        %v1008 = vpop.permute.xlu0 %1007
        %1009 = vrot.lane.b32.xlu0 %v813, 64
        %v1010 = vpop.permute.xlu0 %1009
        %1011 = vrot.lane.b32.xlu0 %v863, 64
        %v1012 = vpop.permute.xlu0 %1011
        %1013 = vrot.lane.b32.xlu0 %v816, 64
        %v1014 = vpop.permute.xlu0 %1013
        %1015 = vrot.lane.b32.xlu0 %v864, 64
        %v1016 = vpop.permute.xlu0 %1015
        %1017 = vrot.lane.b32.xlu0 %v819, 64
        %v1018 = vpop.permute.xlu0 %1017
        %1019 = vrot.lane.b32.xlu0 %v865, 64
        %v1020 = vpop.permute.xlu0 %1019
        %1021 = vrot.lane.b32.xlu0 %v822, 64
        %v1022 = vpop.permute.xlu0 %1021
        %1023 = vrot.lane.b32.xlu0 %v866, 64
        %v1024 = vpop.permute.xlu0 %1023
        %1025 = vrot.lane.b32.xlu0 %v825, 64
        %v1026 = vpop.permute.xlu0 %1025
        %1027 = vrot.lane.b32.xlu0 %v867, 64
        %v1028 = vpop.permute.xlu0 %1027
        %1029 = vrot.lane.b32.xlu0 %v828, 64
        %v1030 = vpop.permute.xlu0 %1029
        %1031 = vrot.lane.b32.xlu0 %v868, 64
        %v1032 = vpop.permute.xlu0 %1031
        %1033 = vrot.lane.b32.xlu0 %v831, 64
        %v1034 = vpop.permute.xlu0 %1033
        %1035 = vrot.lane.b32.xlu0 %v869, 64
        %v1036 = vpop.permute.xlu0 %1035
        %1037 = vrot.lane.b32.xlu0 %v834, 64
        %v1038 = vpop.permute.xlu0 %1037
        %1039 = vrot.lane.b32.xlu0 %v870, 64
        %v1040 = vpop.permute.xlu0 %1039
        %1041 = vrot.lane.b32.xlu0 %v837, 64
        %v1042 = vpop.permute.xlu0 %1041
        %1043 = vrot.lane.b32.xlu0 %v871, 64
        %v1044 = vpop.permute.xlu0 %1043
        %1045 = vrot.lane.b32.xlu0 %v840, 64
        %v1046 = vpop.permute.xlu0 %1045
        %1047 = vrot.lane.b32.xlu0 %v872, 64
        %v1048 = vpop.permute.xlu0 %1047
        %vm1081 = vcmask 261120
        %v1082 = vsel %vm1081, %v776, %v874
        %v1083 = vsel %vm1081, %v698, %v876
        %v1084 = vsel %vm1081, %v777, %v878
        %v1085 = vsel %vm1081, %v701, %v880
        %v1086 = vsel %vm1081, %v778, %v882
        %v1087 = vsel %vm1081, %v704, %v884
        %v1088 = vsel %vm1081, %v779, %v886
        %v1089 = vsel %vm1081, %v707, %v888
        %v1090 = vsel %vm1081, %v780, %v890
        %v1091 = vsel %vm1081, %v710, %v892
        %v1092 = vsel %vm1081, %v781, %v894
        %v1093 = vsel %vm1081, %v713, %v896
        %v1094 = vsel %vm1081, %v782, %v898
        %v1095 = vsel %vm1081, %v716, %v900
        %v1096 = vsel %vm1081, %v783, %v902
        %v1097 = vsel %vm1081, %v719, %v904
        %v1098 = vsel %vm1081, %v784, %v906
        %v1099 = vsel %vm1081, %v722, %v908
        %v1100 = vsel %vm1081, %v785, %v910
        %v1101 = vsel %vm1081, %v725, %v912
        %v1102 = vsel %vm1081, %v786, %v914
        %v1103 = vsel %vm1081, %v728, %v916
        %v1104 = vsel %vm1081, %v787, %v918
        %v1105 = vsel %vm1081, %v731, %v920
        %v1106 = vsel %vm1081, %v788, %v922
        %v1107 = vsel %vm1081, %v734, %v924
        %v1108 = vsel %vm1081, %v789, %v926
        %v1109 = vsel %vm1081, %v737, %v928
        %v1110 = vsel %vm1081, %v790, %v930
        %v1111 = vsel %vm1081, %v740, %v932
        %v1112 = vsel %vm1081, %v791, %v934
        %v1113 = vsel %vm1081, %v743, %v936
        %vm1114 = vcmask 523264
        %v1115 = vsel %vm1114, %v1082, %v986
        %v1116 = vsel %vm1114, %v1083, %v988
        %v1117 = vsel %vm1114, %v1084, %v990
        %v1118 = vsel %vm1114, %v1085, %v992
        %v1119 = vsel %vm1114, %v1086, %v994
        %v1120 = vsel %vm1114, %v1087, %v996
        %v1121 = vsel %vm1114, %v1088, %v998
        %v1122 = vsel %vm1114, %v1089, %v1000
        %v1123 = vsel %vm1114, %v1090, %v1002
        %v1124 = vsel %vm1114, %v1091, %v1004
        %v1125 = vsel %vm1114, %v1092, %v1006
        %v1126 = vsel %vm1114, %v1093, %v1008
        %v1127 = vsel %vm1114, %v1094, %v1010
        %v1128 = vsel %vm1114, %v1095, %v1012
        %v1129 = vsel %vm1114, %v1096, %v1014
        %v1130 = vsel %vm1114, %v1097, %v1016
        %v1131 = vsel %vm1114, %v1098, %v1018
        %v1132 = vsel %vm1114, %v1099, %v1020
        %v1133 = vsel %vm1114, %v1100, %v1022
        %v1134 = vsel %vm1114, %v1101, %v1024
        %v1135 = vsel %vm1114, %v1102, %v1026
        %v1136 = vsel %vm1114, %v1103, %v1028
        %v1137 = vsel %vm1114, %v1104, %v1030
        %v1138 = vsel %vm1114, %v1105, %v1032
        %v1139 = vsel %vm1114, %v1106, %v1034
        %v1140 = vsel %vm1114, %v1107, %v1036
        %v1141 = vsel %vm1114, %v1108, %v1038
        %v1142 = vsel %vm1114, %v1109, %v1040
        %v1143 = vsel %vm1114, %v1110, %v1042
        %v1144 = vsel %vm1114, %v1111, %v1044
        %v1145 = vsel %vm1114, %v1112, %v1046
        %v1146 = vsel %vm1114, %v1113, %v1048
        %v1147 = vpack.c.bf16 %v1115, %v1115
        %v1148 = vpack.c.bf16 %v1116, %v1116
        %v1149 = vpack.c.bf16 %v1117, %v1117
        %v1150 = vpack.c.bf16 %v1118, %v1118
        %v1151 = vpack.c.bf16 %v1119, %v1119
        %v1152 = vpack.c.bf16 %v1120, %v1120
        %v1153 = vpack.c.bf16 %v1121, %v1121
        %v1154 = vpack.c.bf16 %v1122, %v1122
        %v1155 = vpack.c.bf16 %v1123, %v1123
        %v1156 = vpack.c.bf16 %v1124, %v1124
        %v1157 = vpack.c.bf16 %v1125, %v1125
        %v1158 = vpack.c.bf16 %v1126, %v1126
        %v1159 = vpack.c.bf16 %v1127, %v1127
        %v1160 = vpack.c.bf16 %v1128, %v1128
        %v1161 = vpack.c.bf16 %v1129, %v1129
        %v1162 = vpack.c.bf16 %v1130, %v1130
        %v1163 = vpack.c.bf16 %v1131, %v1131
        %v1164 = vpack.c.bf16 %v1132, %v1132
        %v1165 = vpack.c.bf16 %v1133, %v1133
        %v1166 = vpack.c.bf16 %v1134, %v1134
        %v1167 = vpack.c.bf16 %v1135, %v1135
        %v1168 = vpack.c.bf16 %v1136, %v1136
        %v1169 = vpack.c.bf16 %v1137, %v1137
        %v1170 = vpack.c.bf16 %v1138, %v1138
        %v1171 = vpack.c.bf16 %v1139, %v1139
        %v1172 = vpack.c.bf16 %v1140, %v1140
        %v1173 = vpack.c.bf16 %v1141, %v1141
        %v1174 = vpack.c.bf16 %v1142, %v1142
        %v1175 = vpack.c.bf16 %v1143, %v1143
        %v1176 = vpack.c.bf16 %v1144, %v1144
        %v1177 = vpack.c.bf16 %v1145, %v1145
        %v1178 = vpack.c.bf16 %v1146, %v1146
        %vm1179 = vcmask 781312
        %1180 = vst.msk [vmem:[#allocation2] sm:$0xf] %vm1179, %v1147
        %1181 = vst.msk [vmem:[#allocation2 + $0x4] sm:$0xf] %vm1179, %v1148
        %1182 = vst.msk [vmem:[#allocation2 + $0x8] sm:$0xf] %vm1179, %v1149
        %1183 = vst.msk [vmem:[#allocation2 + $0xc] sm:$0xf] %vm1179, %v1150
        %1184 = vst.msk [vmem:[#allocation2 + $0x10] sm:$0xf] %vm1179, %v1151
        %1185 = vst.msk [vmem:[#allocation2 + $0x14] sm:$0xf] %vm1179, %v1152
        %1186 = vst.msk [vmem:[#allocation2 + $0x18] sm:$0xf] %vm1179, %v1153
        %1187 = vst.msk [vmem:[#allocation2 + $0x1c] sm:$0xf] %vm1179, %v1154
        %1188 = vst.msk [vmem:[#allocation2 + $0x20] sm:$0xf] %vm1179, %v1155
        %1189 = vst.msk [vmem:[#allocation2 + $0x24] sm:$0xf] %vm1179, %v1156
        %1190 = vst.msk [vmem:[#allocation2 + $0x28] sm:$0xf] %vm1179, %v1157
        %1191 = vst.msk [vmem:[#allocation2 + $0x2c] sm:$0xf] %vm1179, %v1158
        %1192 = vst.msk [vmem:[#allocation2 + $0x30] sm:$0xf] %vm1179, %v1159
        %1193 = vst.msk [vmem:[#allocation2 + $0x34] sm:$0xf] %vm1179, %v1160
        %1194 = vst.msk [vmem:[#allocation2 + $0x38] sm:$0xf] %vm1179, %v1161
        %1195 = vst.msk [vmem:[#allocation2 + $0x3c] sm:$0xf] %vm1179, %v1162
        %1196 = vst.msk [vmem:[#allocation2 + $0x40] sm:$0xf] %vm1179, %v1163
        %1197 = vst.msk [vmem:[#allocation2 + $0x44] sm:$0xf] %vm1179, %v1164
        %1198 = vst.msk [vmem:[#allocation2 + $0x48] sm:$0xf] %vm1179, %v1165
        %1199 = vst.msk [vmem:[#allocation2 + $0x4c] sm:$0xf] %vm1179, %v1166
        %1200 = vst.msk [vmem:[#allocation2 + $0x50] sm:$0xf] %vm1179, %v1167
        %1201 = vst.msk [vmem:[#allocation2 + $0x54] sm:$0xf] %vm1179, %v1168
        %1202 = vst.msk [vmem:[#allocation2 + $0x58] sm:$0xf] %vm1179, %v1169
        %1203 = vst.msk [vmem:[#allocation2 + $0x5c] sm:$0xf] %vm1179, %v1170
        %1204 = vst.msk [vmem:[#allocation2 + $0x60] sm:$0xf] %vm1179, %v1171
        %1205 = vst.msk [vmem:[#allocation2 + $0x64] sm:$0xf] %vm1179, %v1172
        %1206 = vst.msk [vmem:[#allocation2 + $0x68] sm:$0xf] %vm1179, %v1173
        %1207 = vst.msk [vmem:[#allocation2 + $0x6c] sm:$0xf] %vm1179, %v1174
        %1208 = vst.msk [vmem:[#allocation2 + $0x70] sm:$0xf] %vm1179, %v1175
        %1209 = vst.msk [vmem:[#allocation2 + $0x74] sm:$0xf] %vm1179, %v1176
        %1210 = vst.msk [vmem:[#allocation2 + $0x78] sm:$0xf] %vm1179, %v1177
        %1211 = vst.msk [vmem:[#allocation2 + $0x7c] sm:$0xf] %vm1179, %v1178
        %v1212 = vld [vmem:[%s4] sm:$0x1]
        %v1214 = vperm.slane %v1212, 0
        %v1216 = vld [vmem:[#allocation2] sm:$0xf]
        %v1217 = vld [vmem:[#allocation2 + $0x4] sm:$0xf]
        %v1218 = vld [vmem:[#allocation2 + $0x8] sm:$0xf]
        %v1219 = vld [vmem:[#allocation2 + $0xc] sm:$0xf]
        %v1220 = vld [vmem:[#allocation2 + $0x10] sm:$0xf]
        %v1221 = vld [vmem:[#allocation2 + $0x14] sm:$0xf]
        %v1222 = vld [vmem:[#allocation2 + $0x18] sm:$0xf]
        %v1223 = vld [vmem:[#allocation2 + $0x1c] sm:$0xf]
        %v1224 = vld [vmem:[#allocation2 + $0x20] sm:$0xf]
        %v1225 = vld [vmem:[#allocation2 + $0x24] sm:$0xf]
        %v1226 = vld [vmem:[#allocation2 + $0x28] sm:$0xf]
        %v1227 = vld [vmem:[#allocation2 + $0x2c] sm:$0xf]
        %v1228 = vld [vmem:[#allocation2 + $0x30] sm:$0xf]
        %v1229 = vld [vmem:[#allocation2 + $0x34] sm:$0xf]
        %v1230 = vld [vmem:[#allocation2 + $0x38] sm:$0xf]
        %v1231 = vld [vmem:[#allocation2 + $0x3c] sm:$0xf]
        %v1232 = vld [vmem:[#allocation2 + $0x40] sm:$0xf]
        %v1233 = vld [vmem:[#allocation2 + $0x44] sm:$0xf]
        %v1234 = vld [vmem:[#allocation2 + $0x48] sm:$0xf]
        %v1235 = vld [vmem:[#allocation2 + $0x4c] sm:$0xf]
        %v1236 = vld [vmem:[#allocation2 + $0x50] sm:$0xf]
        %v1237 = vld [vmem:[#allocation2 + $0x54] sm:$0xf]
        %v1238 = vld [vmem:[#allocation2 + $0x58] sm:$0xf]
        %v1239 = vld [vmem:[#allocation2 + $0x5c] sm:$0xf]
        %v1240 = vld [vmem:[#allocation2 + $0x60] sm:$0xf]
        %v1241 = vld [vmem:[#allocation2 + $0x64] sm:$0xf]
        %v1242 = vld [vmem:[#allocation2 + $0x68] sm:$0xf]
        %v1243 = vld [vmem:[#allocation2 + $0x6c] sm:$0xf]
        %v1244 = vld [vmem:[%s3] sm:$0xf]
        %v1245 = vld [vmem:[%s3 + $0x4] sm:$0xf]
        %v1246 = vld [vmem:[%s3 + $0x8] sm:$0xf]
        %v1247 = vld [vmem:[%s3 + $0xc] sm:$0xf]
        %v1248 = vld [vmem:[%s3 + $0x10] sm:$0xf]
        %v1249 = vld [vmem:[%s3 + $0x14] sm:$0xf]
        %v1250 = vld [vmem:[%s3 + $0x18] sm:$0xf]
        %v1251 = vld [vmem:[%s3 + $0x1c] sm:$0xf]
        %v1252 = vld [vmem:[%s3 + $0x20] sm:$0xf]
        %v1253 = vld [vmem:[%s3 + $0x24] sm:$0xf]
        %v1254 = vld [vmem:[%s3 + $0x28] sm:$0xf]
        %v1255 = vld [vmem:[%s3 + $0x2c] sm:$0xf]
        %v1284 = vunpack.c.l.b16 %v1216
        %v1285 = vunpack.c.l.b16 %v1217
        %v1286 = vunpack.c.l.b16 %v1218
        %v1287 = vunpack.c.l.b16 %v1219
        %v1288 = vunpack.c.l.b16 %v1220
        %v1289 = vunpack.c.l.b16 %v1221
        %v1290 = vunpack.c.l.b16 %v1222
        %v1291 = vunpack.c.l.b16 %v1223
        %v1292 = vunpack.c.l.b16 %v1224
        %v1293 = vunpack.c.l.b16 %v1225
        %v1294 = vunpack.c.l.b16 %v1226
        %v1295 = vunpack.c.l.b16 %v1227
        %v1296 = vunpack.c.l.b16 %v1228
        %v1297 = vunpack.c.l.b16 %v1229
        %v1298 = vunpack.c.l.b16 %v1230
        %v1299 = vunpack.c.l.b16 %v1231
        %v1300 = vunpack.c.l.b16 %v1232
        %v1301 = vunpack.c.l.b16 %v1233
        %v1302 = vunpack.c.l.b16 %v1234
        %v1303 = vunpack.c.l.b16 %v1235
        %v1304 = vunpack.c.l.b16 %v1236
        %v1305 = vunpack.c.l.b16 %v1237
        %v1306 = vunpack.c.l.b16 %v1238
        %v1307 = vunpack.c.l.b16 %v1239
        %v1308 = vunpack.c.l.b16 %v1240
        %v1309 = vunpack.c.l.b16 %v1241
        %v1310 = vunpack.c.l.b16 %v1242
        %v1311 = vunpack.c.l.b16 %v1243
        %v1312 = vpack.c.b16 %v1285, %v1284
        %v1313 = vpack.c.b16 %v1287, %v1286
        %v1314 = vpack.c.b16 %v1289, %v1288
        %v1315 = vpack.c.b16 %v1291, %v1290
        %v1316 = vpack.c.b16 %v1293, %v1292
        %v1317 = vpack.c.b16 %v1295, %v1294
        %v1318 = vpack.c.b16 %v1297, %v1296
        %v1319 = vpack.c.b16 %v1299, %v1298
        %v1320 = vpack.c.b16 %v1301, %v1300
        %v1321 = vpack.c.b16 %v1303, %v1302
        %v1322 = vpack.c.b16 %v1305, %v1304
        %v1323 = vpack.c.b16 %v1307, %v1306
        %v1324 = vpack.c.b16 %v1309, %v1308
        %v1325 = vpack.c.b16 %v1311, %v1310
        %v1338 = vunpack.c.l.b16 %v1244
        %v1339 = vunpack.c.l.b16 %v1245
        %v1340 = vunpack.c.l.b16 %v1246
        %v1341 = vunpack.c.l.b16 %v1247
        %v1342 = vunpack.c.l.b16 %v1248
        %v1343 = vunpack.c.l.b16 %v1249
        %v1344 = vunpack.c.l.b16 %v1250
        %v1345 = vunpack.c.l.b16 %v1251
        %v1346 = vunpack.c.l.b16 %v1252
        %v1347 = vunpack.c.l.b16 %v1253
        %v1348 = vunpack.c.l.b16 %v1254
        %v1349 = vunpack.c.l.b16 %v1255
        %v1350 = vpack.c.b16 %v1339, %v1338
        %v1351 = vpack.c.b16 %v1341, %v1340
        %v1352 = vpack.c.b16 %v1343, %v1342
        %v1353 = vpack.c.b16 %v1345, %v1344
        %v1354 = vpack.c.b16 %v1347, %v1346
        %v1355 = vpack.c.b16 %v1349, %v1348
        %vm1362 = vcmask 785408
        %v1364 = vsel %vm1362, %v1312, 0
        %v1367 = vsel %vm1362, %v1313, 0
        %v1370 = vsel %vm1362, %v1314, 0
        %v1373 = vsel %vm1362, %v1315, 0
        %v1376 = vsel %vm1362, %v1316, 0
        %v1379 = vsel %vm1362, %v1317, 0
        %v1382 = vsel %vm1362, %v1318, 0
        %v1385 = vsel %vm1362, %v1319, 0
        %v1388 = vsel %vm1362, %v1320, 0
        %v1391 = vsel %vm1362, %v1321, 0
        %v1394 = vsel %vm1362, %v1322, 0
        %v1397 = vsel %vm1362, %v1323, 0
        %v1400 = vsel %vm1362, %v1324, 0
        %v1403 = vsel %vm1362, %v1325, 0
        %1405 = vmatpush.bf16.msra.mxu0 0
        %1406 = vmatpush.bf16.msra.mxu0 0
        %1407 = vmatpush.bf16.msra.mxu0 %v1355
        %1408 = vmatpush.bf16.msra.mxu0 %v1354
        %1409 = vmatpush.bf16.msra.mxu0 %v1353
        %1410 = vmatpush.bf16.msra.mxu0 %v1352
        %1411 = vmatpush.bf16.msra.mxu0 %v1351
        %1412 = vmatpush.bf16.msra.mxu0 %v1350
        %1413 = vmatmul.bf16.gmra.mxu0 %v1364
        %v1414 = vpop.f32.mrf.mxu0
        %v1415 = vadd.f32 0.0, %v1414
        %v1416 = vpop.f32.mrf.mxu0
        %v1417 = vadd.f32 0.0, %v1416
        %1418 = vmatmul.bf16.gmra.mxu0 %v1367
        %v1419 = vpop.f32.mrf.mxu0
        %v1420 = vadd.f32 0.0, %v1419
        %v1421 = vpop.f32.mrf.mxu0
        %v1422 = vadd.f32 0.0, %v1421
        %1423 = vmatmul.bf16.gmra.mxu0 %v1370
        %v1424 = vpop.f32.mrf.mxu0
        %v1425 = vadd.f32 0.0, %v1424
        %v1426 = vpop.f32.mrf.mxu0
        %v1427 = vadd.f32 0.0, %v1426
        %1428 = vmatmul.bf16.gmra.mxu0 %v1373
        %v1429 = vpop.f32.mrf.mxu0
        %v1430 = vadd.f32 0.0, %v1429
        %v1431 = vpop.f32.mrf.mxu0
        %v1432 = vadd.f32 0.0, %v1431
        %1433 = vmatmul.bf16.gmra.mxu0 %v1376
        %v1434 = vpop.f32.mrf.mxu0
        %v1435 = vadd.f32 0.0, %v1434
        %v1436 = vpop.f32.mrf.mxu0
        %v1437 = vadd.f32 0.0, %v1436
        %1438 = vmatmul.bf16.gmra.mxu0 %v1379
        %v1439 = vpop.f32.mrf.mxu0
        %v1440 = vadd.f32 0.0, %v1439
        %v1441 = vpop.f32.mrf.mxu0
        %v1442 = vadd.f32 0.0, %v1441
        %1443 = vmatmul.bf16.gmra.mxu0 %v1382
        %v1444 = vpop.f32.mrf.mxu0
        %v1445 = vadd.f32 0.0, %v1444
        %v1446 = vpop.f32.mrf.mxu0
        %v1447 = vadd.f32 0.0, %v1446
        %1448 = vmatmul.bf16.gmra.mxu0 %v1385
        %v1449 = vpop.f32.mrf.mxu0
        %v1450 = vadd.f32 0.0, %v1449
        %v1451 = vpop.f32.mrf.mxu0
        %v1452 = vadd.f32 0.0, %v1451
        %1453 = vmatmul.bf16.gmra.mxu0 %v1388
        %v1454 = vpop.f32.mrf.mxu0
        %v1455 = vadd.f32 0.0, %v1454
        %v1456 = vpop.f32.mrf.mxu0
        %v1457 = vadd.f32 0.0, %v1456
        %1458 = vmatmul.bf16.gmra.mxu0 %v1391
        %v1459 = vpop.f32.mrf.mxu0
        %v1460 = vadd.f32 0.0, %v1459
        %v1461 = vpop.f32.mrf.mxu0
        %v1462 = vadd.f32 0.0, %v1461
        %1463 = vmatmul.bf16.gmra.mxu0 %v1394
        %v1464 = vpop.f32.mrf.mxu0
        %v1465 = vadd.f32 0.0, %v1464
        %v1466 = vpop.f32.mrf.mxu0
        %v1467 = vadd.f32 0.0, %v1466
        %1468 = vmatmul.bf16.gmra.mxu0 %v1397
        %v1469 = vpop.f32.mrf.mxu0
        %v1470 = vadd.f32 0.0, %v1469
        %v1471 = vpop.f32.mrf.mxu0
        %v1472 = vadd.f32 0.0, %v1471
        %1473 = vmatmul.bf16.gmra.mxu0 %v1400
        %v1474 = vpop.f32.mrf.mxu0
        %v1475 = vadd.f32 0.0, %v1474
        %v1476 = vpop.f32.mrf.mxu0
        %v1477 = vadd.f32 0.0, %v1476
        %1478 = vmatmul.bf16.gmra.mxu0 %v1403
        %v1479 = vpop.f32.mrf.mxu0
        %v1480 = vadd.f32 0.0, %v1479
        %v1481 = vpop.f32.mrf.mxu0
        %v1482 = vadd.f32 0.0, %v1481
        %1483 = vdwg.mxu0
        %v1484 = vadd.f32 %v1214, %v1415
        %v1485 = vadd.f32 %v1214, %v1417
        %v1486 = vadd.f32 %v1214, %v1420
        %v1487 = vadd.f32 %v1214, %v1422
        %v1488 = vadd.f32 %v1214, %v1425
        %v1489 = vadd.f32 %v1214, %v1427
        %v1490 = vadd.f32 %v1214, %v1430
        %v1491 = vadd.f32 %v1214, %v1432
        %v1492 = vadd.f32 %v1214, %v1435
        %v1493 = vadd.f32 %v1214, %v1437
        %v1494 = vadd.f32 %v1214, %v1440
        %v1495 = vadd.f32 %v1214, %v1442
        %v1496 = vadd.f32 %v1214, %v1445
        %v1497 = vadd.f32 %v1214, %v1447
        %v1498 = vadd.f32 %v1214, %v1450
        %v1499 = vadd.f32 %v1214, %v1452
        %v1500 = vadd.f32 %v1214, %v1455
        %v1501 = vadd.f32 %v1214, %v1457
        %v1502 = vadd.f32 %v1214, %v1460
        %v1503 = vadd.f32 %v1214, %v1462
        %v1504 = vadd.f32 %v1214, %v1465
        %v1505 = vadd.f32 %v1214, %v1467
        %v1506 = vadd.f32 %v1214, %v1470
        %v1507 = vadd.f32 %v1214, %v1472
        %v1508 = vadd.f32 %v1214, %v1475
        %v1509 = vadd.f32 %v1214, %v1477
        %v1510 = vadd.f32 %v1214, %v1480
        %v1511 = vadd.f32 %v1214, %v1482
        %s1512 = scalar_lea.vmem [#allocation2], 8
        %v1513 = vld [vmem:[%s1512] sm:$0xf]
        %v1514 = vld [vmem:[%s1512 + $0x4] sm:$0xf]
        %v1515 = vld [vmem:[%s1512 + $0x8] sm:$0xf]
        %v1516 = vld [vmem:[%s1512 + $0xc] sm:$0xf]
        %v1517 = vld [vmem:[%s1512 + $0x10] sm:$0xf]
        %v1518 = vld [vmem:[%s1512 + $0x14] sm:$0xf]
        %v1519 = vld [vmem:[%s1512 + $0x18] sm:$0xf]
        %v1520 = vld [vmem:[%s1512 + $0x1c] sm:$0xf]
        %v1521 = vld [vmem:[%s1512 + $0x20] sm:$0xf]
        %v1522 = vld [vmem:[%s1512 + $0x24] sm:$0xf]
        %v1523 = vld [vmem:[%s1512 + $0x28] sm:$0xf]
        %v1524 = vld [vmem:[%s1512 + $0x2c] sm:$0xf]
        %v1525 = vld [vmem:[%s1512 + $0x30] sm:$0xf]
        %v1526 = vld [vmem:[%s1512 + $0x34] sm:$0xf]
        %v1527 = vld [vmem:[%s1512 + $0x38] sm:$0xf]
        %v1528 = vld [vmem:[%s1512 + $0x3c] sm:$0xf]
        %v1529 = vld [vmem:[%s1512 + $0x40] sm:$0xf]
        %v1530 = vld [vmem:[%s1512 + $0x44] sm:$0xf]
        %v1531 = vld [vmem:[%s1512 + $0x48] sm:$0xf]
        %v1532 = vld [vmem:[%s1512 + $0x4c] sm:$0xf]
        %v1533 = vld [vmem:[%s1512 + $0x50] sm:$0xf]
        %v1534 = vld [vmem:[%s1512 + $0x54] sm:$0xf]
        %v1535 = vld [vmem:[%s1512 + $0x58] sm:$0xf]
        %v1536 = vld [vmem:[%s1512 + $0x5c] sm:$0xf]
        %v1537 = vld [vmem:[%s1512 + $0x60] sm:$0xf]
        %v1538 = vld [vmem:[%s1512 + $0x64] sm:$0xf]
        %v1539 = vld [vmem:[%s1512 + $0x68] sm:$0xf]
        %v1540 = vld [vmem:[%s1512 + $0x6c] sm:$0xf]
        %s1541 = scalar_lea.vmem %s3, 48
        %v1542 = vld [vmem:[%s1541] sm:$0xf]
        %v1543 = vld [vmem:[%s1541 + $0x4] sm:$0xf]
        %v1544 = vld [vmem:[%s1541 + $0x8] sm:$0xf]
        %v1545 = vld [vmem:[%s1541 + $0xc] sm:$0xf]
        %v1546 = vld [vmem:[%s1541 + $0x10] sm:$0xf]
        %v1547 = vld [vmem:[%s1541 + $0x14] sm:$0xf]
        %v1548 = vld [vmem:[%s1541 + $0x18] sm:$0xf]
        %v1549 = vld [vmem:[%s1541 + $0x1c] sm:$0xf]
        %v1550 = vld [vmem:[%s1541 + $0x20] sm:$0xf]
        %v1551 = vld [vmem:[%s1541 + $0x24] sm:$0xf]
        %v1552 = vld [vmem:[%s1541 + $0x28] sm:$0xf]
        %v1553 = vld [vmem:[%s1541 + $0x2c] sm:$0xf]
        %v1582 = vunpack.c.l.b16 %v1513
        %v1583 = vunpack.c.l.b16 %v1514
        %v1584 = vunpack.c.l.b16 %v1515
        %v1585 = vunpack.c.l.b16 %v1516
        %v1586 = vunpack.c.l.b16 %v1517
        %v1587 = vunpack.c.l.b16 %v1518
        %v1588 = vunpack.c.l.b16 %v1519
        %v1589 = vunpack.c.l.b16 %v1520
        %v1590 = vunpack.c.l.b16 %v1521
        %v1591 = vunpack.c.l.b16 %v1522
        %v1592 = vunpack.c.l.b16 %v1523
        %v1593 = vunpack.c.l.b16 %v1524
        %v1594 = vunpack.c.l.b16 %v1525
        %v1595 = vunpack.c.l.b16 %v1526
        %v1596 = vunpack.c.l.b16 %v1527
        %v1597 = vunpack.c.l.b16 %v1528
        %v1598 = vunpack.c.l.b16 %v1529
        %v1599 = vunpack.c.l.b16 %v1530
        %v1600 = vunpack.c.l.b16 %v1531
        %v1601 = vunpack.c.l.b16 %v1532
        %v1602 = vunpack.c.l.b16 %v1533
        %v1603 = vunpack.c.l.b16 %v1534
        %v1604 = vunpack.c.l.b16 %v1535
        %v1605 = vunpack.c.l.b16 %v1536
        %v1606 = vunpack.c.l.b16 %v1537
        %v1607 = vunpack.c.l.b16 %v1538
        %v1608 = vunpack.c.l.b16 %v1539
        %v1609 = vunpack.c.l.b16 %v1540
        %v1610 = vpack.c.b16 %v1583, %v1582
        %v1611 = vpack.c.b16 %v1585, %v1584
        %v1612 = vpack.c.b16 %v1587, %v1586
        %v1613 = vpack.c.b16 %v1589, %v1588
        %v1614 = vpack.c.b16 %v1591, %v1590
        %v1615 = vpack.c.b16 %v1593, %v1592
        %v1616 = vpack.c.b16 %v1595, %v1594
        %v1617 = vpack.c.b16 %v1597, %v1596
        %v1618 = vpack.c.b16 %v1599, %v1598
        %v1619 = vpack.c.b16 %v1601, %v1600
        %v1620 = vpack.c.b16 %v1603, %v1602
        %v1621 = vpack.c.b16 %v1605, %v1604
        %v1622 = vpack.c.b16 %v1607, %v1606
        %v1623 = vpack.c.b16 %v1609, %v1608
        %v1636 = vunpack.c.l.b16 %v1542
        %v1637 = vunpack.c.l.b16 %v1543
        %v1638 = vunpack.c.l.b16 %v1544
        %v1639 = vunpack.c.l.b16 %v1545
        %v1640 = vunpack.c.l.b16 %v1546
        %v1641 = vunpack.c.l.b16 %v1547
        %v1642 = vunpack.c.l.b16 %v1548
        %v1643 = vunpack.c.l.b16 %v1549
        %v1644 = vunpack.c.l.b16 %v1550
        %v1645 = vunpack.c.l.b16 %v1551
        %v1646 = vunpack.c.l.b16 %v1552
        %v1647 = vunpack.c.l.b16 %v1553
        %v1648 = vpack.c.b16 %v1637, %v1636
        %v1649 = vpack.c.b16 %v1639, %v1638
        %v1650 = vpack.c.b16 %v1641, %v1640
        %v1651 = vpack.c.b16 %v1643, %v1642
        %v1652 = vpack.c.b16 %v1645, %v1644
        %v1653 = vpack.c.b16 %v1647, %v1646
        %v1661 = vsel %vm1362, %v1610, 0
        %v1664 = vsel %vm1362, %v1611, 0
        %v1667 = vsel %vm1362, %v1612, 0
        %v1670 = vsel %vm1362, %v1613, 0
        %v1673 = vsel %vm1362, %v1614, 0
        %v1676 = vsel %vm1362, %v1615, 0
        %v1679 = vsel %vm1362, %v1616, 0
        %v1682 = vsel %vm1362, %v1617, 0
        %v1685 = vsel %vm1362, %v1618, 0
        %v1688 = vsel %vm1362, %v1619, 0
        %v1691 = vsel %vm1362, %v1620, 0
        %v1694 = vsel %vm1362, %v1621, 0
        %v1697 = vsel %vm1362, %v1622, 0
        %v1700 = vsel %vm1362, %v1623, 0
        %1702 = vmatpush.bf16.msra.mxu0 0
        %1703 = vmatpush.bf16.msra.mxu0 0
        %1704 = vmatpush.bf16.msra.mxu0 %v1653
        %1705 = vmatpush.bf16.msra.mxu0 %v1652
        %1706 = vmatpush.bf16.msra.mxu0 %v1651
        %1707 = vmatpush.bf16.msra.mxu0 %v1650
        %1708 = vmatpush.bf16.msra.mxu0 %v1649
        %1709 = vmatpush.bf16.msra.mxu0 %v1648
        %1710 = vmatmul.bf16.gmra.mxu0 %v1661
        %v1711 = vpop.f32.mrf.mxu0
        %v1712 = vadd.f32 0.0, %v1711
        %v1713 = vpop.f32.mrf.mxu0
        %v1714 = vadd.f32 0.0, %v1713
        %1715 = vmatmul.bf16.gmra.mxu0 %v1664
        %v1716 = vpop.f32.mrf.mxu0
        %v1717 = vadd.f32 0.0, %v1716
        %v1718 = vpop.f32.mrf.mxu0
        %v1719 = vadd.f32 0.0, %v1718
        %1720 = vmatmul.bf16.gmra.mxu0 %v1667
        %v1721 = vpop.f32.mrf.mxu0
        %v1722 = vadd.f32 0.0, %v1721
        %v1723 = vpop.f32.mrf.mxu0
        %v1724 = vadd.f32 0.0, %v1723
        %1725 = vmatmul.bf16.gmra.mxu0 %v1670
        %v1726 = vpop.f32.mrf.mxu0
        %v1727 = vadd.f32 0.0, %v1726
        %v1728 = vpop.f32.mrf.mxu0
        %v1729 = vadd.f32 0.0, %v1728
        %1730 = vmatmul.bf16.gmra.mxu0 %v1673
        %v1731 = vpop.f32.mrf.mxu0
        %v1732 = vadd.f32 0.0, %v1731
        %v1733 = vpop.f32.mrf.mxu0
        %v1734 = vadd.f32 0.0, %v1733
        %1735 = vmatmul.bf16.gmra.mxu0 %v1676
        %v1736 = vpop.f32.mrf.mxu0
        %v1737 = vadd.f32 0.0, %v1736
        %v1738 = vpop.f32.mrf.mxu0
        %v1739 = vadd.f32 0.0, %v1738
        %1740 = vmatmul.bf16.gmra.mxu0 %v1679
        %v1741 = vpop.f32.mrf.mxu0
        %v1742 = vadd.f32 0.0, %v1741
        %v1743 = vpop.f32.mrf.mxu0
        %v1744 = vadd.f32 0.0, %v1743
        %1745 = vmatmul.bf16.gmra.mxu0 %v1682
        %v1746 = vpop.f32.mrf.mxu0
        %v1747 = vadd.f32 0.0, %v1746
        %v1748 = vpop.f32.mrf.mxu0
        %v1749 = vadd.f32 0.0, %v1748
        %1750 = vmatmul.bf16.gmra.mxu0 %v1685
        %v1751 = vpop.f32.mrf.mxu0
        %v1752 = vadd.f32 0.0, %v1751
        %v1753 = vpop.f32.mrf.mxu0
        %v1754 = vadd.f32 0.0, %v1753
        %1755 = vmatmul.bf16.gmra.mxu0 %v1688
        %v1756 = vpop.f32.mrf.mxu0
        %v1757 = vadd.f32 0.0, %v1756
        %v1758 = vpop.f32.mrf.mxu0
        %v1759 = vadd.f32 0.0, %v1758
        %1760 = vmatmul.bf16.gmra.mxu0 %v1691
        %v1761 = vpop.f32.mrf.mxu0
        %v1762 = vadd.f32 0.0, %v1761
        %v1763 = vpop.f32.mrf.mxu0
        %v1764 = vadd.f32 0.0, %v1763
        %1765 = vmatmul.bf16.gmra.mxu0 %v1694
        %v1766 = vpop.f32.mrf.mxu0
        %v1767 = vadd.f32 0.0, %v1766
        %v1768 = vpop.f32.mrf.mxu0
        %v1769 = vadd.f32 0.0, %v1768
        %1770 = vmatmul.bf16.gmra.mxu0 %v1697
        %v1771 = vpop.f32.mrf.mxu0
        %v1772 = vadd.f32 0.0, %v1771
        %v1773 = vpop.f32.mrf.mxu0
        %v1774 = vadd.f32 0.0, %v1773
        %1775 = vmatmul.bf16.gmra.mxu0 %v1700
        %v1776 = vpop.f32.mrf.mxu0
        %v1777 = vadd.f32 0.0, %v1776
        %v1778 = vpop.f32.mrf.mxu0
        %v1779 = vadd.f32 0.0, %v1778
        %1780 = vdwg.mxu0
        %v1781 = vadd.f32 %v1484, %v1712
        %v1782 = vadd.f32 %v1485, %v1714
        %v1783 = vadd.f32 %v1486, %v1717
        %v1784 = vadd.f32 %v1487, %v1719
        %v1785 = vadd.f32 %v1488, %v1722
        %v1786 = vadd.f32 %v1489, %v1724
        %v1787 = vadd.f32 %v1490, %v1727
        %v1788 = vadd.f32 %v1491, %v1729
        %v1789 = vadd.f32 %v1492, %v1732
        %v1790 = vadd.f32 %v1493, %v1734
        %v1791 = vadd.f32 %v1494, %v1737
        %v1792 = vadd.f32 %v1495, %v1739
        %v1793 = vadd.f32 %v1496, %v1742
        %v1794 = vadd.f32 %v1497, %v1744
        %v1795 = vadd.f32 %v1498, %v1747
        %v1796 = vadd.f32 %v1499, %v1749
        %v1797 = vadd.f32 %v1500, %v1752
        %v1798 = vadd.f32 %v1501, %v1754
        %v1799 = vadd.f32 %v1502, %v1757
        %v1800 = vadd.f32 %v1503, %v1759
        %v1801 = vadd.f32 %v1504, %v1762
        %v1802 = vadd.f32 %v1505, %v1764
        %v1803 = vadd.f32 %v1506, %v1767
        %v1804 = vadd.f32 %v1507, %v1769
        %v1805 = vadd.f32 %v1508, %v1772
        %v1806 = vadd.f32 %v1509, %v1774
        %v1807 = vadd.f32 %v1510, %v1777
        %v1808 = vadd.f32 %v1511, %v1779
        %s1809 = scalar_lea.vmem [#allocation2], 16
        %v1810 = vld [vmem:[%s1809] sm:$0xf]
        %v1811 = vld [vmem:[%s1809 + $0x4] sm:$0xf]
        %v1812 = vld [vmem:[%s1809 + $0x8] sm:$0xf]
        %v1813 = vld [vmem:[%s1809 + $0xc] sm:$0xf]
        %v1814 = vld [vmem:[%s1809 + $0x10] sm:$0xf]
        %v1815 = vld [vmem:[%s1809 + $0x14] sm:$0xf]
        %v1816 = vld [vmem:[%s1809 + $0x18] sm:$0xf]
        %v1817 = vld [vmem:[%s1809 + $0x1c] sm:$0xf]
        %v1818 = vld [vmem:[%s1809 + $0x20] sm:$0xf]
        %v1819 = vld [vmem:[%s1809 + $0x24] sm:$0xf]
        %v1820 = vld [vmem:[%s1809 + $0x28] sm:$0xf]
        %v1821 = vld [vmem:[%s1809 + $0x2c] sm:$0xf]
        %v1822 = vld [vmem:[%s1809 + $0x30] sm:$0xf]
        %v1823 = vld [vmem:[%s1809 + $0x34] sm:$0xf]
        %v1824 = vld [vmem:[%s1809 + $0x38] sm:$0xf]
        %v1825 = vld [vmem:[%s1809 + $0x3c] sm:$0xf]
        %v1826 = vld [vmem:[%s1809 + $0x40] sm:$0xf]
        %v1827 = vld [vmem:[%s1809 + $0x44] sm:$0xf]
        %v1828 = vld [vmem:[%s1809 + $0x48] sm:$0xf]
        %v1829 = vld [vmem:[%s1809 + $0x4c] sm:$0xf]
        %v1830 = vld [vmem:[%s1809 + $0x50] sm:$0xf]
        %v1831 = vld [vmem:[%s1809 + $0x54] sm:$0xf]
        %v1832 = vld [vmem:[%s1809 + $0x58] sm:$0xf]
        %v1833 = vld [vmem:[%s1809 + $0x5c] sm:$0xf]
        %v1834 = vld [vmem:[%s1809 + $0x60] sm:$0xf]
        %v1835 = vld [vmem:[%s1809 + $0x64] sm:$0xf]
        %v1836 = vld [vmem:[%s1809 + $0x68] sm:$0xf]
        %v1837 = vld [vmem:[%s1809 + $0x6c] sm:$0xf]
        %s1838 = scalar_lea.vmem %s3, 96
        %v1839 = vld [vmem:[%s1838] sm:$0xf]
        %v1840 = vld [vmem:[%s1838 + $0x4] sm:$0xf]
        %v1841 = vld [vmem:[%s1838 + $0x8] sm:$0xf]
        %v1842 = vld [vmem:[%s1838 + $0xc] sm:$0xf]
        %v1843 = vld [vmem:[%s1838 + $0x10] sm:$0xf]
        %v1844 = vld [vmem:[%s1838 + $0x14] sm:$0xf]
        %v1845 = vld [vmem:[%s1838 + $0x18] sm:$0xf]
        %v1846 = vld [vmem:[%s1838 + $0x1c] sm:$0xf]
        %v1847 = vld [vmem:[%s1838 + $0x20] sm:$0xf]
        %v1848 = vld [vmem:[%s1838 + $0x24] sm:$0xf]
        %v1849 = vld [vmem:[%s1838 + $0x28] sm:$0xf]
        %v1850 = vld [vmem:[%s1838 + $0x2c] sm:$0xf]
        %v1879 = vunpack.c.l.b16 %v1810
        %v1880 = vunpack.c.l.b16 %v1811
        %v1881 = vunpack.c.l.b16 %v1812
        %v1882 = vunpack.c.l.b16 %v1813
        %v1883 = vunpack.c.l.b16 %v1814
        %v1884 = vunpack.c.l.b16 %v1815
        %v1885 = vunpack.c.l.b16 %v1816
        %v1886 = vunpack.c.l.b16 %v1817
        %v1887 = vunpack.c.l.b16 %v1818
        %v1888 = vunpack.c.l.b16 %v1819
        %v1889 = vunpack.c.l.b16 %v1820
        %v1890 = vunpack.c.l.b16 %v1821
        %v1891 = vunpack.c.l.b16 %v1822
        %v1892 = vunpack.c.l.b16 %v1823
        %v1893 = vunpack.c.l.b16 %v1824
        %v1894 = vunpack.c.l.b16 %v1825
        %v1895 = vunpack.c.l.b16 %v1826
        %v1896 = vunpack.c.l.b16 %v1827
        %v1897 = vunpack.c.l.b16 %v1828
        %v1898 = vunpack.c.l.b16 %v1829
        %v1899 = vunpack.c.l.b16 %v1830
        %v1900 = vunpack.c.l.b16 %v1831
        %v1901 = vunpack.c.l.b16 %v1832
        %v1902 = vunpack.c.l.b16 %v1833
        %v1903 = vunpack.c.l.b16 %v1834
        %v1904 = vunpack.c.l.b16 %v1835
        %v1905 = vunpack.c.l.b16 %v1836
        %v1906 = vunpack.c.l.b16 %v1837
        %v1907 = vpack.c.b16 %v1880, %v1879
        %v1908 = vpack.c.b16 %v1882, %v1881
        %v1909 = vpack.c.b16 %v1884, %v1883
        %v1910 = vpack.c.b16 %v1886, %v1885
        %v1911 = vpack.c.b16 %v1888, %v1887
        %v1912 = vpack.c.b16 %v1890, %v1889
        %v1913 = vpack.c.b16 %v1892, %v1891
        %v1914 = vpack.c.b16 %v1894, %v1893
        %v1915 = vpack.c.b16 %v1896, %v1895
        %v1916 = vpack.c.b16 %v1898, %v1897
        %v1917 = vpack.c.b16 %v1900, %v1899
        %v1918 = vpack.c.b16 %v1902, %v1901
        %v1919 = vpack.c.b16 %v1904, %v1903
        %v1920 = vpack.c.b16 %v1906, %v1905
        %v1933 = vunpack.c.l.b16 %v1839
        %v1934 = vunpack.c.l.b16 %v1840
        %v1935 = vunpack.c.l.b16 %v1841
        %v1936 = vunpack.c.l.b16 %v1842
        %v1937 = vunpack.c.l.b16 %v1843
        %v1938 = vunpack.c.l.b16 %v1844
        %v1939 = vunpack.c.l.b16 %v1845
        %v1940 = vunpack.c.l.b16 %v1846
        %v1941 = vunpack.c.l.b16 %v1847
        %v1942 = vunpack.c.l.b16 %v1848
        %v1943 = vunpack.c.l.b16 %v1849
        %v1944 = vunpack.c.l.b16 %v1850
        %v1945 = vpack.c.b16 %v1934, %v1933
        %v1946 = vpack.c.b16 %v1936, %v1935
        %v1947 = vpack.c.b16 %v1938, %v1937
        %v1948 = vpack.c.b16 %v1940, %v1939
        %v1949 = vpack.c.b16 %v1942, %v1941
        %v1950 = vpack.c.b16 %v1944, %v1943
        %v1958 = vsel %vm1362, %v1907, 0
        %v1961 = vsel %vm1362, %v1908, 0
        %v1964 = vsel %vm1362, %v1909, 0
        %v1967 = vsel %vm1362, %v1910, 0
        %v1970 = vsel %vm1362, %v1911, 0
        %v1973 = vsel %vm1362, %v1912, 0
        %v1976 = vsel %vm1362, %v1913, 0
        %v1979 = vsel %vm1362, %v1914, 0
        %v1982 = vsel %vm1362, %v1915, 0
        %v1985 = vsel %vm1362, %v1916, 0
        %v1988 = vsel %vm1362, %v1917, 0
        %v1991 = vsel %vm1362, %v1918, 0
        %v1994 = vsel %vm1362, %v1919, 0
        %v1997 = vsel %vm1362, %v1920, 0
        %1999 = vmatpush.bf16.msra.mxu0 0
        %2000 = vmatpush.bf16.msra.mxu0 0
        %2001 = vmatpush.bf16.msra.mxu0 %v1950
        %2002 = vmatpush.bf16.msra.mxu0 %v1949
        %2003 = vmatpush.bf16.msra.mxu0 %v1948
        %2004 = vmatpush.bf16.msra.mxu0 %v1947
        %2005 = vmatpush.bf16.msra.mxu0 %v1946
        %2006 = vmatpush.bf16.msra.mxu0 %v1945
        %2007 = vmatmul.bf16.gmra.mxu0 %v1958
        %v2008 = vpop.f32.mrf.mxu0
        %v2009 = vadd.f32 0.0, %v2008
        %v2010 = vpop.f32.mrf.mxu0
        %v2011 = vadd.f32 0.0, %v2010
        %2012 = vmatmul.bf16.gmra.mxu0 %v1961
        %v2013 = vpop.f32.mrf.mxu0
        %v2014 = vadd.f32 0.0, %v2013
        %v2015 = vpop.f32.mrf.mxu0
        %v2016 = vadd.f32 0.0, %v2015
        %2017 = vmatmul.bf16.gmra.mxu0 %v1964
        %v2018 = vpop.f32.mrf.mxu0
        %v2019 = vadd.f32 0.0, %v2018
        %v2020 = vpop.f32.mrf.mxu0
        %v2021 = vadd.f32 0.0, %v2020
        %2022 = vmatmul.bf16.gmra.mxu0 %v1967
        %v2023 = vpop.f32.mrf.mxu0
        %v2024 = vadd.f32 0.0, %v2023
        %v2025 = vpop.f32.mrf.mxu0
        %v2026 = vadd.f32 0.0, %v2025
        %2027 = vmatmul.bf16.gmra.mxu0 %v1970
        %v2028 = vpop.f32.mrf.mxu0
        %v2029 = vadd.f32 0.0, %v2028
        %v2030 = vpop.f32.mrf.mxu0
        %v2031 = vadd.f32 0.0, %v2030
        %2032 = vmatmul.bf16.gmra.mxu0 %v1973
        %v2033 = vpop.f32.mrf.mxu0
        %v2034 = vadd.f32 0.0, %v2033
        %v2035 = vpop.f32.mrf.mxu0
        %v2036 = vadd.f32 0.0, %v2035
        %2037 = vmatmul.bf16.gmra.mxu0 %v1976
        %v2038 = vpop.f32.mrf.mxu0
        %v2039 = vadd.f32 0.0, %v2038
        %v2040 = vpop.f32.mrf.mxu0
        %v2041 = vadd.f32 0.0, %v2040
        %2042 = vmatmul.bf16.gmra.mxu0 %v1979
        %v2043 = vpop.f32.mrf.mxu0
        %v2044 = vadd.f32 0.0, %v2043
        %v2045 = vpop.f32.mrf.mxu0
        %v2046 = vadd.f32 0.0, %v2045
        %2047 = vmatmul.bf16.gmra.mxu0 %v1982
        %v2048 = vpop.f32.mrf.mxu0
        %v2049 = vadd.f32 0.0, %v2048
        %v2050 = vpop.f32.mrf.mxu0
        %v2051 = vadd.f32 0.0, %v2050
        %2052 = vmatmul.bf16.gmra.mxu0 %v1985
        %v2053 = vpop.f32.mrf.mxu0
        %v2054 = vadd.f32 0.0, %v2053
        %v2055 = vpop.f32.mrf.mxu0
        %v2056 = vadd.f32 0.0, %v2055
        %2057 = vmatmul.bf16.gmra.mxu0 %v1988
        %v2058 = vpop.f32.mrf.mxu0
        %v2059 = vadd.f32 0.0, %v2058
        %v2060 = vpop.f32.mrf.mxu0
        %v2061 = vadd.f32 0.0, %v2060
        %2062 = vmatmul.bf16.gmra.mxu0 %v1991
        %v2063 = vpop.f32.mrf.mxu0
        %v2064 = vadd.f32 0.0, %v2063
        %v2065 = vpop.f32.mrf.mxu0
        %v2066 = vadd.f32 0.0, %v2065
        %2067 = vmatmul.bf16.gmra.mxu0 %v1994
        %v2068 = vpop.f32.mrf.mxu0
        %v2069 = vadd.f32 0.0, %v2068
        %v2070 = vpop.f32.mrf.mxu0
        %v2071 = vadd.f32 0.0, %v2070
        %2072 = vmatmul.bf16.gmra.mxu0 %v1997
        %v2073 = vpop.f32.mrf.mxu0
        %v2074 = vadd.f32 0.0, %v2073
        %v2075 = vpop.f32.mrf.mxu0
        %v2076 = vadd.f32 0.0, %v2075
        %2077 = vdwg.mxu0
        %v2078 = vadd.f32 %v1781, %v2009
        %v2079 = vadd.f32 %v1782, %v2011
        %v2080 = vadd.f32 %v1783, %v2014
        %v2081 = vadd.f32 %v1784, %v2016
        %v2082 = vadd.f32 %v1785, %v2019
        %v2083 = vadd.f32 %v1786, %v2021
        %v2084 = vadd.f32 %v1787, %v2024
        %v2085 = vadd.f32 %v1788, %v2026
        %v2086 = vadd.f32 %v1789, %v2029
        %v2087 = vadd.f32 %v1790, %v2031
        %v2088 = vadd.f32 %v1791, %v2034
        %v2089 = vadd.f32 %v1792, %v2036
        %v2090 = vadd.f32 %v1793, %v2039
        %v2091 = vadd.f32 %v1794, %v2041
        %v2092 = vadd.f32 %v1795, %v2044
        %v2093 = vadd.f32 %v1796, %v2046
        %v2094 = vadd.f32 %v1797, %v2049
        %v2095 = vadd.f32 %v1798, %v2051
        %v2096 = vadd.f32 %v1799, %v2054
        %v2097 = vadd.f32 %v1800, %v2056
        %v2098 = vadd.f32 %v1801, %v2059
        %v2099 = vadd.f32 %v1802, %v2061
        %v2100 = vadd.f32 %v1803, %v2064
        %v2101 = vadd.f32 %v1804, %v2066
        %v2102 = vadd.f32 %v1805, %v2069
        %v2103 = vadd.f32 %v1806, %v2071
        %v2104 = vadd.f32 %v1807, %v2074
        %v2105 = vadd.f32 %v1808, %v2076
        %v2106 = vmax.f32 %v2078, 0.0
        %v2107 = vmax.f32 %v2079, 0.0
        %v2108 = vmax.f32 %v2080, 0.0
        %v2109 = vmax.f32 %v2081, 0.0
        %v2110 = vmax.f32 %v2082, 0.0
        %v2111 = vmax.f32 %v2083, 0.0
        %v2112 = vmax.f32 %v2084, 0.0
        %v2113 = vmax.f32 %v2085, 0.0
        %v2114 = vmax.f32 %v2086, 0.0
        %v2115 = vmax.f32 %v2087, 0.0
        %v2116 = vmax.f32 %v2088, 0.0
        %v2117 = vmax.f32 %v2089, 0.0
        %v2118 = vmax.f32 %v2090, 0.0
        %v2119 = vmax.f32 %v2091, 0.0
        %v2120 = vmax.f32 %v2092, 0.0
        %v2121 = vmax.f32 %v2093, 0.0
        %v2122 = vmax.f32 %v2094, 0.0
        %v2123 = vmax.f32 %v2095, 0.0
        %v2124 = vmax.f32 %v2096, 0.0
        %v2125 = vmax.f32 %v2097, 0.0
        %v2126 = vmax.f32 %v2098, 0.0
        %v2127 = vmax.f32 %v2099, 0.0
        %v2128 = vmax.f32 %v2100, 0.0
        %v2129 = vmax.f32 %v2101, 0.0
        %v2130 = vmax.f32 %v2102, 0.0
        %v2131 = vmax.f32 %v2103, 0.0
        %v2132 = vmax.f32 %v2104, 0.0
        %v2133 = vmax.f32 %v2105, 0.0
        %v2134 = vsel %vm618, 1, 0
        %v2135 = vsel %vm638, 1, 0
        %vm2136 = vcmp.eq.s32.totalorder %v2134, 1
        %vm2137 = vcmp.eq.s32.totalorder %v2135, 1
        %v2138 = vsel %vm2136, %v2106, 0.0
        %v2139 = vsel %vm2136, %v2107, 0.0
        %v2140 = vsel %vm2136, %v2108, 0.0
        %v2141 = vsel %vm2136, %v2109, 0.0
        %v2142 = vsel %vm2136, %v2110, 0.0
        %v2143 = vsel %vm2136, %v2111, 0.0
        %v2144 = vsel 1, %v2112, 0.0
        %v2145 = vsel 1, %v2113, 0.0
        %v2146 = vsel 1, %v2114, 0.0
        %v2147 = vsel 1, %v2115, 0.0
        %v2148 = vsel 1, %v2116, 0.0
        %v2149 = vsel 1, %v2117, 0.0
        %v2150 = vsel 1, %v2118, 0.0
        %v2151 = vsel 1, %v2119, 0.0
        %v2152 = vsel 1, %v2120, 0.0
        %v2153 = vsel 1, %v2121, 0.0
        %v2154 = vsel 1, %v2122, 0.0
        %v2155 = vsel 1, %v2123, 0.0
        %v2156 = vsel 1, %v2124, 0.0
        %v2157 = vsel 1, %v2125, 0.0
        %v2158 = vsel 1, %v2126, 0.0
        %v2159 = vsel 1, %v2127, 0.0
        %v2160 = vsel %vm2137, %v2128, 0.0
        %v2161 = vsel %vm2137, %v2129, 0.0
        %v2162 = vsel %vm2137, %v2130, 0.0
        %v2163 = vsel %vm2137, %v2131, 0.0
        %v2164 = vsel %vm2137, %v2132, 0.0
        %v2165 = vsel %vm2137, %v2133, 0.0
        %v2194 = vrot.slane %v2138, 7
        %v2195 = vrot.slane %v2139, 7
        %v2196 = vsel %vm695, %v2194, %v2195
        %v2197 = vrot.slane %v2140, 7
        %v2198 = vrot.slane %v2141, 7
        %v2199 = vsel %vm695, %v2197, %v2198
        %v2200 = vrot.slane %v2142, 7
        %v2201 = vrot.slane %v2143, 7
        %v2202 = vsel %vm695, %v2200, %v2201
        %v2203 = vrot.slane %v2144, 7
        %v2204 = vrot.slane %v2145, 7
        %v2205 = vsel %vm695, %v2203, %v2204
        %v2206 = vrot.slane %v2146, 7
        %v2207 = vrot.slane %v2147, 7
        %v2208 = vsel %vm695, %v2206, %v2207
        %v2209 = vrot.slane %v2148, 7
        %v2210 = vrot.slane %v2149, 7
        %v2211 = vsel %vm695, %v2209, %v2210
        %v2212 = vrot.slane %v2150, 7
        %v2213 = vrot.slane %v2151, 7
        %v2214 = vsel %vm695, %v2212, %v2213
        %v2215 = vrot.slane %v2152, 7
        %v2216 = vrot.slane %v2153, 7
        %v2217 = vsel %vm695, %v2215, %v2216
        %v2218 = vrot.slane %v2154, 7
        %v2219 = vrot.slane %v2155, 7
        %v2220 = vsel %vm695, %v2218, %v2219
        %v2221 = vrot.slane %v2156, 7
        %v2222 = vrot.slane %v2157, 7
        %v2223 = vsel %vm695, %v2221, %v2222
        %v2224 = vrot.slane %v2158, 7
        %v2225 = vrot.slane %v2159, 7
        %v2226 = vsel %vm695, %v2224, %v2225
        %v2227 = vrot.slane %v2160, 7
        %v2228 = vrot.slane %v2161, 7
        %v2229 = vsel %vm695, %v2227, %v2228
        %v2230 = vrot.slane %v2162, 7
        %v2231 = vrot.slane %v2163, 7
        %v2232 = vsel %vm695, %v2230, %v2231
        %v2233 = vrot.slane %v2164, 7
        %v2234 = vrot.slane %v2165, 7
        %v2235 = vsel %vm695, %v2233, %v2234
        %v2264 = vsel %vm695, 0.0, %v2194
        %v2265 = vsel %vm695, 0.0, %v2197
        %v2266 = vsel %vm695, 0.0, %v2200
        %v2267 = vsel %vm695, 0.0, %v2203
        %v2268 = vsel %vm695, 0.0, %v2206
        %v2269 = vsel %vm695, 0.0, %v2209
        %v2270 = vsel %vm695, 0.0, %v2212
        %v2271 = vsel %vm695, 0.0, %v2215
        %v2272 = vsel %vm695, 0.0, %v2218
        %v2273 = vsel %vm695, 0.0, %v2221
        %v2274 = vsel %vm695, 0.0, %v2224
        %v2275 = vsel %vm695, 0.0, %v2227
        %v2276 = vsel %vm695, 0.0, %v2230
        %v2277 = vsel %vm695, 0.0, %v2233
        %v2278 = vrot.slane %v2138, 1
        %v2279 = vrot.slane %v2139, 1
        %v2280 = vsel %vm792, %v2278, %v2279
        %v2281 = vrot.slane %v2140, 1
        %v2282 = vrot.slane %v2141, 1
        %v2283 = vsel %vm792, %v2281, %v2282
        %v2284 = vrot.slane %v2142, 1
        %v2285 = vrot.slane %v2143, 1
        %v2286 = vsel %vm792, %v2284, %v2285
        %v2287 = vrot.slane %v2144, 1
        %v2288 = vrot.slane %v2145, 1
        %v2289 = vsel %vm792, %v2287, %v2288
        %v2290 = vrot.slane %v2146, 1
        %v2291 = vrot.slane %v2147, 1
        %v2292 = vsel %vm792, %v2290, %v2291
        %v2293 = vrot.slane %v2148, 1
        %v2294 = vrot.slane %v2149, 1
        %v2295 = vsel %vm792, %v2293, %v2294
        %v2296 = vrot.slane %v2150, 1
        %v2297 = vrot.slane %v2151, 1
        %v2298 = vsel %vm792, %v2296, %v2297
        %v2299 = vrot.slane %v2152, 1
        %v2300 = vrot.slane %v2153, 1
        %v2301 = vsel %vm792, %v2299, %v2300
        %v2302 = vrot.slane %v2154, 1
        %v2303 = vrot.slane %v2155, 1
        %v2304 = vsel %vm792, %v2302, %v2303
        %v2305 = vrot.slane %v2156, 1
        %v2306 = vrot.slane %v2157, 1
        %v2307 = vsel %vm792, %v2305, %v2306
        %v2308 = vrot.slane %v2158, 1
        %v2309 = vrot.slane %v2159, 1
        %v2310 = vsel %vm792, %v2308, %v2309
        %v2311 = vrot.slane %v2160, 1
        %v2312 = vrot.slane %v2161, 1
        %v2313 = vsel %vm792, %v2311, %v2312
        %v2314 = vrot.slane %v2162, 1
        %v2315 = vrot.slane %v2163, 1
        %v2316 = vsel %vm792, %v2314, %v2315
        %v2317 = vrot.slane %v2164, 1
        %v2318 = vrot.slane %v2165, 1
        %v2319 = vsel %vm792, %v2317, %v2318
        %v2334 = vsel %vm792, %v2279, 0.0
        %v2335 = vsel %vm792, %v2282, 0.0
        %v2336 = vsel %vm792, %v2285, 0.0
        %v2337 = vsel %vm792, %v2288, 0.0
        %v2338 = vsel %vm792, %v2291, 0.0
        %v2339 = vsel %vm792, %v2294, 0.0
        %v2340 = vsel %vm792, %v2297, 0.0
        %v2341 = vsel %vm792, %v2300, 0.0
        %v2342 = vsel %vm792, %v2303, 0.0
        %v2343 = vsel %vm792, %v2306, 0.0
        %v2344 = vsel %vm792, %v2309, 0.0
        %v2345 = vsel %vm792, %v2312, 0.0
        %v2346 = vsel %vm792, %v2315, 0.0
        %v2347 = vsel %vm792, %v2318, 0.0
        %2348 = vrot.lane.b32.xlu0 %v2138, 32
        %v2349 = vpop.permute.xlu0 %2348
        %2350 = vrot.lane.b32.xlu0 %v2139, 32
        %v2351 = vpop.permute.xlu0 %2350
        %2352 = vrot.lane.b32.xlu0 %v2140, 32
        %v2353 = vpop.permute.xlu0 %2352
        %2354 = vrot.lane.b32.xlu0 %v2141, 32
        %v2355 = vpop.permute.xlu0 %2354
        %2356 = vrot.lane.b32.xlu0 %v2142, 32
        %v2357 = vpop.permute.xlu0 %2356
        %2358 = vrot.lane.b32.xlu0 %v2143, 32
        %v2359 = vpop.permute.xlu0 %2358
        %2360 = vrot.lane.b32.xlu0 %v2144, 32
        %v2361 = vpop.permute.xlu0 %2360
        %2362 = vrot.lane.b32.xlu0 %v2145, 32
        %v2363 = vpop.permute.xlu0 %2362
        %2364 = vrot.lane.b32.xlu0 %v2146, 32
        %v2365 = vpop.permute.xlu0 %2364
        %2366 = vrot.lane.b32.xlu0 %v2147, 32
        %v2367 = vpop.permute.xlu0 %2366
        %2368 = vrot.lane.b32.xlu0 %v2148, 32
        %v2369 = vpop.permute.xlu0 %2368
        %2370 = vrot.lane.b32.xlu0 %v2149, 32
        %v2371 = vpop.permute.xlu0 %2370
        %2372 = vrot.lane.b32.xlu0 %v2150, 32
        %v2373 = vpop.permute.xlu0 %2372
        %2374 = vrot.lane.b32.xlu0 %v2151, 32
        %v2375 = vpop.permute.xlu0 %2374
        %2376 = vrot.lane.b32.xlu0 %v2152, 32
        %v2377 = vpop.permute.xlu0 %2376
        %2378 = vrot.lane.b32.xlu0 %v2153, 32
        %v2379 = vpop.permute.xlu0 %2378
        %2380 = vrot.lane.b32.xlu0 %v2154, 32
        %v2381 = vpop.permute.xlu0 %2380
        %2382 = vrot.lane.b32.xlu0 %v2155, 32
        %v2383 = vpop.permute.xlu0 %2382
        %2384 = vrot.lane.b32.xlu0 %v2156, 32
        %v2385 = vpop.permute.xlu0 %2384
        %2386 = vrot.lane.b32.xlu0 %v2157, 32
        %v2387 = vpop.permute.xlu0 %2386
        %2388 = vrot.lane.b32.xlu0 %v2158, 32
        %v2389 = vpop.permute.xlu0 %2388
        %2390 = vrot.lane.b32.xlu0 %v2159, 32
        %v2391 = vpop.permute.xlu0 %2390
        %2392 = vrot.lane.b32.xlu0 %v2160, 32
        %v2393 = vpop.permute.xlu0 %2392
        %2394 = vrot.lane.b32.xlu0 %v2161, 32
        %v2395 = vpop.permute.xlu0 %2394
        %2396 = vrot.lane.b32.xlu0 %v2162, 32
        %v2397 = vpop.permute.xlu0 %2396
        %2398 = vrot.lane.b32.xlu0 %v2163, 32
        %v2399 = vpop.permute.xlu0 %2398
        %2400 = vrot.lane.b32.xlu0 %v2164, 32
        %v2401 = vpop.permute.xlu0 %2400
        %2402 = vrot.lane.b32.xlu0 %v2165, 32
        %v2403 = vpop.permute.xlu0 %2402
        %2446 = vrot.lane.b32.xlu0 %v2280, 64
        %v2447 = vpop.permute.xlu0 %2446
        %2448 = vrot.lane.b32.xlu0 %v2334, 64
        %v2449 = vpop.permute.xlu0 %2448
        %2450 = vrot.lane.b32.xlu0 %v2283, 64
        %v2451 = vpop.permute.xlu0 %2450
        %2452 = vrot.lane.b32.xlu0 %v2335, 64
        %v2453 = vpop.permute.xlu0 %2452
        %2454 = vrot.lane.b32.xlu0 %v2286, 64
        %v2455 = vpop.permute.xlu0 %2454
        %2456 = vrot.lane.b32.xlu0 %v2336, 64
        %v2457 = vpop.permute.xlu0 %2456
        %2458 = vrot.lane.b32.xlu0 %v2289, 64
        %v2459 = vpop.permute.xlu0 %2458
        %2460 = vrot.lane.b32.xlu0 %v2337, 64
        %v2461 = vpop.permute.xlu0 %2460
        %2462 = vrot.lane.b32.xlu0 %v2292, 64
        %v2463 = vpop.permute.xlu0 %2462
        %2464 = vrot.lane.b32.xlu0 %v2338, 64
        %v2465 = vpop.permute.xlu0 %2464
        %2466 = vrot.lane.b32.xlu0 %v2295, 64
        %v2467 = vpop.permute.xlu0 %2466
        %2468 = vrot.lane.b32.xlu0 %v2339, 64
        %v2469 = vpop.permute.xlu0 %2468
        %2470 = vrot.lane.b32.xlu0 %v2298, 64
        %v2471 = vpop.permute.xlu0 %2470
        %2472 = vrot.lane.b32.xlu0 %v2340, 64
        %v2473 = vpop.permute.xlu0 %2472
        %2474 = vrot.lane.b32.xlu0 %v2301, 64
        %v2475 = vpop.permute.xlu0 %2474
        %2476 = vrot.lane.b32.xlu0 %v2341, 64
        %v2477 = vpop.permute.xlu0 %2476
        %2478 = vrot.lane.b32.xlu0 %v2304, 64
        %v2479 = vpop.permute.xlu0 %2478
        %2480 = vrot.lane.b32.xlu0 %v2342, 64
        %v2481 = vpop.permute.xlu0 %2480
        %2482 = vrot.lane.b32.xlu0 %v2307, 64
        %v2483 = vpop.permute.xlu0 %2482
        %2484 = vrot.lane.b32.xlu0 %v2343, 64
        %v2485 = vpop.permute.xlu0 %2484
        %2486 = vrot.lane.b32.xlu0 %v2310, 64
        %v2487 = vpop.permute.xlu0 %2486
        %2488 = vrot.lane.b32.xlu0 %v2344, 64
        %v2489 = vpop.permute.xlu0 %2488
        %2490 = vrot.lane.b32.xlu0 %v2313, 64
        %v2491 = vpop.permute.xlu0 %2490
        %2492 = vrot.lane.b32.xlu0 %v2345, 64
        %v2493 = vpop.permute.xlu0 %2492
        %2494 = vrot.lane.b32.xlu0 %v2316, 64
        %v2495 = vpop.permute.xlu0 %2494
        %2496 = vrot.lane.b32.xlu0 %v2346, 64
        %v2497 = vpop.permute.xlu0 %2496
        %2498 = vrot.lane.b32.xlu0 %v2319, 64
        %v2499 = vpop.permute.xlu0 %2498
        %2500 = vrot.lane.b32.xlu0 %v2347, 64
        %v2501 = vpop.permute.xlu0 %2500
        %v2530 = vsel %vm1081, %v2264, %v2349
        %v2531 = vsel %vm1081, %v2196, %v2351
        %v2532 = vsel %vm1081, %v2265, %v2353
        %v2533 = vsel %vm1081, %v2199, %v2355
        %v2534 = vsel %vm1081, %v2266, %v2357
        %v2535 = vsel %vm1081, %v2202, %v2359
        %v2536 = vsel %vm1081, %v2267, %v2361
        %v2537 = vsel %vm1081, %v2205, %v2363
        %v2538 = vsel %vm1081, %v2268, %v2365
        %v2539 = vsel %vm1081, %v2208, %v2367
        %v2540 = vsel %vm1081, %v2269, %v2369
        %v2541 = vsel %vm1081, %v2211, %v2371
        %v2542 = vsel %vm1081, %v2270, %v2373
        %v2543 = vsel %vm1081, %v2214, %v2375
        %v2544 = vsel %vm1081, %v2271, %v2377
        %v2545 = vsel %vm1081, %v2217, %v2379
        %v2546 = vsel %vm1081, %v2272, %v2381
        %v2547 = vsel %vm1081, %v2220, %v2383
        %v2548 = vsel %vm1081, %v2273, %v2385
        %v2549 = vsel %vm1081, %v2223, %v2387
        %v2550 = vsel %vm1081, %v2274, %v2389
        %v2551 = vsel %vm1081, %v2226, %v2391
        %v2552 = vsel %vm1081, %v2275, %v2393
        %v2553 = vsel %vm1081, %v2229, %v2395
        %v2554 = vsel %vm1081, %v2276, %v2397
        %v2555 = vsel %vm1081, %v2232, %v2399
        %v2556 = vsel %vm1081, %v2277, %v2401
        %v2557 = vsel %vm1081, %v2235, %v2403
        %v2558 = vsel %vm1114, %v2530, %v2447
        %v2559 = vsel %vm1114, %v2531, %v2449
        %v2560 = vsel %vm1114, %v2532, %v2451
        %v2561 = vsel %vm1114, %v2533, %v2453
        %v2562 = vsel %vm1114, %v2534, %v2455
        %v2563 = vsel %vm1114, %v2535, %v2457
        %v2564 = vsel %vm1114, %v2536, %v2459
        %v2565 = vsel %vm1114, %v2537, %v2461
        %v2566 = vsel %vm1114, %v2538, %v2463
        %v2567 = vsel %vm1114, %v2539, %v2465
        %v2568 = vsel %vm1114, %v2540, %v2467
        %v2569 = vsel %vm1114, %v2541, %v2469
        %v2570 = vsel %vm1114, %v2542, %v2471
        %v2571 = vsel %vm1114, %v2543, %v2473
        %v2572 = vsel %vm1114, %v2544, %v2475
        %v2573 = vsel %vm1114, %v2545, %v2477
        %v2574 = vsel %vm1114, %v2546, %v2479
        %v2575 = vsel %vm1114, %v2547, %v2481
        %v2576 = vsel %vm1114, %v2548, %v2483
        %v2577 = vsel %vm1114, %v2549, %v2485
        %v2578 = vsel %vm1114, %v2550, %v2487
        %v2579 = vsel %vm1114, %v2551, %v2489
        %v2580 = vsel %vm1114, %v2552, %v2491
        %v2581 = vsel %vm1114, %v2553, %v2493
        %v2582 = vsel %vm1114, %v2554, %v2495
        %v2583 = vsel %vm1114, %v2555, %v2497
        %v2584 = vsel %vm1114, %v2556, %v2499
        %v2585 = vsel %vm1114, %v2557, %v2501
        %v2586 = vpack.c.bf16 %v2558, %v2558
        %v2587 = vpack.c.bf16 %v2559, %v2559
        %v2588 = vpack.c.bf16 %v2560, %v2560
        %v2589 = vpack.c.bf16 %v2561, %v2561
        %v2590 = vpack.c.bf16 %v2562, %v2562
        %v2591 = vpack.c.bf16 %v2563, %v2563
        %v2592 = vpack.c.bf16 %v2564, %v2564
        %v2593 = vpack.c.bf16 %v2565, %v2565
        %v2594 = vpack.c.bf16 %v2566, %v2566
        %v2595 = vpack.c.bf16 %v2567, %v2567
        %v2596 = vpack.c.bf16 %v2568, %v2568
        %v2597 = vpack.c.bf16 %v2569, %v2569
        %v2598 = vpack.c.bf16 %v2570, %v2570
        %v2599 = vpack.c.bf16 %v2571, %v2571
        %v2600 = vpack.c.bf16 %v2572, %v2572
        %v2601 = vpack.c.bf16 %v2573, %v2573
        %v2602 = vpack.c.bf16 %v2574, %v2574
        %v2603 = vpack.c.bf16 %v2575, %v2575
        %v2604 = vpack.c.bf16 %v2576, %v2576
        %v2605 = vpack.c.bf16 %v2577, %v2577
        %v2606 = vpack.c.bf16 %v2578, %v2578
        %v2607 = vpack.c.bf16 %v2579, %v2579
        %v2608 = vpack.c.bf16 %v2580, %v2580
        %v2609 = vpack.c.bf16 %v2581, %v2581
        %v2610 = vpack.c.bf16 %v2582, %v2582
        %v2611 = vpack.c.bf16 %v2583, %v2583
        %v2612 = vpack.c.bf16 %v2584, %v2584
        %v2613 = vpack.c.bf16 %v2585, %v2585
        %2614 = vst.msk [vmem:[#allocation2] sm:$0xf] %vm1179, %v2586
        %2615 = vst.msk [vmem:[#allocation2 + $0x4] sm:$0xf] %vm1179, %v2587
        %2616 = vst.msk [vmem:[#allocation2 + $0x8] sm:$0xf] %vm1179, %v2588
        %2617 = vst.msk [vmem:[#allocation2 + $0xc] sm:$0xf] %vm1179, %v2589
        %2618 = vst.msk [vmem:[#allocation2 + $0x10] sm:$0xf] %vm1179, %v2590
        %2619 = vst.msk [vmem:[#allocation2 + $0x14] sm:$0xf] %vm1179, %v2591
        %2620 = vst.msk [vmem:[#allocation2 + $0x18] sm:$0xf] %vm1179, %v2592
        %2621 = vst.msk [vmem:[#allocation2 + $0x1c] sm:$0xf] %vm1179, %v2593
        %2622 = vst.msk [vmem:[#allocation2 + $0x20] sm:$0xf] %vm1179, %v2594
        %2623 = vst.msk [vmem:[#allocation2 + $0x24] sm:$0xf] %vm1179, %v2595
        %2624 = vst.msk [vmem:[#allocation2 + $0x28] sm:$0xf] %vm1179, %v2596
        %2625 = vst.msk [vmem:[#allocation2 + $0x2c] sm:$0xf] %vm1179, %v2597
        %2626 = vst.msk [vmem:[#allocation2 + $0x30] sm:$0xf] %vm1179, %v2598
        %2627 = vst.msk [vmem:[#allocation2 + $0x34] sm:$0xf] %vm1179, %v2599
        %2628 = vst.msk [vmem:[#allocation2 + $0x38] sm:$0xf] %vm1179, %v2600
        %2629 = vst.msk [vmem:[#allocation2 + $0x3c] sm:$0xf] %vm1179, %v2601
        %2630 = vst.msk [vmem:[#allocation2 + $0x40] sm:$0xf] %vm1179, %v2602
        %2631 = vst.msk [vmem:[#allocation2 + $0x44] sm:$0xf] %vm1179, %v2603
        %2632 = vst.msk [vmem:[#allocation2 + $0x48] sm:$0xf] %vm1179, %v2604
        %2633 = vst.msk [vmem:[#allocation2 + $0x4c] sm:$0xf] %vm1179, %v2605
        %2634 = vst.msk [vmem:[#allocation2 + $0x50] sm:$0xf] %vm1179, %v2606
        %2635 = vst.msk [vmem:[#allocation2 + $0x54] sm:$0xf] %vm1179, %v2607
        %2636 = vst.msk [vmem:[#allocation2 + $0x58] sm:$0xf] %vm1179, %v2608
        %2637 = vst.msk [vmem:[#allocation2 + $0x5c] sm:$0xf] %vm1179, %v2609
        %2638 = vst.msk [vmem:[#allocation2 + $0x60] sm:$0xf] %vm1179, %v2610
        %2639 = vst.msk [vmem:[#allocation2 + $0x64] sm:$0xf] %vm1179, %v2611
        %2640 = vst.msk [vmem:[#allocation2 + $0x68] sm:$0xf] %vm1179, %v2612
        %2641 = vst.msk [vmem:[#allocation2 + $0x6c] sm:$0xf] %vm1179, %v2613
        %v2642 = vld [vmem:[%s6] sm:$0x1]
        %v2644 = vperm.slane %v2642, 0
        %v2646 = vld [vmem:[#allocation2] sm:$0xf]
        %v2647 = vld [vmem:[#allocation2 + $0x4] sm:$0xf]
        %v2648 = vld [vmem:[#allocation2 + $0x8] sm:$0xf]
        %v2649 = vld [vmem:[#allocation2 + $0xc] sm:$0xf]
        %v2650 = vld [vmem:[#allocation2 + $0x10] sm:$0xf]
        %v2651 = vld [vmem:[#allocation2 + $0x14] sm:$0xf]
        %v2652 = vld [vmem:[#allocation2 + $0x18] sm:$0xf]
        %v2653 = vld [vmem:[#allocation2 + $0x1c] sm:$0xf]
        %v2654 = vld [vmem:[#allocation2 + $0x20] sm:$0xf]
        %v2655 = vld [vmem:[#allocation2 + $0x24] sm:$0xf]
        %v2656 = vld [vmem:[#allocation2 + $0x28] sm:$0xf]
        %v2657 = vld [vmem:[#allocation2 + $0x2c] sm:$0xf]
        %v2658 = vld [vmem:[#allocation2 + $0x30] sm:$0xf]
        %v2659 = vld [vmem:[#allocation2 + $0x34] sm:$0xf]
        %v2660 = vld [vmem:[#allocation2 + $0x38] sm:$0xf]
        %v2661 = vld [vmem:[#allocation2 + $0x3c] sm:$0xf]
        %v2662 = vld [vmem:[#allocation2 + $0x40] sm:$0xf]
        %v2663 = vld [vmem:[#allocation2 + $0x44] sm:$0xf]
        %v2664 = vld [vmem:[#allocation2 + $0x48] sm:$0xf]
        %v2665 = vld [vmem:[#allocation2 + $0x4c] sm:$0xf]
        %v2666 = vld [vmem:[#allocation2 + $0x50] sm:$0xf]
        %v2667 = vld [vmem:[#allocation2 + $0x54] sm:$0xf]
        %v2668 = vld [vmem:[#allocation2 + $0x58] sm:$0xf]
        %v2669 = vld [vmem:[#allocation2 + $0x5c] sm:$0xf]
        %v2670 = vld [vmem:[%s5] sm:$0xf]
        %v2671 = vld [vmem:[%s5 + $0x4] sm:$0xf]
        %v2672 = vld [vmem:[%s5 + $0x8] sm:$0xf]
        %v2673 = vld [vmem:[%s5 + $0xc] sm:$0xf]
        %v2674 = vld [vmem:[%s5 + $0x10] sm:$0xf]
        %v2675 = vld [vmem:[%s5 + $0x14] sm:$0xf]
        %v2676 = vld [vmem:[%s5 + $0x18] sm:$0xf]
        %v2677 = vld [vmem:[%s5 + $0x1c] sm:$0xf]
        %v2678 = vld [vmem:[%s5 + $0x20] sm:$0xf]
        %v2679 = vld [vmem:[%s5 + $0x24] sm:$0xf]
        %v2680 = vld [vmem:[%s5 + $0x28] sm:$0xf]
        %v2681 = vld [vmem:[%s5 + $0x2c] sm:$0xf]
        %v2706 = vunpack.c.l.b16 %v2646
        %v2707 = vunpack.c.l.b16 %v2647
        %v2708 = vunpack.c.l.b16 %v2648
        %v2709 = vunpack.c.l.b16 %v2649
        %v2710 = vunpack.c.l.b16 %v2650
        %v2711 = vunpack.c.l.b16 %v2651
        %v2712 = vunpack.c.l.b16 %v2652
        %v2713 = vunpack.c.l.b16 %v2653
        %v2714 = vunpack.c.l.b16 %v2654
        %v2715 = vunpack.c.l.b16 %v2655
        %v2716 = vunpack.c.l.b16 %v2656
        %v2717 = vunpack.c.l.b16 %v2657
        %v2718 = vunpack.c.l.b16 %v2658
        %v2719 = vunpack.c.l.b16 %v2659
        %v2720 = vunpack.c.l.b16 %v2660
        %v2721 = vunpack.c.l.b16 %v2661
        %v2722 = vunpack.c.l.b16 %v2662
        %v2723 = vunpack.c.l.b16 %v2663
        %v2724 = vunpack.c.l.b16 %v2664
        %v2725 = vunpack.c.l.b16 %v2665
        %v2726 = vunpack.c.l.b16 %v2666
        %v2727 = vunpack.c.l.b16 %v2667
        %v2728 = vunpack.c.l.b16 %v2668
        %v2729 = vunpack.c.l.b16 %v2669
        %v2730 = vpack.c.b16 %v2707, %v2706
        %v2731 = vpack.c.b16 %v2709, %v2708
        %v2732 = vpack.c.b16 %v2711, %v2710
        %v2733 = vpack.c.b16 %v2713, %v2712
        %v2734 = vpack.c.b16 %v2715, %v2714
        %v2735 = vpack.c.b16 %v2717, %v2716
        %v2736 = vpack.c.b16 %v2719, %v2718
        %v2737 = vpack.c.b16 %v2721, %v2720
        %v2738 = vpack.c.b16 %v2723, %v2722
        %v2739 = vpack.c.b16 %v2725, %v2724
        %v2740 = vpack.c.b16 %v2727, %v2726
        %v2741 = vpack.c.b16 %v2729, %v2728
        %v2754 = vunpack.c.l.b16 %v2670
        %v2755 = vunpack.c.l.b16 %v2671
        %v2756 = vunpack.c.l.b16 %v2672
        %v2757 = vunpack.c.l.b16 %v2673
        %v2758 = vunpack.c.l.b16 %v2674
        %v2759 = vunpack.c.l.b16 %v2675
        %v2760 = vunpack.c.l.b16 %v2676
        %v2761 = vunpack.c.l.b16 %v2677
        %v2762 = vunpack.c.l.b16 %v2678
        %v2763 = vunpack.c.l.b16 %v2679
        %v2764 = vunpack.c.l.b16 %v2680
        %v2765 = vunpack.c.l.b16 %v2681
        %v2766 = vpack.c.b16 %v2755, %v2754
        %v2767 = vpack.c.b16 %v2757, %v2756
        %v2768 = vpack.c.b16 %v2759, %v2758
        %v2769 = vpack.c.b16 %v2761, %v2760
        %v2770 = vpack.c.b16 %v2763, %v2762
        %v2771 = vpack.c.b16 %v2765, %v2764
        %v2779 = vsel %vm1362, %v2730, 0
        %v2782 = vsel %vm1362, %v2731, 0
        %v2785 = vsel %vm1362, %v2732, 0
        %v2788 = vsel %vm1362, %v2733, 0
        %v2791 = vsel %vm1362, %v2734, 0
        %v2794 = vsel %vm1362, %v2735, 0
        %v2797 = vsel %vm1362, %v2736, 0
        %v2800 = vsel %vm1362, %v2737, 0
        %v2803 = vsel %vm1362, %v2738, 0
        %v2806 = vsel %vm1362, %v2739, 0
        %v2809 = vsel %vm1362, %v2740, 0
        %v2812 = vsel %vm1362, %v2741, 0
        %2814 = vmatpush.bf16.msra.mxu0 0
        %2815 = vmatpush.bf16.msra.mxu0 0
        %2816 = vmatpush.bf16.msra.mxu0 %v2771
        %2817 = vmatpush.bf16.msra.mxu0 %v2770
        %2818 = vmatpush.bf16.msra.mxu0 %v2769
        %2819 = vmatpush.bf16.msra.mxu0 %v2768
        %2820 = vmatpush.bf16.msra.mxu0 %v2767
        %2821 = vmatpush.bf16.msra.mxu0 %v2766
        %2822 = vmatmul.bf16.gmra.mxu0 %v2779
        %v2823 = vpop.f32.mrf.mxu0
        %v2824 = vadd.f32 0.0, %v2823
        %v2825 = vpop.f32.mrf.mxu0
        %v2826 = vadd.f32 0.0, %v2825
        %2827 = vmatmul.bf16.gmra.mxu0 %v2782
        %v2828 = vpop.f32.mrf.mxu0
        %v2829 = vadd.f32 0.0, %v2828
        %v2830 = vpop.f32.mrf.mxu0
        %v2831 = vadd.f32 0.0, %v2830
        %2832 = vmatmul.bf16.gmra.mxu0 %v2785
        %v2833 = vpop.f32.mrf.mxu0
        %v2834 = vadd.f32 0.0, %v2833
        %v2835 = vpop.f32.mrf.mxu0
        %v2836 = vadd.f32 0.0, %v2835
        %2837 = vmatmul.bf16.gmra.mxu0 %v2788
        %v2838 = vpop.f32.mrf.mxu0
        %v2839 = vadd.f32 0.0, %v2838
        %v2840 = vpop.f32.mrf.mxu0
        %v2841 = vadd.f32 0.0, %v2840
        %2842 = vmatmul.bf16.gmra.mxu0 %v2791
        %v2843 = vpop.f32.mrf.mxu0
        %v2844 = vadd.f32 0.0, %v2843
        %v2845 = vpop.f32.mrf.mxu0
        %v2846 = vadd.f32 0.0, %v2845
        %2847 = vmatmul.bf16.gmra.mxu0 %v2794
        %v2848 = vpop.f32.mrf.mxu0
        %v2849 = vadd.f32 0.0, %v2848
        %v2850 = vpop.f32.mrf.mxu0
        %v2851 = vadd.f32 0.0, %v2850
        %2852 = vmatmul.bf16.gmra.mxu0 %v2797
        %v2853 = vpop.f32.mrf.mxu0
        %v2854 = vadd.f32 0.0, %v2853
        %v2855 = vpop.f32.mrf.mxu0
        %v2856 = vadd.f32 0.0, %v2855
        %2857 = vmatmul.bf16.gmra.mxu0 %v2800
        %v2858 = vpop.f32.mrf.mxu0
        %v2859 = vadd.f32 0.0, %v2858
        %v2860 = vpop.f32.mrf.mxu0
        %v2861 = vadd.f32 0.0, %v2860
        %2862 = vmatmul.bf16.gmra.mxu0 %v2803
        %v2863 = vpop.f32.mrf.mxu0
        %v2864 = vadd.f32 0.0, %v2863
        %v2865 = vpop.f32.mrf.mxu0
        %v2866 = vadd.f32 0.0, %v2865
        %2867 = vmatmul.bf16.gmra.mxu0 %v2806
        %v2868 = vpop.f32.mrf.mxu0
        %v2869 = vadd.f32 0.0, %v2868
        %v2870 = vpop.f32.mrf.mxu0
        %v2871 = vadd.f32 0.0, %v2870
        %2872 = vmatmul.bf16.gmra.mxu0 %v2809
        %v2873 = vpop.f32.mrf.mxu0
        %v2874 = vadd.f32 0.0, %v2873
        %v2875 = vpop.f32.mrf.mxu0
        %v2876 = vadd.f32 0.0, %v2875
        %2877 = vmatmul.bf16.gmra.mxu0 %v2812
        %v2878 = vpop.f32.mrf.mxu0
        %v2879 = vadd.f32 0.0, %v2878
        %v2880 = vpop.f32.mrf.mxu0
        %v2881 = vadd.f32 0.0, %v2880
        %2882 = vdwg.mxu0
        %v2883 = vadd.f32 %v2644, %v2824
        %v2884 = vadd.f32 %v2644, %v2826
        %v2885 = vadd.f32 %v2644, %v2829
        %v2886 = vadd.f32 %v2644, %v2831
        %v2887 = vadd.f32 %v2644, %v2834
        %v2888 = vadd.f32 %v2644, %v2836
        %v2889 = vadd.f32 %v2644, %v2839
        %v2890 = vadd.f32 %v2644, %v2841
        %v2891 = vadd.f32 %v2644, %v2844
        %v2892 = vadd.f32 %v2644, %v2846
        %v2893 = vadd.f32 %v2644, %v2849
        %v2894 = vadd.f32 %v2644, %v2851
        %v2895 = vadd.f32 %v2644, %v2854
        %v2896 = vadd.f32 %v2644, %v2856
        %v2897 = vadd.f32 %v2644, %v2859
        %v2898 = vadd.f32 %v2644, %v2861
        %v2899 = vadd.f32 %v2644, %v2864
        %v2900 = vadd.f32 %v2644, %v2866
        %v2901 = vadd.f32 %v2644, %v2869
        %v2902 = vadd.f32 %v2644, %v2871
        %v2903 = vadd.f32 %v2644, %v2874
        %v2904 = vadd.f32 %v2644, %v2876
        %v2905 = vadd.f32 %v2644, %v2879
        %v2906 = vadd.f32 %v2644, %v2881
        %v2907 = vld [vmem:[%s1512] sm:$0xf]
        %v2908 = vld [vmem:[%s1512 + $0x4] sm:$0xf]
        %v2909 = vld [vmem:[%s1512 + $0x8] sm:$0xf]
        %v2910 = vld [vmem:[%s1512 + $0xc] sm:$0xf]
        %v2911 = vld [vmem:[%s1512 + $0x10] sm:$0xf]
        %v2912 = vld [vmem:[%s1512 + $0x14] sm:$0xf]
        %v2913 = vld [vmem:[%s1512 + $0x18] sm:$0xf]
        %v2914 = vld [vmem:[%s1512 + $0x1c] sm:$0xf]
        %v2915 = vld [vmem:[%s1512 + $0x20] sm:$0xf]
        %v2916 = vld [vmem:[%s1512 + $0x24] sm:$0xf]
        %v2917 = vld [vmem:[%s1512 + $0x28] sm:$0xf]
        %v2918 = vld [vmem:[%s1512 + $0x2c] sm:$0xf]
        %v2919 = vld [vmem:[%s1512 + $0x30] sm:$0xf]
        %v2920 = vld [vmem:[%s1512 + $0x34] sm:$0xf]
        %v2921 = vld [vmem:[%s1512 + $0x38] sm:$0xf]
        %v2922 = vld [vmem:[%s1512 + $0x3c] sm:$0xf]
        %v2923 = vld [vmem:[%s1512 + $0x40] sm:$0xf]
        %v2924 = vld [vmem:[%s1512 + $0x44] sm:$0xf]
        %v2925 = vld [vmem:[%s1512 + $0x48] sm:$0xf]
        %v2926 = vld [vmem:[%s1512 + $0x4c] sm:$0xf]
        %v2927 = vld [vmem:[%s1512 + $0x50] sm:$0xf]
        %v2928 = vld [vmem:[%s1512 + $0x54] sm:$0xf]
        %v2929 = vld [vmem:[%s1512 + $0x58] sm:$0xf]
        %v2930 = vld [vmem:[%s1512 + $0x5c] sm:$0xf]
        %s2931 = scalar_lea.vmem %s5, 48
        %v2932 = vld [vmem:[%s2931] sm:$0xf]
        %v2933 = vld [vmem:[%s2931 + $0x4] sm:$0xf]
        %v2934 = vld [vmem:[%s2931 + $0x8] sm:$0xf]
        %v2935 = vld [vmem:[%s2931 + $0xc] sm:$0xf]
        %v2936 = vld [vmem:[%s2931 + $0x10] sm:$0xf]
        %v2937 = vld [vmem:[%s2931 + $0x14] sm:$0xf]
        %v2938 = vld [vmem:[%s2931 + $0x18] sm:$0xf]
        %v2939 = vld [vmem:[%s2931 + $0x1c] sm:$0xf]
        %v2940 = vld [vmem:[%s2931 + $0x20] sm:$0xf]
        %v2941 = vld [vmem:[%s2931 + $0x24] sm:$0xf]
        %v2942 = vld [vmem:[%s2931 + $0x28] sm:$0xf]
        %v2943 = vld [vmem:[%s2931 + $0x2c] sm:$0xf]
        %v2968 = vunpack.c.l.b16 %v2907
        %v2969 = vunpack.c.l.b16 %v2908
        %v2970 = vunpack.c.l.b16 %v2909
        %v2971 = vunpack.c.l.b16 %v2910
        %v2972 = vunpack.c.l.b16 %v2911
        %v2973 = vunpack.c.l.b16 %v2912
        %v2974 = vunpack.c.l.b16 %v2913
        %v2975 = vunpack.c.l.b16 %v2914
        %v2976 = vunpack.c.l.b16 %v2915
        %v2977 = vunpack.c.l.b16 %v2916
        %v2978 = vunpack.c.l.b16 %v2917
        %v2979 = vunpack.c.l.b16 %v2918
        %v2980 = vunpack.c.l.b16 %v2919
        %v2981 = vunpack.c.l.b16 %v2920
        %v2982 = vunpack.c.l.b16 %v2921
        %v2983 = vunpack.c.l.b16 %v2922
        %v2984 = vunpack.c.l.b16 %v2923
        %v2985 = vunpack.c.l.b16 %v2924
        %v2986 = vunpack.c.l.b16 %v2925
        %v2987 = vunpack.c.l.b16 %v2926
        %v2988 = vunpack.c.l.b16 %v2927
        %v2989 = vunpack.c.l.b16 %v2928
        %v2990 = vunpack.c.l.b16 %v2929
        %v2991 = vunpack.c.l.b16 %v2930
        %v2992 = vpack.c.b16 %v2969, %v2968
        %v2993 = vpack.c.b16 %v2971, %v2970
        %v2994 = vpack.c.b16 %v2973, %v2972
        %v2995 = vpack.c.b16 %v2975, %v2974
        %v2996 = vpack.c.b16 %v2977, %v2976
        %v2997 = vpack.c.b16 %v2979, %v2978
        %v2998 = vpack.c.b16 %v2981, %v2980
        %v2999 = vpack.c.b16 %v2983, %v2982
        %v3000 = vpack.c.b16 %v2985, %v2984
        %v3001 = vpack.c.b16 %v2987, %v2986
        %v3002 = vpack.c.b16 %v2989, %v2988
        %v3003 = vpack.c.b16 %v2991, %v2990
        %v3016 = vunpack.c.l.b16 %v2932
        %v3017 = vunpack.c.l.b16 %v2933
        %v3018 = vunpack.c.l.b16 %v2934
        %v3019 = vunpack.c.l.b16 %v2935
        %v3020 = vunpack.c.l.b16 %v2936
        %v3021 = vunpack.c.l.b16 %v2937
        %v3022 = vunpack.c.l.b16 %v2938
        %v3023 = vunpack.c.l.b16 %v2939
        %v3024 = vunpack.c.l.b16 %v2940
        %v3025 = vunpack.c.l.b16 %v2941
        %v3026 = vunpack.c.l.b16 %v2942
        %v3027 = vunpack.c.l.b16 %v2943
        %v3028 = vpack.c.b16 %v3017, %v3016
        %v3029 = vpack.c.b16 %v3019, %v3018
        %v3030 = vpack.c.b16 %v3021, %v3020
        %v3031 = vpack.c.b16 %v3023, %v3022
        %v3032 = vpack.c.b16 %v3025, %v3024
        %v3033 = vpack.c.b16 %v3027, %v3026
        %v3041 = vsel %vm1362, %v2992, 0
        %v3044 = vsel %vm1362, %v2993, 0
        %v3047 = vsel %vm1362, %v2994, 0
        %v3050 = vsel %vm1362, %v2995, 0
        %v3053 = vsel %vm1362, %v2996, 0
        %v3056 = vsel %vm1362, %v2997, 0
        %v3059 = vsel %vm1362, %v2998, 0
        %v3062 = vsel %vm1362, %v2999, 0
        %v3065 = vsel %vm1362, %v3000, 0
        %v3068 = vsel %vm1362, %v3001, 0
        %v3071 = vsel %vm1362, %v3002, 0
        %v3074 = vsel %vm1362, %v3003, 0
        %3076 = vmatpush.bf16.msra.mxu0 0
        %3077 = vmatpush.bf16.msra.mxu0 0
        %3078 = vmatpush.bf16.msra.mxu0 %v3033
        %3079 = vmatpush.bf16.msra.mxu0 %v3032
        %3080 = vmatpush.bf16.msra.mxu0 %v3031
        %3081 = vmatpush.bf16.msra.mxu0 %v3030
        %3082 = vmatpush.bf16.msra.mxu0 %v3029
        %3083 = vmatpush.bf16.msra.mxu0 %v3028
        %3084 = vmatmul.bf16.gmra.mxu0 %v3041
        %v3085 = vpop.f32.mrf.mxu0
        %v3086 = vadd.f32 0.0, %v3085
        %v3087 = vpop.f32.mrf.mxu0
        %v3088 = vadd.f32 0.0, %v3087
        %3089 = vmatmul.bf16.gmra.mxu0 %v3044
        %v3090 = vpop.f32.mrf.mxu0
        %v3091 = vadd.f32 0.0, %v3090
        %v3092 = vpop.f32.mrf.mxu0
        %v3093 = vadd.f32 0.0, %v3092
        %3094 = vmatmul.bf16.gmra.mxu0 %v3047
        %v3095 = vpop.f32.mrf.mxu0
        %v3096 = vadd.f32 0.0, %v3095
        %v3097 = vpop.f32.mrf.mxu0
        %v3098 = vadd.f32 0.0, %v3097
        %3099 = vmatmul.bf16.gmra.mxu0 %v3050
        %v3100 = vpop.f32.mrf.mxu0
        %v3101 = vadd.f32 0.0, %v3100
        %v3102 = vpop.f32.mrf.mxu0
        %v3103 = vadd.f32 0.0, %v3102
        %3104 = vmatmul.bf16.gmra.mxu0 %v3053
        %v3105 = vpop.f32.mrf.mxu0
        %v3106 = vadd.f32 0.0, %v3105
        %v3107 = vpop.f32.mrf.mxu0
        %v3108 = vadd.f32 0.0, %v3107
        %3109 = vmatmul.bf16.gmra.mxu0 %v3056
        %v3110 = vpop.f32.mrf.mxu0
        %v3111 = vadd.f32 0.0, %v3110
        %v3112 = vpop.f32.mrf.mxu0
        %v3113 = vadd.f32 0.0, %v3112
        %3114 = vmatmul.bf16.gmra.mxu0 %v3059
        %v3115 = vpop.f32.mrf.mxu0
        %v3116 = vadd.f32 0.0, %v3115
        %v3117 = vpop.f32.mrf.mxu0
        %v3118 = vadd.f32 0.0, %v3117
        %3119 = vmatmul.bf16.gmra.mxu0 %v3062
        %v3120 = vpop.f32.mrf.mxu0
        %v3121 = vadd.f32 0.0, %v3120
        %v3122 = vpop.f32.mrf.mxu0
        %v3123 = vadd.f32 0.0, %v3122
        %3124 = vmatmul.bf16.gmra.mxu0 %v3065
        %v3125 = vpop.f32.mrf.mxu0
        %v3126 = vadd.f32 0.0, %v3125
        %v3127 = vpop.f32.mrf.mxu0
        %v3128 = vadd.f32 0.0, %v3127
        %3129 = vmatmul.bf16.gmra.mxu0 %v3068
        %v3130 = vpop.f32.mrf.mxu0
        %v3131 = vadd.f32 0.0, %v3130
        %v3132 = vpop.f32.mrf.mxu0
        %v3133 = vadd.f32 0.0, %v3132
        %3134 = vmatmul.bf16.gmra.mxu0 %v3071
        %v3135 = vpop.f32.mrf.mxu0
        %v3136 = vadd.f32 0.0, %v3135
        %v3137 = vpop.f32.mrf.mxu0
        %v3138 = vadd.f32 0.0, %v3137
        %3139 = vmatmul.bf16.gmra.mxu0 %v3074
        %v3140 = vpop.f32.mrf.mxu0
        %v3141 = vadd.f32 0.0, %v3140
        %v3142 = vpop.f32.mrf.mxu0
        %v3143 = vadd.f32 0.0, %v3142
        %3144 = vdwg.mxu0
        %v3145 = vadd.f32 %v2883, %v3086
        %v3146 = vadd.f32 %v2884, %v3088
        %v3147 = vadd.f32 %v2885, %v3091
        %v3148 = vadd.f32 %v2886, %v3093
        %v3149 = vadd.f32 %v2887, %v3096
        %v3150 = vadd.f32 %v2888, %v3098
        %v3151 = vadd.f32 %v2889, %v3101
        %v3152 = vadd.f32 %v2890, %v3103
        %v3153 = vadd.f32 %v2891, %v3106
        %v3154 = vadd.f32 %v2892, %v3108
        %v3155 = vadd.f32 %v2893, %v3111
        %v3156 = vadd.f32 %v2894, %v3113
        %v3157 = vadd.f32 %v2895, %v3116
        %v3158 = vadd.f32 %v2896, %v3118
        %v3159 = vadd.f32 %v2897, %v3121
        %v3160 = vadd.f32 %v2898, %v3123
        %v3161 = vadd.f32 %v2899, %v3126
        %v3162 = vadd.f32 %v2900, %v3128
        %v3163 = vadd.f32 %v2901, %v3131
        %v3164 = vadd.f32 %v2902, %v3133
        %v3165 = vadd.f32 %v2903, %v3136
        %v3166 = vadd.f32 %v2904, %v3138
        %v3167 = vadd.f32 %v2905, %v3141
        %v3168 = vadd.f32 %v2906, %v3143
        %v3169 = vld [vmem:[%s1809] sm:$0xf]
        %v3170 = vld [vmem:[%s1809 + $0x4] sm:$0xf]
        %v3171 = vld [vmem:[%s1809 + $0x8] sm:$0xf]
        %v3172 = vld [vmem:[%s1809 + $0xc] sm:$0xf]
        %v3173 = vld [vmem:[%s1809 + $0x10] sm:$0xf]
        %v3174 = vld [vmem:[%s1809 + $0x14] sm:$0xf]
        %v3175 = vld [vmem:[%s1809 + $0x18] sm:$0xf]
        %v3176 = vld [vmem:[%s1809 + $0x1c] sm:$0xf]
        %v3177 = vld [vmem:[%s1809 + $0x20] sm:$0xf]
        %v3178 = vld [vmem:[%s1809 + $0x24] sm:$0xf]
        %v3179 = vld [vmem:[%s1809 + $0x28] sm:$0xf]
        %v3180 = vld [vmem:[%s1809 + $0x2c] sm:$0xf]
        %v3181 = vld [vmem:[%s1809 + $0x30] sm:$0xf]
        %v3182 = vld [vmem:[%s1809 + $0x34] sm:$0xf]
        %v3183 = vld [vmem:[%s1809 + $0x38] sm:$0xf]
        %v3184 = vld [vmem:[%s1809 + $0x3c] sm:$0xf]
        %v3185 = vld [vmem:[%s1809 + $0x40] sm:$0xf]
        %v3186 = vld [vmem:[%s1809 + $0x44] sm:$0xf]
        %v3187 = vld [vmem:[%s1809 + $0x48] sm:$0xf]
        %v3188 = vld [vmem:[%s1809 + $0x4c] sm:$0xf]
        %v3189 = vld [vmem:[%s1809 + $0x50] sm:$0xf]
        %v3190 = vld [vmem:[%s1809 + $0x54] sm:$0xf]
        %v3191 = vld [vmem:[%s1809 + $0x58] sm:$0xf]
        %v3192 = vld [vmem:[%s1809 + $0x5c] sm:$0xf]
        %s3193 = scalar_lea.vmem %s5, 96
        %v3194 = vld [vmem:[%s3193] sm:$0xf]
        %v3195 = vld [vmem:[%s3193 + $0x4] sm:$0xf]
        %v3196 = vld [vmem:[%s3193 + $0x8] sm:$0xf]
        %v3197 = vld [vmem:[%s3193 + $0xc] sm:$0xf]
        %v3198 = vld [vmem:[%s3193 + $0x10] sm:$0xf]
        %v3199 = vld [vmem:[%s3193 + $0x14] sm:$0xf]
        %v3200 = vld [vmem:[%s3193 + $0x18] sm:$0xf]
        %v3201 = vld [vmem:[%s3193 + $0x1c] sm:$0xf]
        %v3202 = vld [vmem:[%s3193 + $0x20] sm:$0xf]
        %v3203 = vld [vmem:[%s3193 + $0x24] sm:$0xf]
        %v3204 = vld [vmem:[%s3193 + $0x28] sm:$0xf]
        %v3205 = vld [vmem:[%s3193 + $0x2c] sm:$0xf]
        %v3230 = vunpack.c.l.b16 %v3169
        %v3231 = vunpack.c.l.b16 %v3170
        %v3232 = vunpack.c.l.b16 %v3171
        %v3233 = vunpack.c.l.b16 %v3172
        %v3234 = vunpack.c.l.b16 %v3173
        %v3235 = vunpack.c.l.b16 %v3174
        %v3236 = vunpack.c.l.b16 %v3175
        %v3237 = vunpack.c.l.b16 %v3176
        %v3238 = vunpack.c.l.b16 %v3177
        %v3239 = vunpack.c.l.b16 %v3178
        %v3240 = vunpack.c.l.b16 %v3179
        %v3241 = vunpack.c.l.b16 %v3180
        %v3242 = vunpack.c.l.b16 %v3181
        %v3243 = vunpack.c.l.b16 %v3182
        %v3244 = vunpack.c.l.b16 %v3183
        %v3245 = vunpack.c.l.b16 %v3184
        %v3246 = vunpack.c.l.b16 %v3185
        %v3247 = vunpack.c.l.b16 %v3186
        %v3248 = vunpack.c.l.b16 %v3187
        %v3249 = vunpack.c.l.b16 %v3188
        %v3250 = vunpack.c.l.b16 %v3189
        %v3251 = vunpack.c.l.b16 %v3190
        %v3252 = vunpack.c.l.b16 %v3191
        %v3253 = vunpack.c.l.b16 %v3192
        %v3254 = vpack.c.b16 %v3231, %v3230
        %v3255 = vpack.c.b16 %v3233, %v3232
        %v3256 = vpack.c.b16 %v3235, %v3234
        %v3257 = vpack.c.b16 %v3237, %v3236
        %v3258 = vpack.c.b16 %v3239, %v3238
        %v3259 = vpack.c.b16 %v3241, %v3240
        %v3260 = vpack.c.b16 %v3243, %v3242
        %v3261 = vpack.c.b16 %v3245, %v3244
        %v3262 = vpack.c.b16 %v3247, %v3246
        %v3263 = vpack.c.b16 %v3249, %v3248
        %v3264 = vpack.c.b16 %v3251, %v3250
        %v3265 = vpack.c.b16 %v3253, %v3252
        %v3278 = vunpack.c.l.b16 %v3194
        %v3279 = vunpack.c.l.b16 %v3195
        %v3280 = vunpack.c.l.b16 %v3196
        %v3281 = vunpack.c.l.b16 %v3197
        %v3282 = vunpack.c.l.b16 %v3198
        %v3283 = vunpack.c.l.b16 %v3199
        %v3284 = vunpack.c.l.b16 %v3200
        %v3285 = vunpack.c.l.b16 %v3201
        %v3286 = vunpack.c.l.b16 %v3202
        %v3287 = vunpack.c.l.b16 %v3203
        %v3288 = vunpack.c.l.b16 %v3204
        %v3289 = vunpack.c.l.b16 %v3205
        %v3290 = vpack.c.b16 %v3279, %v3278
        %v3291 = vpack.c.b16 %v3281, %v3280
        %v3292 = vpack.c.b16 %v3283, %v3282
        %v3293 = vpack.c.b16 %v3285, %v3284
        %v3294 = vpack.c.b16 %v3287, %v3286
        %v3295 = vpack.c.b16 %v3289, %v3288
        %v3303 = vsel %vm1362, %v3254, 0
        %v3306 = vsel %vm1362, %v3255, 0
        %v3309 = vsel %vm1362, %v3256, 0
        %v3312 = vsel %vm1362, %v3257, 0
        %v3315 = vsel %vm1362, %v3258, 0
        %v3318 = vsel %vm1362, %v3259, 0
        %v3321 = vsel %vm1362, %v3260, 0
        %v3324 = vsel %vm1362, %v3261, 0
        %v3327 = vsel %vm1362, %v3262, 0
        %v3330 = vsel %vm1362, %v3263, 0
        %v3333 = vsel %vm1362, %v3264, 0
        %v3336 = vsel %vm1362, %v3265, 0
        %3338 = vmatpush.bf16.msra.mxu0 0
        %3339 = vmatpush.bf16.msra.mxu0 0
        %3340 = vmatpush.bf16.msra.mxu0 %v3295
        %3341 = vmatpush.bf16.msra.mxu0 %v3294
        %3342 = vmatpush.bf16.msra.mxu0 %v3293
        %3343 = vmatpush.bf16.msra.mxu0 %v3292
        %3344 = vmatpush.bf16.msra.mxu0 %v3291
        %3345 = vmatpush.bf16.msra.mxu0 %v3290
        %3346 = vmatmul.bf16.gmra.mxu0 %v3303
        %v3347 = vpop.f32.mrf.mxu0
        %v3348 = vadd.f32 0.0, %v3347
        %v3349 = vpop.f32.mrf.mxu0
        %v3350 = vadd.f32 0.0, %v3349
        %3351 = vmatmul.bf16.gmra.mxu0 %v3306
        %v3352 = vpop.f32.mrf.mxu0
        %v3353 = vadd.f32 0.0, %v3352
        %v3354 = vpop.f32.mrf.mxu0
        %v3355 = vadd.f32 0.0, %v3354
        %3356 = vmatmul.bf16.gmra.mxu0 %v3309
        %v3357 = vpop.f32.mrf.mxu0
        %v3358 = vadd.f32 0.0, %v3357
        %v3359 = vpop.f32.mrf.mxu0
        %v3360 = vadd.f32 0.0, %v3359
        %3361 = vmatmul.bf16.gmra.mxu0 %v3312
        %v3362 = vpop.f32.mrf.mxu0
        %v3363 = vadd.f32 0.0, %v3362
        %v3364 = vpop.f32.mrf.mxu0
        %v3365 = vadd.f32 0.0, %v3364
        %3366 = vmatmul.bf16.gmra.mxu0 %v3315
        %v3367 = vpop.f32.mrf.mxu0
        %v3368 = vadd.f32 0.0, %v3367
        %v3369 = vpop.f32.mrf.mxu0
        %v3370 = vadd.f32 0.0, %v3369
        %3371 = vmatmul.bf16.gmra.mxu0 %v3318
        %v3372 = vpop.f32.mrf.mxu0
        %v3373 = vadd.f32 0.0, %v3372
        %v3374 = vpop.f32.mrf.mxu0
        %v3375 = vadd.f32 0.0, %v3374
        %3376 = vmatmul.bf16.gmra.mxu0 %v3321
        %v3377 = vpop.f32.mrf.mxu0
        %v3378 = vadd.f32 0.0, %v3377
        %v3379 = vpop.f32.mrf.mxu0
        %v3380 = vadd.f32 0.0, %v3379
        %3381 = vmatmul.bf16.gmra.mxu0 %v3324
        %v3382 = vpop.f32.mrf.mxu0
        %v3383 = vadd.f32 0.0, %v3382
        %v3384 = vpop.f32.mrf.mxu0
        %v3385 = vadd.f32 0.0, %v3384
        %3386 = vmatmul.bf16.gmra.mxu0 %v3327
        %v3387 = vpop.f32.mrf.mxu0
        %v3388 = vadd.f32 0.0, %v3387
        %v3389 = vpop.f32.mrf.mxu0
        %v3390 = vadd.f32 0.0, %v3389
        %3391 = vmatmul.bf16.gmra.mxu0 %v3330
        %v3392 = vpop.f32.mrf.mxu0
        %v3393 = vadd.f32 0.0, %v3392
        %v3394 = vpop.f32.mrf.mxu0
        %v3395 = vadd.f32 0.0, %v3394
        %3396 = vmatmul.bf16.gmra.mxu0 %v3333
        %v3397 = vpop.f32.mrf.mxu0
        %v3398 = vadd.f32 0.0, %v3397
        %v3399 = vpop.f32.mrf.mxu0
        %v3400 = vadd.f32 0.0, %v3399
        %3401 = vmatmul.bf16.gmra.mxu0 %v3336
        %v3402 = vpop.f32.mrf.mxu0
        %v3403 = vadd.f32 0.0, %v3402
        %v3404 = vpop.f32.mrf.mxu0
        %v3405 = vadd.f32 0.0, %v3404
        %3406 = vdwg.mxu0
        %v3407 = vadd.f32 %v3145, %v3348
        %v3408 = vadd.f32 %v3146, %v3350
        %v3409 = vadd.f32 %v3147, %v3353
        %v3410 = vadd.f32 %v3148, %v3355
        %v3411 = vadd.f32 %v3149, %v3358
        %v3412 = vadd.f32 %v3150, %v3360
        %v3413 = vadd.f32 %v3151, %v3363
        %v3414 = vadd.f32 %v3152, %v3365
        %v3415 = vadd.f32 %v3153, %v3368
        %v3416 = vadd.f32 %v3154, %v3370
        %v3417 = vadd.f32 %v3155, %v3373
        %v3418 = vadd.f32 %v3156, %v3375
        %v3419 = vadd.f32 %v3157, %v3378
        %v3420 = vadd.f32 %v3158, %v3380
        %v3421 = vadd.f32 %v3159, %v3383
        %v3422 = vadd.f32 %v3160, %v3385
        %v3423 = vadd.f32 %v3161, %v3388
        %v3424 = vadd.f32 %v3162, %v3390
        %v3425 = vadd.f32 %v3163, %v3393
        %v3426 = vadd.f32 %v3164, %v3395
        %v3427 = vadd.f32 %v3165, %v3398
        %v3428 = vadd.f32 %v3166, %v3400
        %v3429 = vadd.f32 %v3167, %v3403
        %v3430 = vadd.f32 %v3168, %v3405
        %v3431 = vadd.f32 %v3407, %v623
        %v3432 = vadd.f32 %v3408, %v624
        %v3433 = vadd.f32 %v3409, %v625
        %v3434 = vadd.f32 %v3410, %v626
        %v3435 = vadd.f32 %v3411, %v647
        %v3436 = vadd.f32 %v3412, %v648
        %v3437 = vadd.f32 %v3413, %v649
        %v3438 = vadd.f32 %v3414, %v650
        %v3439 = vadd.f32 %v3415, %v651
        %v3440 = vadd.f32 %v3416, %v652
        %v3441 = vadd.f32 %v3417, %v653
        %v3442 = vadd.f32 %v3418, %v654
        %v3443 = vadd.f32 %v3419, %v655
        %v3444 = vadd.f32 %v3420, %v656
        %v3445 = vadd.f32 %v3421, %v657
        %v3446 = vadd.f32 %v3422, %v658
        %v3447 = vadd.f32 %v3423, %v659
        %v3448 = vadd.f32 %v3424, %v660
        %v3449 = vadd.f32 %v3425, %v661
        %v3450 = vadd.f32 %v3426, %v662
        %v3451 = vadd.f32 %v3427, %v639
        %v3452 = vadd.f32 %v3428, %v640
        %v3453 = vadd.f32 %v3429, %v641
        %v3454 = vadd.f32 %v3430, %v642
        %v3455 = vsel %vm2136, %v3431, 0.0
        %v3456 = vsel %vm2136, %v3432, 0.0
        %v3457 = vsel %vm2136, %v3433, 0.0
        %v3458 = vsel %vm2136, %v3434, 0.0
        %v3459 = vsel 1, %v3435, 0.0
        %v3460 = vsel 1, %v3436, 0.0
        %v3461 = vsel 1, %v3437, 0.0
        %v3462 = vsel 1, %v3438, 0.0
        %v3463 = vsel 1, %v3439, 0.0
        %v3464 = vsel 1, %v3440, 0.0
        %v3465 = vsel 1, %v3441, 0.0
        %v3466 = vsel 1, %v3442, 0.0
        %v3467 = vsel 1, %v3443, 0.0
        %v3468 = vsel 1, %v3444, 0.0
        %v3469 = vsel 1, %v3445, 0.0
        %v3470 = vsel 1, %v3446, 0.0
        %v3471 = vsel 1, %v3447, 0.0
        %v3472 = vsel 1, %v3448, 0.0
        %v3473 = vsel 1, %v3449, 0.0
        %v3474 = vsel 1, %v3450, 0.0
        %v3475 = vsel %vm2137, %v3451, 0.0
        %v3476 = vsel %vm2137, %v3452, 0.0
        %v3477 = vsel %vm2137, %v3453, 0.0
        %v3478 = vsel %vm2137, %v3454, 0.0
        %3479 = vst.msk [vmem:[%s544] sm:$0xff] %vm1081, %v3459
        %3480 = vst.msk [vmem:[%s544 + $0x8] sm:$0xff] %vm1081, %v3460
        %3481 = vst.msk [vmem:[%s544 + $0x10] sm:$0xff] %vm1081, %v3461
        %3482 = vst.msk [vmem:[%s544 + $0x18] sm:$0xff] %vm1081, %v3462
        %3483 = vst.msk [vmem:[%s544 + $0x20] sm:$0xff] %vm1081, %v3463
        %3484 = vst.msk [vmem:[%s544 + $0x28] sm:$0xff] %vm1081, %v3464
        %3485 = vst.msk [vmem:[%s544 + $0x30] sm:$0xff] %vm1081, %v3465
        %3486 = vst.msk [vmem:[%s544 + $0x38] sm:$0xff] %vm1081, %v3466
        %3487 = vst.msk [vmem:[%s544 + $0x40] sm:$0xff] %vm1081, %v3467
        %3488 = vst.msk [vmem:[%s544 + $0x48] sm:$0xff] %vm1081, %v3468
        %3489 = vst.msk [vmem:[%s544 + $0x50] sm:$0xff] %vm1081, %v3469
        %3490 = vst.msk [vmem:[%s544 + $0x58] sm:$0xff] %vm1081, %v3470
        %3491 = vst.msk [vmem:[%s544 + $0x60] sm:$0xff] %vm1081, %v3471
        %3492 = vst.msk [vmem:[%s544 + $0x68] sm:$0xff] %vm1081, %v3472
        %3493 = vst.msk [vmem:[%s544 + $0x70] sm:$0xff] %vm1081, %v3473
        %3494 = vst.msk [vmem:[%s544 + $0x78] sm:$0xff] %vm1081, %v3474
        %v3519 = vrot.slane %v3455, 7
        %v3520 = vrot.slane %v3456, 7
        %v3521 = vsel %vm695, %v3519, %v3520
        %v3522 = vrot.slane %v3457, 7
        %v3523 = vrot.slane %v3458, 7
        %v3524 = vsel %vm695, %v3522, %v3523
        %v3525 = vrot.slane %v3459, 7
        %v3526 = vrot.slane %v3460, 7
        %v3527 = vsel %vm695, %v3525, %v3526
        %v3528 = vrot.slane %v3461, 7
        %v3529 = vrot.slane %v3462, 7
        %v3530 = vsel %vm695, %v3528, %v3529
        %v3531 = vrot.slane %v3463, 7
        %v3532 = vrot.slane %v3464, 7
        %v3533 = vsel %vm695, %v3531, %v3532
        %v3534 = vrot.slane %v3465, 7
        %v3535 = vrot.slane %v3466, 7
        %v3536 = vsel %vm695, %v3534, %v3535
        %v3537 = vrot.slane %v3467, 7
        %v3538 = vrot.slane %v3468, 7
        %v3539 = vsel %vm695, %v3537, %v3538
        %v3540 = vrot.slane %v3469, 7
        %v3541 = vrot.slane %v3470, 7
        %v3542 = vsel %vm695, %v3540, %v3541
        %v3543 = vrot.slane %v3471, 7
        %v3544 = vrot.slane %v3472, 7
        %v3545 = vsel %vm695, %v3543, %v3544
        %v3546 = vrot.slane %v3473, 7
        %v3547 = vrot.slane %v3474, 7
        %v3548 = vsel %vm695, %v3546, %v3547
        %v3549 = vrot.slane %v3475, 7
        %v3550 = vrot.slane %v3476, 7
        %v3551 = vsel %vm695, %v3549, %v3550
        %v3552 = vrot.slane %v3477, 7
        %v3553 = vrot.slane %v3478, 7
        %v3554 = vsel %vm695, %v3552, %v3553
        %v3579 = vsel %vm695, 0.0, %v3519
        %v3580 = vsel %vm695, 0.0, %v3522
        %v3581 = vsel %vm695, 0.0, %v3525
        %v3582 = vsel %vm695, 0.0, %v3528
        %v3583 = vsel %vm695, 0.0, %v3531
        %v3584 = vsel %vm695, 0.0, %v3534
        %v3585 = vsel %vm695, 0.0, %v3537
        %v3586 = vsel %vm695, 0.0, %v3540
        %v3587 = vsel %vm695, 0.0, %v3543
        %v3588 = vsel %vm695, 0.0, %v3546
        %v3589 = vsel %vm695, 0.0, %v3549
        %v3590 = vsel %vm695, 0.0, %v3552
        %v3591 = vrot.slane %v3455, 1
        %v3592 = vrot.slane %v3456, 1
        %v3593 = vsel %vm792, %v3591, %v3592
        %v3594 = vrot.slane %v3457, 1
        %v3595 = vrot.slane %v3458, 1
        %v3596 = vsel %vm792, %v3594, %v3595
        %v3597 = vrot.slane %v3459, 1
        %v3598 = vrot.slane %v3460, 1
        %v3599 = vsel %vm792, %v3597, %v3598
        %v3600 = vrot.slane %v3461, 1
        %v3601 = vrot.slane %v3462, 1
        %v3602 = vsel %vm792, %v3600, %v3601
        %v3603 = vrot.slane %v3463, 1
        %v3604 = vrot.slane %v3464, 1
        %v3605 = vsel %vm792, %v3603, %v3604
        %v3606 = vrot.slane %v3465, 1
        %v3607 = vrot.slane %v3466, 1
        %v3608 = vsel %vm792, %v3606, %v3607
        %v3609 = vrot.slane %v3467, 1
        %v3610 = vrot.slane %v3468, 1
        %v3611 = vsel %vm792, %v3609, %v3610
        %v3612 = vrot.slane %v3469, 1
        %v3613 = vrot.slane %v3470, 1
        %v3614 = vsel %vm792, %v3612, %v3613
        %v3615 = vrot.slane %v3471, 1
        %v3616 = vrot.slane %v3472, 1
        %v3617 = vsel %vm792, %v3615, %v3616
        %v3618 = vrot.slane %v3473, 1
        %v3619 = vrot.slane %v3474, 1
        %v3620 = vsel %vm792, %v3618, %v3619
        %v3621 = vrot.slane %v3475, 1
        %v3622 = vrot.slane %v3476, 1
        %v3623 = vsel %vm792, %v3621, %v3622
        %v3624 = vrot.slane %v3477, 1
        %v3625 = vrot.slane %v3478, 1
        %v3626 = vsel %vm792, %v3624, %v3625
        %v3639 = vsel %vm792, %v3592, 0.0
        %v3640 = vsel %vm792, %v3595, 0.0
        %v3641 = vsel %vm792, %v3598, 0.0
        %v3642 = vsel %vm792, %v3601, 0.0
        %v3643 = vsel %vm792, %v3604, 0.0
        %v3644 = vsel %vm792, %v3607, 0.0
        %v3645 = vsel %vm792, %v3610, 0.0
        %v3646 = vsel %vm792, %v3613, 0.0
        %v3647 = vsel %vm792, %v3616, 0.0
        %v3648 = vsel %vm792, %v3619, 0.0
        %v3649 = vsel %vm792, %v3622, 0.0
        %v3650 = vsel %vm792, %v3625, 0.0
        %3651 = vrot.lane.b32.xlu0 %v3455, 32
        %v3652 = vpop.permute.xlu0 %3651
        %3653 = vrot.lane.b32.xlu0 %v3456, 32
        %v3654 = vpop.permute.xlu0 %3653
        %3655 = vrot.lane.b32.xlu0 %v3457, 32
        %v3656 = vpop.permute.xlu0 %3655
        %3657 = vrot.lane.b32.xlu0 %v3458, 32
        %v3658 = vpop.permute.xlu0 %3657
        %3659 = vrot.lane.b32.xlu0 %v3459, 32
        %v3660 = vpop.permute.xlu0 %3659
        %3661 = vrot.lane.b32.xlu0 %v3460, 32
        %v3662 = vpop.permute.xlu0 %3661
        %3663 = vrot.lane.b32.xlu0 %v3461, 32
        %v3664 = vpop.permute.xlu0 %3663
        %3665 = vrot.lane.b32.xlu0 %v3462, 32
        %v3666 = vpop.permute.xlu0 %3665
        %3667 = vrot.lane.b32.xlu0 %v3463, 32
        %v3668 = vpop.permute.xlu0 %3667
        %3669 = vrot.lane.b32.xlu0 %v3464, 32
        %v3670 = vpop.permute.xlu0 %3669
        %3671 = vrot.lane.b32.xlu0 %v3465, 32
        %v3672 = vpop.permute.xlu0 %3671
        %3673 = vrot.lane.b32.xlu0 %v3466, 32
        %v3674 = vpop.permute.xlu0 %3673
        %3675 = vrot.lane.b32.xlu0 %v3467, 32
        %v3676 = vpop.permute.xlu0 %3675
        %3677 = vrot.lane.b32.xlu0 %v3468, 32
        %v3678 = vpop.permute.xlu0 %3677
        %3679 = vrot.lane.b32.xlu0 %v3469, 32
        %v3680 = vpop.permute.xlu0 %3679
        %3681 = vrot.lane.b32.xlu0 %v3470, 32
        %v3682 = vpop.permute.xlu0 %3681
        %3683 = vrot.lane.b32.xlu0 %v3471, 32
        %v3684 = vpop.permute.xlu0 %3683
        %3685 = vrot.lane.b32.xlu0 %v3472, 32
        %v3686 = vpop.permute.xlu0 %3685
        %3687 = vrot.lane.b32.xlu0 %v3473, 32
        %v3688 = vpop.permute.xlu0 %3687
        %3689 = vrot.lane.b32.xlu0 %v3474, 32
        %v3690 = vpop.permute.xlu0 %3689
        %3691 = vrot.lane.b32.xlu0 %v3475, 32
        %v3692 = vpop.permute.xlu0 %3691
        %3693 = vrot.lane.b32.xlu0 %v3476, 32
        %v3694 = vpop.permute.xlu0 %3693
        %3695 = vrot.lane.b32.xlu0 %v3477, 32
        %v3696 = vpop.permute.xlu0 %3695
        %3697 = vrot.lane.b32.xlu0 %v3478, 32
        %v3698 = vpop.permute.xlu0 %3697
        %3735 = vrot.lane.b32.xlu0 %v3593, 64
        %v3736 = vpop.permute.xlu0 %3735
        %3737 = vrot.lane.b32.xlu0 %v3639, 64
        %v3738 = vpop.permute.xlu0 %3737
        %3739 = vrot.lane.b32.xlu0 %v3596, 64
        %v3740 = vpop.permute.xlu0 %3739
        %3741 = vrot.lane.b32.xlu0 %v3640, 64
        %v3742 = vpop.permute.xlu0 %3741
        %3743 = vrot.lane.b32.xlu0 %v3599, 64
        %v3744 = vpop.permute.xlu0 %3743
        %3745 = vrot.lane.b32.xlu0 %v3641, 64
        %v3746 = vpop.permute.xlu0 %3745
        %3747 = vrot.lane.b32.xlu0 %v3602, 64
        %v3748 = vpop.permute.xlu0 %3747
        %3749 = vrot.lane.b32.xlu0 %v3642, 64
        %v3750 = vpop.permute.xlu0 %3749
        %3751 = vrot.lane.b32.xlu0 %v3605, 64
        %v3752 = vpop.permute.xlu0 %3751
        %3753 = vrot.lane.b32.xlu0 %v3643, 64
        %v3754 = vpop.permute.xlu0 %3753
        %3755 = vrot.lane.b32.xlu0 %v3608, 64
        %v3756 = vpop.permute.xlu0 %3755
        %3757 = vrot.lane.b32.xlu0 %v3644, 64
        %v3758 = vpop.permute.xlu0 %3757
        %3759 = vrot.lane.b32.xlu0 %v3611, 64
        %v3760 = vpop.permute.xlu0 %3759
        %3761 = vrot.lane.b32.xlu0 %v3645, 64
        %v3762 = vpop.permute.xlu0 %3761
        %3763 = vrot.lane.b32.xlu0 %v3614, 64
        %v3764 = vpop.permute.xlu0 %3763
        %3765 = vrot.lane.b32.xlu0 %v3646, 64
        %v3766 = vpop.permute.xlu0 %3765
        %3767 = vrot.lane.b32.xlu0 %v3617, 64
        %v3768 = vpop.permute.xlu0 %3767
        %3769 = vrot.lane.b32.xlu0 %v3647, 64
        %v3770 = vpop.permute.xlu0 %3769
        %3771 = vrot.lane.b32.xlu0 %v3620, 64
        %v3772 = vpop.permute.xlu0 %3771
        %3773 = vrot.lane.b32.xlu0 %v3648, 64
        %v3774 = vpop.permute.xlu0 %3773
        %3775 = vrot.lane.b32.xlu0 %v3623, 64
        %v3776 = vpop.permute.xlu0 %3775
        %3777 = vrot.lane.b32.xlu0 %v3649, 64
        %v3778 = vpop.permute.xlu0 %3777
        %3779 = vrot.lane.b32.xlu0 %v3626, 64
        %v3780 = vpop.permute.xlu0 %3779
        %3781 = vrot.lane.b32.xlu0 %v3650, 64
        %v3782 = vpop.permute.xlu0 %3781
        %v3807 = vsel %vm1081, %v3579, %v3652
        %v3808 = vsel %vm1081, %v3521, %v3654
        %v3809 = vsel %vm1081, %v3580, %v3656
        %v3810 = vsel %vm1081, %v3524, %v3658
        %v3811 = vsel %vm1081, %v3581, %v3660
        %v3812 = vsel %vm1081, %v3527, %v3662
        %v3813 = vsel %vm1081, %v3582, %v3664
        %v3814 = vsel %vm1081, %v3530, %v3666
        %v3815 = vsel %vm1081, %v3583, %v3668
        %v3816 = vsel %vm1081, %v3533, %v3670
        %v3817 = vsel %vm1081, %v3584, %v3672
        %v3818 = vsel %vm1081, %v3536, %v3674
        %v3819 = vsel %vm1081, %v3585, %v3676
        %v3820 = vsel %vm1081, %v3539, %v3678
        %v3821 = vsel %vm1081, %v3586, %v3680
        %v3822 = vsel %vm1081, %v3542, %v3682
        %v3823 = vsel %vm1081, %v3587, %v3684
        %v3824 = vsel %vm1081, %v3545, %v3686
        %v3825 = vsel %vm1081, %v3588, %v3688
        %v3826 = vsel %vm1081, %v3548, %v3690
        %v3827 = vsel %vm1081, %v3589, %v3692
        %v3828 = vsel %vm1081, %v3551, %v3694
        %v3829 = vsel %vm1081, %v3590, %v3696
        %v3830 = vsel %vm1081, %v3554, %v3698
        %v3831 = vsel %vm1114, %v3807, %v3736
        %v3832 = vsel %vm1114, %v3808, %v3738
        %v3833 = vsel %vm1114, %v3809, %v3740
        %v3834 = vsel %vm1114, %v3810, %v3742
        %v3835 = vsel %vm1114, %v3811, %v3744
        %v3836 = vsel %vm1114, %v3812, %v3746
        %v3837 = vsel %vm1114, %v3813, %v3748
        %v3838 = vsel %vm1114, %v3814, %v3750
        %v3839 = vsel %vm1114, %v3815, %v3752
        %v3840 = vsel %vm1114, %v3816, %v3754
        %v3841 = vsel %vm1114, %v3817, %v3756
        %v3842 = vsel %vm1114, %v3818, %v3758
        %v3843 = vsel %vm1114, %v3819, %v3760
        %v3844 = vsel %vm1114, %v3820, %v3762
        %v3845 = vsel %vm1114, %v3821, %v3764
        %v3846 = vsel %vm1114, %v3822, %v3766
        %v3847 = vsel %vm1114, %v3823, %v3768
        %v3848 = vsel %vm1114, %v3824, %v3770
        %v3849 = vsel %vm1114, %v3825, %v3772
        %v3850 = vsel %vm1114, %v3826, %v3774
        %v3851 = vsel %vm1114, %v3827, %v3776
        %v3852 = vsel %vm1114, %v3828, %v3778
        %v3853 = vsel %vm1114, %v3829, %v3780
        %v3854 = vsel %vm1114, %v3830, %v3782
        %v3855 = vpack.c.bf16 %v3831, %v3831
        %v3856 = vpack.c.bf16 %v3832, %v3832
        %v3857 = vpack.c.bf16 %v3833, %v3833
        %v3858 = vpack.c.bf16 %v3834, %v3834
        %v3859 = vpack.c.bf16 %v3835, %v3835
        %v3860 = vpack.c.bf16 %v3836, %v3836
        %v3861 = vpack.c.bf16 %v3837, %v3837
        %v3862 = vpack.c.bf16 %v3838, %v3838
        %v3863 = vpack.c.bf16 %v3839, %v3839
        %v3864 = vpack.c.bf16 %v3840, %v3840
        %v3865 = vpack.c.bf16 %v3841, %v3841
        %v3866 = vpack.c.bf16 %v3842, %v3842
        %v3867 = vpack.c.bf16 %v3843, %v3843
        %v3868 = vpack.c.bf16 %v3844, %v3844
        %v3869 = vpack.c.bf16 %v3845, %v3845
        %v3870 = vpack.c.bf16 %v3846, %v3846
        %v3871 = vpack.c.bf16 %v3847, %v3847
        %v3872 = vpack.c.bf16 %v3848, %v3848
        %v3873 = vpack.c.bf16 %v3849, %v3849
        %v3874 = vpack.c.bf16 %v3850, %v3850
        %v3875 = vpack.c.bf16 %v3851, %v3851
        %v3876 = vpack.c.bf16 %v3852, %v3852
        %v3877 = vpack.c.bf16 %v3853, %v3853
        %v3878 = vpack.c.bf16 %v3854, %v3854
        %3879 = vst.msk [vmem:[#allocation2] sm:$0xf] %vm1179, %v3855
        %3880 = vst.msk [vmem:[#allocation2 + $0x4] sm:$0xf] %vm1179, %v3856
        %3881 = vst.msk [vmem:[#allocation2 + $0x8] sm:$0xf] %vm1179, %v3857
        %3882 = vst.msk [vmem:[#allocation2 + $0xc] sm:$0xf] %vm1179, %v3858
        %3883 = vst.msk [vmem:[#allocation2 + $0x10] sm:$0xf] %vm1179, %v3859
        %3884 = vst.msk [vmem:[#allocation2 + $0x14] sm:$0xf] %vm1179, %v3860
        %3885 = vst.msk [vmem:[#allocation2 + $0x18] sm:$0xf] %vm1179, %v3861
        %3886 = vst.msk [vmem:[#allocation2 + $0x1c] sm:$0xf] %vm1179, %v3862
        %3887 = vst.msk [vmem:[#allocation2 + $0x20] sm:$0xf] %vm1179, %v3863
        %3888 = vst.msk [vmem:[#allocation2 + $0x24] sm:$0xf] %vm1179, %v3864
        %3889 = vst.msk [vmem:[#allocation2 + $0x28] sm:$0xf] %vm1179, %v3865
        %3890 = vst.msk [vmem:[#allocation2 + $0x2c] sm:$0xf] %vm1179, %v3866
        %3891 = vst.msk [vmem:[#allocation2 + $0x30] sm:$0xf] %vm1179, %v3867
        %3892 = vst.msk [vmem:[#allocation2 + $0x34] sm:$0xf] %vm1179, %v3868
        %3893 = vst.msk [vmem:[#allocation2 + $0x38] sm:$0xf] %vm1179, %v3869
        %3894 = vst.msk [vmem:[#allocation2 + $0x3c] sm:$0xf] %vm1179, %v3870
        %3895 = vst.msk [vmem:[#allocation2 + $0x40] sm:$0xf] %vm1179, %v3871
        %3896 = vst.msk [vmem:[#allocation2 + $0x44] sm:$0xf] %vm1179, %v3872
        %3897 = vst.msk [vmem:[#allocation2 + $0x48] sm:$0xf] %vm1179, %v3873
        %3898 = vst.msk [vmem:[#allocation2 + $0x4c] sm:$0xf] %vm1179, %v3874
        %3899 = vst.msk [vmem:[#allocation2 + $0x50] sm:$0xf] %vm1179, %v3875
        %3900 = vst.msk [vmem:[#allocation2 + $0x54] sm:$0xf] %vm1179, %v3876
        %3901 = vst.msk [vmem:[#allocation2 + $0x58] sm:$0xf] %vm1179, %v3877
        %3902 = vst.msk [vmem:[#allocation2 + $0x5c] sm:$0xf] %vm1179, %v3878
        %v3903 = vld [vmem:[%s8] sm:$0x1]
        %v3905 = vperm.slane %v3903, 0
        %v3907 = vld [vmem:[#allocation2] sm:$0xf]
        %v3908 = vld [vmem:[#allocation2 + $0x4] sm:$0xf]
        %v3909 = vld [vmem:[#allocation2 + $0x8] sm:$0xf]
        %v3910 = vld [vmem:[#allocation2 + $0xc] sm:$0xf]
        %v3911 = vld [vmem:[#allocation2 + $0x10] sm:$0xf]
        %v3912 = vld [vmem:[#allocation2 + $0x14] sm:$0xf]
        %v3913 = vld [vmem:[#allocation2 + $0x18] sm:$0xf]
        %v3914 = vld [vmem:[#allocation2 + $0x1c] sm:$0xf]
        %v3915 = vld [vmem:[#allocation2 + $0x20] sm:$0xf]
        %v3916 = vld [vmem:[#allocation2 + $0x24] sm:$0xf]
        %v3917 = vld [vmem:[#allocation2 + $0x28] sm:$0xf]
        %v3918 = vld [vmem:[#allocation2 + $0x2c] sm:$0xf]
        %v3919 = vld [vmem:[#allocation2 + $0x30] sm:$0xf]
        %v3920 = vld [vmem:[#allocation2 + $0x34] sm:$0xf]
        %v3921 = vld [vmem:[#allocation2 + $0x38] sm:$0xf]
        %v3922 = vld [vmem:[#allocation2 + $0x3c] sm:$0xf]
        %v3923 = vld [vmem:[#allocation2 + $0x40] sm:$0xf]
        %v3924 = vld [vmem:[#allocation2 + $0x44] sm:$0xf]
        %v3925 = vld [vmem:[#allocation2 + $0x48] sm:$0xf]
        %v3926 = vld [vmem:[#allocation2 + $0x4c] sm:$0xf]
        %v3927 = vld [vmem:[%s7] sm:$0xf]
        %v3928 = vld [vmem:[%s7 + $0x4] sm:$0xf]
        %v3929 = vld [vmem:[%s7 + $0x8] sm:$0xf]
        %v3930 = vld [vmem:[%s7 + $0xc] sm:$0xf]
        %v3931 = vld [vmem:[%s7 + $0x10] sm:$0xf]
        %v3932 = vld [vmem:[%s7 + $0x14] sm:$0xf]
        %v3933 = vld [vmem:[%s7 + $0x18] sm:$0xf]
        %v3934 = vld [vmem:[%s7 + $0x1c] sm:$0xf]
        %v3935 = vld [vmem:[%s7 + $0x20] sm:$0xf]
        %v3936 = vld [vmem:[%s7 + $0x24] sm:$0xf]
        %v3937 = vld [vmem:[%s7 + $0x28] sm:$0xf]
        %v3938 = vld [vmem:[%s7 + $0x2c] sm:$0xf]
        %v3959 = vunpack.c.l.b16 %v3907
        %v3960 = vunpack.c.l.b16 %v3908
        %v3961 = vunpack.c.l.b16 %v3909
        %v3962 = vunpack.c.l.b16 %v3910
        %v3963 = vunpack.c.l.b16 %v3911
        %v3964 = vunpack.c.l.b16 %v3912
        %v3965 = vunpack.c.l.b16 %v3913
        %v3966 = vunpack.c.l.b16 %v3914
        %v3967 = vunpack.c.l.b16 %v3915
        %v3968 = vunpack.c.l.b16 %v3916
        %v3969 = vunpack.c.l.b16 %v3917
        %v3970 = vunpack.c.l.b16 %v3918
        %v3971 = vunpack.c.l.b16 %v3919
        %v3972 = vunpack.c.l.b16 %v3920
        %v3973 = vunpack.c.l.b16 %v3921
        %v3974 = vunpack.c.l.b16 %v3922
        %v3975 = vunpack.c.l.b16 %v3923
        %v3976 = vunpack.c.l.b16 %v3924
        %v3977 = vunpack.c.l.b16 %v3925
        %v3978 = vunpack.c.l.b16 %v3926
        %v3979 = vpack.c.b16 %v3960, %v3959
        %v3980 = vpack.c.b16 %v3962, %v3961
        %v3981 = vpack.c.b16 %v3964, %v3963
        %v3982 = vpack.c.b16 %v3966, %v3965
        %v3983 = vpack.c.b16 %v3968, %v3967
        %v3984 = vpack.c.b16 %v3970, %v3969
        %v3985 = vpack.c.b16 %v3972, %v3971
        %v3986 = vpack.c.b16 %v3974, %v3973
        %v3987 = vpack.c.b16 %v3976, %v3975
        %v3988 = vpack.c.b16 %v3978, %v3977
        %v4001 = vunpack.c.l.b16 %v3927
        %v4002 = vunpack.c.l.b16 %v3928
        %v4003 = vunpack.c.l.b16 %v3929
        %v4004 = vunpack.c.l.b16 %v3930
        %v4005 = vunpack.c.l.b16 %v3931
        %v4006 = vunpack.c.l.b16 %v3932
        %v4007 = vunpack.c.l.b16 %v3933
        %v4008 = vunpack.c.l.b16 %v3934
        %v4009 = vunpack.c.l.b16 %v3935
        %v4010 = vunpack.c.l.b16 %v3936
        %v4011 = vunpack.c.l.b16 %v3937
        %v4012 = vunpack.c.l.b16 %v3938
        %v4013 = vpack.c.b16 %v4002, %v4001
        %v4014 = vpack.c.b16 %v4004, %v4003
        %v4015 = vpack.c.b16 %v4006, %v4005
        %v4016 = vpack.c.b16 %v4008, %v4007
        %v4017 = vpack.c.b16 %v4010, %v4009
        %v4018 = vpack.c.b16 %v4012, %v4011
        %v4026 = vsel %vm1362, %v3979, 0
        %v4029 = vsel %vm1362, %v3980, 0
        %v4032 = vsel %vm1362, %v3981, 0
        %v4035 = vsel %vm1362, %v3982, 0
        %v4038 = vsel %vm1362, %v3983, 0
        %v4041 = vsel %vm1362, %v3984, 0
        %v4044 = vsel %vm1362, %v3985, 0
        %v4047 = vsel %vm1362, %v3986, 0
        %v4050 = vsel %vm1362, %v3987, 0
        %v4053 = vsel %vm1362, %v3988, 0
        %4055 = vmatpush.bf16.msra.mxu0 0
        %4056 = vmatpush.bf16.msra.mxu0 0
        %4057 = vmatpush.bf16.msra.mxu0 %v4018
        %4058 = vmatpush.bf16.msra.mxu0 %v4017
        %4059 = vmatpush.bf16.msra.mxu0 %v4016
        %4060 = vmatpush.bf16.msra.mxu0 %v4015
        %4061 = vmatpush.bf16.msra.mxu0 %v4014
        %4062 = vmatpush.bf16.msra.mxu0 %v4013
        %4063 = vmatmul.bf16.gmra.mxu0 %v4026
        %v4064 = vpop.f32.mrf.mxu0
        %v4065 = vadd.f32 0.0, %v4064
        %v4066 = vpop.f32.mrf.mxu0
        %v4067 = vadd.f32 0.0, %v4066
        %4068 = vmatmul.bf16.gmra.mxu0 %v4029
        %v4069 = vpop.f32.mrf.mxu0
        %v4070 = vadd.f32 0.0, %v4069
        %v4071 = vpop.f32.mrf.mxu0
        %v4072 = vadd.f32 0.0, %v4071
        %4073 = vmatmul.bf16.gmra.mxu0 %v4032
        %v4074 = vpop.f32.mrf.mxu0
        %v4075 = vadd.f32 0.0, %v4074
        %v4076 = vpop.f32.mrf.mxu0
        %v4077 = vadd.f32 0.0, %v4076
        %4078 = vmatmul.bf16.gmra.mxu0 %v4035
        %v4079 = vpop.f32.mrf.mxu0
        %v4080 = vadd.f32 0.0, %v4079
        %v4081 = vpop.f32.mrf.mxu0
        %v4082 = vadd.f32 0.0, %v4081
        %4083 = vmatmul.bf16.gmra.mxu0 %v4038
        %v4084 = vpop.f32.mrf.mxu0
        %v4085 = vadd.f32 0.0, %v4084
        %v4086 = vpop.f32.mrf.mxu0
        %v4087 = vadd.f32 0.0, %v4086
        %4088 = vmatmul.bf16.gmra.mxu0 %v4041
        %v4089 = vpop.f32.mrf.mxu0
        %v4090 = vadd.f32 0.0, %v4089
        %v4091 = vpop.f32.mrf.mxu0
        %v4092 = vadd.f32 0.0, %v4091
        %4093 = vmatmul.bf16.gmra.mxu0 %v4044
        %v4094 = vpop.f32.mrf.mxu0
        %v4095 = vadd.f32 0.0, %v4094
        %v4096 = vpop.f32.mrf.mxu0
        %v4097 = vadd.f32 0.0, %v4096
        %4098 = vmatmul.bf16.gmra.mxu0 %v4047
        %v4099 = vpop.f32.mrf.mxu0
        %v4100 = vadd.f32 0.0, %v4099
        %v4101 = vpop.f32.mrf.mxu0
        %v4102 = vadd.f32 0.0, %v4101
        %4103 = vmatmul.bf16.gmra.mxu0 %v4050
        %v4104 = vpop.f32.mrf.mxu0
        %v4105 = vadd.f32 0.0, %v4104
        %v4106 = vpop.f32.mrf.mxu0
        %v4107 = vadd.f32 0.0, %v4106
        %4108 = vmatmul.bf16.gmra.mxu0 %v4053
        %v4109 = vpop.f32.mrf.mxu0
        %v4110 = vadd.f32 0.0, %v4109
        %v4111 = vpop.f32.mrf.mxu0
        %v4112 = vadd.f32 0.0, %v4111
        %4113 = vdwg.mxu0
        %v4114 = vadd.f32 %v3905, %v4065
        %v4115 = vadd.f32 %v3905, %v4067
        %v4116 = vadd.f32 %v3905, %v4070
        %v4117 = vadd.f32 %v3905, %v4072
        %v4118 = vadd.f32 %v3905, %v4075
        %v4119 = vadd.f32 %v3905, %v4077
        %v4120 = vadd.f32 %v3905, %v4080
        %v4121 = vadd.f32 %v3905, %v4082
        %v4122 = vadd.f32 %v3905, %v4085
        %v4123 = vadd.f32 %v3905, %v4087
        %v4124 = vadd.f32 %v3905, %v4090
        %v4125 = vadd.f32 %v3905, %v4092
        %v4126 = vadd.f32 %v3905, %v4095
        %v4127 = vadd.f32 %v3905, %v4097
        %v4128 = vadd.f32 %v3905, %v4100
        %v4129 = vadd.f32 %v3905, %v4102
        %v4130 = vadd.f32 %v3905, %v4105
        %v4131 = vadd.f32 %v3905, %v4107
        %v4132 = vadd.f32 %v3905, %v4110
        %v4133 = vadd.f32 %v3905, %v4112
        %v4134 = vld [vmem:[%s1512] sm:$0xf]
        %v4135 = vld [vmem:[%s1512 + $0x4] sm:$0xf]
        %v4136 = vld [vmem:[%s1512 + $0x8] sm:$0xf]
        %v4137 = vld [vmem:[%s1512 + $0xc] sm:$0xf]
        %v4138 = vld [vmem:[%s1512 + $0x10] sm:$0xf]
        %v4139 = vld [vmem:[%s1512 + $0x14] sm:$0xf]
        %v4140 = vld [vmem:[%s1512 + $0x18] sm:$0xf]
        %v4141 = vld [vmem:[%s1512 + $0x1c] sm:$0xf]
        %v4142 = vld [vmem:[%s1512 + $0x20] sm:$0xf]
        %v4143 = vld [vmem:[%s1512 + $0x24] sm:$0xf]
        %v4144 = vld [vmem:[%s1512 + $0x28] sm:$0xf]
        %v4145 = vld [vmem:[%s1512 + $0x2c] sm:$0xf]
        %v4146 = vld [vmem:[%s1512 + $0x30] sm:$0xf]
        %v4147 = vld [vmem:[%s1512 + $0x34] sm:$0xf]
        %v4148 = vld [vmem:[%s1512 + $0x38] sm:$0xf]
        %v4149 = vld [vmem:[%s1512 + $0x3c] sm:$0xf]
        %v4150 = vld [vmem:[%s1512 + $0x40] sm:$0xf]
        %v4151 = vld [vmem:[%s1512 + $0x44] sm:$0xf]
        %v4152 = vld [vmem:[%s1512 + $0x48] sm:$0xf]
        %v4153 = vld [vmem:[%s1512 + $0x4c] sm:$0xf]
        %s4154 = scalar_lea.vmem %s7, 48
        %v4155 = vld [vmem:[%s4154] sm:$0xf]
        %v4156 = vld [vmem:[%s4154 + $0x4] sm:$0xf]
        %v4157 = vld [vmem:[%s4154 + $0x8] sm:$0xf]
        %v4158 = vld [vmem:[%s4154 + $0xc] sm:$0xf]
        %v4159 = vld [vmem:[%s4154 + $0x10] sm:$0xf]
        %v4160 = vld [vmem:[%s4154 + $0x14] sm:$0xf]
        %v4161 = vld [vmem:[%s4154 + $0x18] sm:$0xf]
        %v4162 = vld [vmem:[%s4154 + $0x1c] sm:$0xf]
        %v4163 = vld [vmem:[%s4154 + $0x20] sm:$0xf]
        %v4164 = vld [vmem:[%s4154 + $0x24] sm:$0xf]
        %v4165 = vld [vmem:[%s4154 + $0x28] sm:$0xf]
        %v4166 = vld [vmem:[%s4154 + $0x2c] sm:$0xf]
        %v4187 = vunpack.c.l.b16 %v4134
        %v4188 = vunpack.c.l.b16 %v4135
        %v4189 = vunpack.c.l.b16 %v4136
        %v4190 = vunpack.c.l.b16 %v4137
        %v4191 = vunpack.c.l.b16 %v4138
        %v4192 = vunpack.c.l.b16 %v4139
        %v4193 = vunpack.c.l.b16 %v4140
        %v4194 = vunpack.c.l.b16 %v4141
        %v4195 = vunpack.c.l.b16 %v4142
        %v4196 = vunpack.c.l.b16 %v4143
        %v4197 = vunpack.c.l.b16 %v4144
        %v4198 = vunpack.c.l.b16 %v4145
        %v4199 = vunpack.c.l.b16 %v4146
        %v4200 = vunpack.c.l.b16 %v4147
        %v4201 = vunpack.c.l.b16 %v4148
        %v4202 = vunpack.c.l.b16 %v4149
        %v4203 = vunpack.c.l.b16 %v4150
        %v4204 = vunpack.c.l.b16 %v4151
        %v4205 = vunpack.c.l.b16 %v4152
        %v4206 = vunpack.c.l.b16 %v4153
        %v4207 = vpack.c.b16 %v4188, %v4187
        %v4208 = vpack.c.b16 %v4190, %v4189
        %v4209 = vpack.c.b16 %v4192, %v4191
        %v4210 = vpack.c.b16 %v4194, %v4193
        %v4211 = vpack.c.b16 %v4196, %v4195
        %v4212 = vpack.c.b16 %v4198, %v4197
        %v4213 = vpack.c.b16 %v4200, %v4199
        %v4214 = vpack.c.b16 %v4202, %v4201
        %v4215 = vpack.c.b16 %v4204, %v4203
        %v4216 = vpack.c.b16 %v4206, %v4205
        %v4229 = vunpack.c.l.b16 %v4155
        %v4230 = vunpack.c.l.b16 %v4156
        %v4231 = vunpack.c.l.b16 %v4157
        %v4232 = vunpack.c.l.b16 %v4158
        %v4233 = vunpack.c.l.b16 %v4159
        %v4234 = vunpack.c.l.b16 %v4160
        %v4235 = vunpack.c.l.b16 %v4161
        %v4236 = vunpack.c.l.b16 %v4162
        %v4237 = vunpack.c.l.b16 %v4163
        %v4238 = vunpack.c.l.b16 %v4164
        %v4239 = vunpack.c.l.b16 %v4165
        %v4240 = vunpack.c.l.b16 %v4166
        %v4241 = vpack.c.b16 %v4230, %v4229
        %v4242 = vpack.c.b16 %v4232, %v4231
        %v4243 = vpack.c.b16 %v4234, %v4233
        %v4244 = vpack.c.b16 %v4236, %v4235
        %v4245 = vpack.c.b16 %v4238, %v4237
        %v4246 = vpack.c.b16 %v4240, %v4239
        %v4254 = vsel %vm1362, %v4207, 0
        %v4257 = vsel %vm1362, %v4208, 0
        %v4260 = vsel %vm1362, %v4209, 0
        %v4263 = vsel %vm1362, %v4210, 0
        %v4266 = vsel %vm1362, %v4211, 0
        %v4269 = vsel %vm1362, %v4212, 0
        %v4272 = vsel %vm1362, %v4213, 0
        %v4275 = vsel %vm1362, %v4214, 0
        %v4278 = vsel %vm1362, %v4215, 0
        %v4281 = vsel %vm1362, %v4216, 0
        %4283 = vmatpush.bf16.msra.mxu0 0
        %4284 = vmatpush.bf16.msra.mxu0 0
        %4285 = vmatpush.bf16.msra.mxu0 %v4246
        %4286 = vmatpush.bf16.msra.mxu0 %v4245
        %4287 = vmatpush.bf16.msra.mxu0 %v4244
        %4288 = vmatpush.bf16.msra.mxu0 %v4243
        %4289 = vmatpush.bf16.msra.mxu0 %v4242
        %4290 = vmatpush.bf16.msra.mxu0 %v4241
        %4291 = vmatmul.bf16.gmra.mxu0 %v4254
        %v4292 = vpop.f32.mrf.mxu0
        %v4293 = vadd.f32 0.0, %v4292
        %v4294 = vpop.f32.mrf.mxu0
        %v4295 = vadd.f32 0.0, %v4294
        %4296 = vmatmul.bf16.gmra.mxu0 %v4257
        %v4297 = vpop.f32.mrf.mxu0
        %v4298 = vadd.f32 0.0, %v4297
        %v4299 = vpop.f32.mrf.mxu0
        %v4300 = vadd.f32 0.0, %v4299
        %4301 = vmatmul.bf16.gmra.mxu0 %v4260
        %v4302 = vpop.f32.mrf.mxu0
        %v4303 = vadd.f32 0.0, %v4302
        %v4304 = vpop.f32.mrf.mxu0
        %v4305 = vadd.f32 0.0, %v4304
        %4306 = vmatmul.bf16.gmra.mxu0 %v4263
        %v4307 = vpop.f32.mrf.mxu0
        %v4308 = vadd.f32 0.0, %v4307
        %v4309 = vpop.f32.mrf.mxu0
        %v4310 = vadd.f32 0.0, %v4309
        %4311 = vmatmul.bf16.gmra.mxu0 %v4266
        %v4312 = vpop.f32.mrf.mxu0
        %v4313 = vadd.f32 0.0, %v4312
        %v4314 = vpop.f32.mrf.mxu0
        %v4315 = vadd.f32 0.0, %v4314
        %4316 = vmatmul.bf16.gmra.mxu0 %v4269
        %v4317 = vpop.f32.mrf.mxu0
        %v4318 = vadd.f32 0.0, %v4317
        %v4319 = vpop.f32.mrf.mxu0
        %v4320 = vadd.f32 0.0, %v4319
        %4321 = vmatmul.bf16.gmra.mxu0 %v4272
        %v4322 = vpop.f32.mrf.mxu0
        %v4323 = vadd.f32 0.0, %v4322
        %v4324 = vpop.f32.mrf.mxu0
        %v4325 = vadd.f32 0.0, %v4324
        %4326 = vmatmul.bf16.gmra.mxu0 %v4275
        %v4327 = vpop.f32.mrf.mxu0
        %v4328 = vadd.f32 0.0, %v4327
        %v4329 = vpop.f32.mrf.mxu0
        %v4330 = vadd.f32 0.0, %v4329
        %4331 = vmatmul.bf16.gmra.mxu0 %v4278
        %v4332 = vpop.f32.mrf.mxu0
        %v4333 = vadd.f32 0.0, %v4332
        %v4334 = vpop.f32.mrf.mxu0
        %v4335 = vadd.f32 0.0, %v4334
        %4336 = vmatmul.bf16.gmra.mxu0 %v4281
        %v4337 = vpop.f32.mrf.mxu0
        %v4338 = vadd.f32 0.0, %v4337
        %v4339 = vpop.f32.mrf.mxu0
        %v4340 = vadd.f32 0.0, %v4339
        %4341 = vdwg.mxu0
        %v4342 = vadd.f32 %v4114, %v4293
        %v4343 = vadd.f32 %v4115, %v4295
        %v4344 = vadd.f32 %v4116, %v4298
        %v4345 = vadd.f32 %v4117, %v4300
        %v4346 = vadd.f32 %v4118, %v4303
        %v4347 = vadd.f32 %v4119, %v4305
        %v4348 = vadd.f32 %v4120, %v4308
        %v4349 = vadd.f32 %v4121, %v4310
        %v4350 = vadd.f32 %v4122, %v4313
        %v4351 = vadd.f32 %v4123, %v4315
        %v4352 = vadd.f32 %v4124, %v4318
        %v4353 = vadd.f32 %v4125, %v4320
        %v4354 = vadd.f32 %v4126, %v4323
        %v4355 = vadd.f32 %v4127, %v4325
        %v4356 = vadd.f32 %v4128, %v4328
        %v4357 = vadd.f32 %v4129, %v4330
        %v4358 = vadd.f32 %v4130, %v4333
        %v4359 = vadd.f32 %v4131, %v4335
        %v4360 = vadd.f32 %v4132, %v4338
        %v4361 = vadd.f32 %v4133, %v4340
        %v4362 = vld [vmem:[%s1809] sm:$0xf]
        %v4363 = vld [vmem:[%s1809 + $0x4] sm:$0xf]
        %v4364 = vld [vmem:[%s1809 + $0x8] sm:$0xf]
        %v4365 = vld [vmem:[%s1809 + $0xc] sm:$0xf]
        %v4366 = vld [vmem:[%s1809 + $0x10] sm:$0xf]
        %v4367 = vld [vmem:[%s1809 + $0x14] sm:$0xf]
        %v4368 = vld [vmem:[%s1809 + $0x18] sm:$0xf]
        %v4369 = vld [vmem:[%s1809 + $0x1c] sm:$0xf]
        %v4370 = vld [vmem:[%s1809 + $0x20] sm:$0xf]
        %v4371 = vld [vmem:[%s1809 + $0x24] sm:$0xf]
        %v4372 = vld [vmem:[%s1809 + $0x28] sm:$0xf]
        %v4373 = vld [vmem:[%s1809 + $0x2c] sm:$0xf]
        %v4374 = vld [vmem:[%s1809 + $0x30] sm:$0xf]
        %v4375 = vld [vmem:[%s1809 + $0x34] sm:$0xf]
        %v4376 = vld [vmem:[%s1809 + $0x38] sm:$0xf]
        %v4377 = vld [vmem:[%s1809 + $0x3c] sm:$0xf]
        %v4378 = vld [vmem:[%s1809 + $0x40] sm:$0xf]
        %v4379 = vld [vmem:[%s1809 + $0x44] sm:$0xf]
        %v4380 = vld [vmem:[%s1809 + $0x48] sm:$0xf]
        %v4381 = vld [vmem:[%s1809 + $0x4c] sm:$0xf]
        %s4382 = scalar_lea.vmem %s7, 96
        %v4383 = vld [vmem:[%s4382] sm:$0xf]
        %v4384 = vld [vmem:[%s4382 + $0x4] sm:$0xf]
        %v4385 = vld [vmem:[%s4382 + $0x8] sm:$0xf]
        %v4386 = vld [vmem:[%s4382 + $0xc] sm:$0xf]
        %v4387 = vld [vmem:[%s4382 + $0x10] sm:$0xf]
        %v4388 = vld [vmem:[%s4382 + $0x14] sm:$0xf]
        %v4389 = vld [vmem:[%s4382 + $0x18] sm:$0xf]
        %v4390 = vld [vmem:[%s4382 + $0x1c] sm:$0xf]
        %v4391 = vld [vmem:[%s4382 + $0x20] sm:$0xf]
        %v4392 = vld [vmem:[%s4382 + $0x24] sm:$0xf]
        %v4393 = vld [vmem:[%s4382 + $0x28] sm:$0xf]
        %v4394 = vld [vmem:[%s4382 + $0x2c] sm:$0xf]
        %v4415 = vunpack.c.l.b16 %v4362
        %v4416 = vunpack.c.l.b16 %v4363
        %v4417 = vunpack.c.l.b16 %v4364
        %v4418 = vunpack.c.l.b16 %v4365
        %v4419 = vunpack.c.l.b16 %v4366
        %v4420 = vunpack.c.l.b16 %v4367
        %v4421 = vunpack.c.l.b16 %v4368
        %v4422 = vunpack.c.l.b16 %v4369
        %v4423 = vunpack.c.l.b16 %v4370
        %v4424 = vunpack.c.l.b16 %v4371
        %v4425 = vunpack.c.l.b16 %v4372
        %v4426 = vunpack.c.l.b16 %v4373
        %v4427 = vunpack.c.l.b16 %v4374
        %v4428 = vunpack.c.l.b16 %v4375
        %v4429 = vunpack.c.l.b16 %v4376
        %v4430 = vunpack.c.l.b16 %v4377
        %v4431 = vunpack.c.l.b16 %v4378
        %v4432 = vunpack.c.l.b16 %v4379
        %v4433 = vunpack.c.l.b16 %v4380
        %v4434 = vunpack.c.l.b16 %v4381
        %v4435 = vpack.c.b16 %v4416, %v4415
        %v4436 = vpack.c.b16 %v4418, %v4417
        %v4437 = vpack.c.b16 %v4420, %v4419
        %v4438 = vpack.c.b16 %v4422, %v4421
        %v4439 = vpack.c.b16 %v4424, %v4423
        %v4440 = vpack.c.b16 %v4426, %v4425
        %v4441 = vpack.c.b16 %v4428, %v4427
        %v4442 = vpack.c.b16 %v4430, %v4429
        %v4443 = vpack.c.b16 %v4432, %v4431
        %v4444 = vpack.c.b16 %v4434, %v4433
        %v4457 = vunpack.c.l.b16 %v4383
        %v4458 = vunpack.c.l.b16 %v4384
        %v4459 = vunpack.c.l.b16 %v4385
        %v4460 = vunpack.c.l.b16 %v4386
        %v4461 = vunpack.c.l.b16 %v4387
        %v4462 = vunpack.c.l.b16 %v4388
        %v4463 = vunpack.c.l.b16 %v4389
        %v4464 = vunpack.c.l.b16 %v4390
        %v4465 = vunpack.c.l.b16 %v4391
        %v4466 = vunpack.c.l.b16 %v4392
        %v4467 = vunpack.c.l.b16 %v4393
        %v4468 = vunpack.c.l.b16 %v4394
        %v4469 = vpack.c.b16 %v4458, %v4457
        %v4470 = vpack.c.b16 %v4460, %v4459
        %v4471 = vpack.c.b16 %v4462, %v4461
        %v4472 = vpack.c.b16 %v4464, %v4463
        %v4473 = vpack.c.b16 %v4466, %v4465
        %v4474 = vpack.c.b16 %v4468, %v4467
        %v4482 = vsel %vm1362, %v4435, 0
        %v4485 = vsel %vm1362, %v4436, 0
        %v4488 = vsel %vm1362, %v4437, 0
        %v4491 = vsel %vm1362, %v4438, 0
        %v4494 = vsel %vm1362, %v4439, 0
        %v4497 = vsel %vm1362, %v4440, 0
        %v4500 = vsel %vm1362, %v4441, 0
        %v4503 = vsel %vm1362, %v4442, 0
        %v4506 = vsel %vm1362, %v4443, 0
        %v4509 = vsel %vm1362, %v4444, 0
        %4511 = vmatpush.bf16.msra.mxu0 0
        %4512 = vmatpush.bf16.msra.mxu0 0
        %4513 = vmatpush.bf16.msra.mxu0 %v4474
        %4514 = vmatpush.bf16.msra.mxu0 %v4473
        %4515 = vmatpush.bf16.msra.mxu0 %v4472
        %4516 = vmatpush.bf16.msra.mxu0 %v4471
        %4517 = vmatpush.bf16.msra.mxu0 %v4470
        %4518 = vmatpush.bf16.msra.mxu0 %v4469
        %4519 = vmatmul.bf16.gmra.mxu0 %v4482
        %v4520 = vpop.f32.mrf.mxu0
        %v4521 = vadd.f32 0.0, %v4520
        %v4522 = vpop.f32.mrf.mxu0
        %v4523 = vadd.f32 0.0, %v4522
        %4524 = vmatmul.bf16.gmra.mxu0 %v4485
        %v4525 = vpop.f32.mrf.mxu0
        %v4526 = vadd.f32 0.0, %v4525
        %v4527 = vpop.f32.mrf.mxu0
        %v4528 = vadd.f32 0.0, %v4527
        %4529 = vmatmul.bf16.gmra.mxu0 %v4488
        %v4530 = vpop.f32.mrf.mxu0
        %v4531 = vadd.f32 0.0, %v4530
        %v4532 = vpop.f32.mrf.mxu0
        %v4533 = vadd.f32 0.0, %v4532
        %4534 = vmatmul.bf16.gmra.mxu0 %v4491
        %v4535 = vpop.f32.mrf.mxu0
        %v4536 = vadd.f32 0.0, %v4535
        %v4537 = vpop.f32.mrf.mxu0
        %v4538 = vadd.f32 0.0, %v4537
        %4539 = vmatmul.bf16.gmra.mxu0 %v4494
        %v4540 = vpop.f32.mrf.mxu0
        %v4541 = vadd.f32 0.0, %v4540
        %v4542 = vpop.f32.mrf.mxu0
        %v4543 = vadd.f32 0.0, %v4542
        %4544 = vmatmul.bf16.gmra.mxu0 %v4497
        %v4545 = vpop.f32.mrf.mxu0
        %v4546 = vadd.f32 0.0, %v4545
        %v4547 = vpop.f32.mrf.mxu0
        %v4548 = vadd.f32 0.0, %v4547
        %4549 = vmatmul.bf16.gmra.mxu0 %v4500
        %v4550 = vpop.f32.mrf.mxu0
        %v4551 = vadd.f32 0.0, %v4550
        %v4552 = vpop.f32.mrf.mxu0
        %v4553 = vadd.f32 0.0, %v4552
        %4554 = vmatmul.bf16.gmra.mxu0 %v4503
        %v4555 = vpop.f32.mrf.mxu0
        %v4556 = vadd.f32 0.0, %v4555
        %v4557 = vpop.f32.mrf.mxu0
        %v4558 = vadd.f32 0.0, %v4557
        %4559 = vmatmul.bf16.gmra.mxu0 %v4506
        %v4560 = vpop.f32.mrf.mxu0
        %v4561 = vadd.f32 0.0, %v4560
        %v4562 = vpop.f32.mrf.mxu0
        %v4563 = vadd.f32 0.0, %v4562
        %4564 = vmatmul.bf16.gmra.mxu0 %v4509
        %v4565 = vpop.f32.mrf.mxu0
        %v4566 = vadd.f32 0.0, %v4565
        %v4567 = vpop.f32.mrf.mxu0
        %v4568 = vadd.f32 0.0, %v4567
        %4569 = vdwg.mxu0
        %v4570 = vadd.f32 %v4342, %v4521
        %v4571 = vadd.f32 %v4343, %v4523
        %v4572 = vadd.f32 %v4344, %v4526
        %v4573 = vadd.f32 %v4345, %v4528
        %v4574 = vadd.f32 %v4346, %v4531
        %v4575 = vadd.f32 %v4347, %v4533
        %v4576 = vadd.f32 %v4348, %v4536
        %v4577 = vadd.f32 %v4349, %v4538
        %v4578 = vadd.f32 %v4350, %v4541
        %v4579 = vadd.f32 %v4351, %v4543
        %v4580 = vadd.f32 %v4352, %v4546
        %v4581 = vadd.f32 %v4353, %v4548
        %v4582 = vadd.f32 %v4354, %v4551
        %v4583 = vadd.f32 %v4355, %v4553
        %v4584 = vadd.f32 %v4356, %v4556
        %v4585 = vadd.f32 %v4357, %v4558
        %v4586 = vadd.f32 %v4358, %v4561
        %v4587 = vadd.f32 %v4359, %v4563
        %v4588 = vadd.f32 %v4360, %v4566
        %v4589 = vadd.f32 %v4361, %v4568
        %v4590 = vmax.f32 %v4570, 0.0
        %v4591 = vmax.f32 %v4571, 0.0
        %v4592 = vmax.f32 %v4572, 0.0
        %v4593 = vmax.f32 %v4573, 0.0
        %v4594 = vmax.f32 %v4574, 0.0
        %v4595 = vmax.f32 %v4575, 0.0
        %v4596 = vmax.f32 %v4576, 0.0
        %v4597 = vmax.f32 %v4577, 0.0
        %v4598 = vmax.f32 %v4578, 0.0
        %v4599 = vmax.f32 %v4579, 0.0
        %v4600 = vmax.f32 %v4580, 0.0
        %v4601 = vmax.f32 %v4581, 0.0
        %v4602 = vmax.f32 %v4582, 0.0
        %v4603 = vmax.f32 %v4583, 0.0
        %v4604 = vmax.f32 %v4584, 0.0
        %v4605 = vmax.f32 %v4585, 0.0
        %v4606 = vmax.f32 %v4586, 0.0
        %v4607 = vmax.f32 %v4587, 0.0
        %v4608 = vmax.f32 %v4588, 0.0
        %v4609 = vmax.f32 %v4589, 0.0
        %v4610 = vsel %vm2136, %v4590, 0.0
        %v4611 = vsel %vm2136, %v4591, 0.0
        %v4612 = vsel 1, %v4592, 0.0
        %v4613 = vsel 1, %v4593, 0.0
        %v4614 = vsel 1, %v4594, 0.0
        %v4615 = vsel 1, %v4595, 0.0
        %v4616 = vsel 1, %v4596, 0.0
        %v4617 = vsel 1, %v4597, 0.0
        %v4618 = vsel 1, %v4598, 0.0
        %v4619 = vsel 1, %v4599, 0.0
        %v4620 = vsel 1, %v4600, 0.0
        %v4621 = vsel 1, %v4601, 0.0
        %v4622 = vsel 1, %v4602, 0.0
        %v4623 = vsel 1, %v4603, 0.0
        %v4624 = vsel 1, %v4604, 0.0
        %v4625 = vsel 1, %v4605, 0.0
        %v4626 = vsel 1, %v4606, 0.0
        %v4627 = vsel 1, %v4607, 0.0
        %v4628 = vsel %vm2137, %v4608, 0.0
        %v4629 = vsel %vm2137, %v4609, 0.0
        %v4650 = vrot.slane %v4610, 7
        %v4651 = vrot.slane %v4611, 7
        %v4652 = vsel %vm695, %v4650, %v4651
        %v4653 = vrot.slane %v4612, 7
        %v4654 = vrot.slane %v4613, 7
        %v4655 = vsel %vm695, %v4653, %v4654
        %v4656 = vrot.slane %v4614, 7
        %v4657 = vrot.slane %v4615, 7
        %v4658 = vsel %vm695, %v4656, %v4657
        %v4659 = vrot.slane %v4616, 7
        %v4660 = vrot.slane %v4617, 7
        %v4661 = vsel %vm695, %v4659, %v4660
        %v4662 = vrot.slane %v4618, 7
        %v4663 = vrot.slane %v4619, 7
        %v4664 = vsel %vm695, %v4662, %v4663
        %v4665 = vrot.slane %v4620, 7
        %v4666 = vrot.slane %v4621, 7
        %v4667 = vsel %vm695, %v4665, %v4666
        %v4668 = vrot.slane %v4622, 7
        %v4669 = vrot.slane %v4623, 7
        %v4670 = vsel %vm695, %v4668, %v4669
        %v4671 = vrot.slane %v4624, 7
        %v4672 = vrot.slane %v4625, 7
        %v4673 = vsel %vm695, %v4671, %v4672
        %v4674 = vrot.slane %v4626, 7
        %v4675 = vrot.slane %v4627, 7
        %v4676 = vsel %vm695, %v4674, %v4675
        %v4677 = vrot.slane %v4628, 7
        %v4678 = vrot.slane %v4629, 7
        %v4679 = vsel %vm695, %v4677, %v4678
        %v4700 = vsel %vm695, 0.0, %v4650
        %v4701 = vsel %vm695, 0.0, %v4653
        %v4702 = vsel %vm695, 0.0, %v4656
        %v4703 = vsel %vm695, 0.0, %v4659
        %v4704 = vsel %vm695, 0.0, %v4662
        %v4705 = vsel %vm695, 0.0, %v4665
        %v4706 = vsel %vm695, 0.0, %v4668
        %v4707 = vsel %vm695, 0.0, %v4671
        %v4708 = vsel %vm695, 0.0, %v4674
        %v4709 = vsel %vm695, 0.0, %v4677
        %v4710 = vrot.slane %v4610, 1
        %v4711 = vrot.slane %v4611, 1
        %v4712 = vsel %vm792, %v4710, %v4711
        %v4713 = vrot.slane %v4612, 1
        %v4714 = vrot.slane %v4613, 1
        %v4715 = vsel %vm792, %v4713, %v4714
        %v4716 = vrot.slane %v4614, 1
        %v4717 = vrot.slane %v4615, 1
        %v4718 = vsel %vm792, %v4716, %v4717
        %v4719 = vrot.slane %v4616, 1
        %v4720 = vrot.slane %v4617, 1
        %v4721 = vsel %vm792, %v4719, %v4720
        %v4722 = vrot.slane %v4618, 1
        %v4723 = vrot.slane %v4619, 1
        %v4724 = vsel %vm792, %v4722, %v4723
        %v4725 = vrot.slane %v4620, 1
        %v4726 = vrot.slane %v4621, 1
        %v4727 = vsel %vm792, %v4725, %v4726
        %v4728 = vrot.slane %v4622, 1
        %v4729 = vrot.slane %v4623, 1
        %v4730 = vsel %vm792, %v4728, %v4729
        %v4731 = vrot.slane %v4624, 1
        %v4732 = vrot.slane %v4625, 1
        %v4733 = vsel %vm792, %v4731, %v4732
        %v4734 = vrot.slane %v4626, 1
        %v4735 = vrot.slane %v4627, 1
        %v4736 = vsel %vm792, %v4734, %v4735
        %v4737 = vrot.slane %v4628, 1
        %v4738 = vrot.slane %v4629, 1
        %v4739 = vsel %vm792, %v4737, %v4738
        %v4750 = vsel %vm792, %v4711, 0.0
        %v4751 = vsel %vm792, %v4714, 0.0
        %v4752 = vsel %vm792, %v4717, 0.0
        %v4753 = vsel %vm792, %v4720, 0.0
        %v4754 = vsel %vm792, %v4723, 0.0
        %v4755 = vsel %vm792, %v4726, 0.0
        %v4756 = vsel %vm792, %v4729, 0.0
        %v4757 = vsel %vm792, %v4732, 0.0
        %v4758 = vsel %vm792, %v4735, 0.0
        %v4759 = vsel %vm792, %v4738, 0.0
        %4760 = vrot.lane.b32.xlu0 %v4610, 96
        %v4761 = vpop.permute.xlu0 %4760
        %4762 = vrot.lane.b32.xlu0 %v4611, 96
        %v4763 = vpop.permute.xlu0 %4762
        %4764 = vrot.lane.b32.xlu0 %v4612, 96
        %v4765 = vpop.permute.xlu0 %4764
        %4766 = vrot.lane.b32.xlu0 %v4613, 96
        %v4767 = vpop.permute.xlu0 %4766
        %4768 = vrot.lane.b32.xlu0 %v4614, 96
        %v4769 = vpop.permute.xlu0 %4768
        %4770 = vrot.lane.b32.xlu0 %v4615, 96
        %v4771 = vpop.permute.xlu0 %4770
        %4772 = vrot.lane.b32.xlu0 %v4616, 96
        %v4773 = vpop.permute.xlu0 %4772
        %4774 = vrot.lane.b32.xlu0 %v4617, 96
        %v4775 = vpop.permute.xlu0 %4774
        %4776 = vrot.lane.b32.xlu0 %v4618, 96
        %v4777 = vpop.permute.xlu0 %4776
        %4778 = vrot.lane.b32.xlu0 %v4619, 96
        %v4779 = vpop.permute.xlu0 %4778
        %4780 = vrot.lane.b32.xlu0 %v4620, 96
        %v4781 = vpop.permute.xlu0 %4780
        %4782 = vrot.lane.b32.xlu0 %v4621, 96
        %v4783 = vpop.permute.xlu0 %4782
        %4784 = vrot.lane.b32.xlu0 %v4622, 96
        %v4785 = vpop.permute.xlu0 %4784
        %4786 = vrot.lane.b32.xlu0 %v4623, 96
        %v4787 = vpop.permute.xlu0 %4786
        %4788 = vrot.lane.b32.xlu0 %v4624, 96
        %v4789 = vpop.permute.xlu0 %4788
        %4790 = vrot.lane.b32.xlu0 %v4625, 96
        %v4791 = vpop.permute.xlu0 %4790
        %4792 = vrot.lane.b32.xlu0 %v4626, 96
        %v4793 = vpop.permute.xlu0 %4792
        %4794 = vrot.lane.b32.xlu0 %v4627, 96
        %v4795 = vpop.permute.xlu0 %4794
        %4796 = vrot.lane.b32.xlu0 %v4628, 96
        %v4797 = vpop.permute.xlu0 %4796
        %4798 = vrot.lane.b32.xlu0 %v4629, 96
        %v4799 = vpop.permute.xlu0 %4798
        %4830 = vrot.lane.b32.xlu0 %v4712, 64
        %v4831 = vpop.permute.xlu0 %4830
        %4832 = vrot.lane.b32.xlu0 %v4750, 64
        %v4833 = vpop.permute.xlu0 %4832
        %4834 = vrot.lane.b32.xlu0 %v4715, 64
        %v4835 = vpop.permute.xlu0 %4834
        %4836 = vrot.lane.b32.xlu0 %v4751, 64
        %v4837 = vpop.permute.xlu0 %4836
        %4838 = vrot.lane.b32.xlu0 %v4718, 64
        %v4839 = vpop.permute.xlu0 %4838
        %4840 = vrot.lane.b32.xlu0 %v4752, 64
        %v4841 = vpop.permute.xlu0 %4840
        %4842 = vrot.lane.b32.xlu0 %v4721, 64
        %v4843 = vpop.permute.xlu0 %4842
        %4844 = vrot.lane.b32.xlu0 %v4753, 64
        %v4845 = vpop.permute.xlu0 %4844
        %4846 = vrot.lane.b32.xlu0 %v4724, 64
        %v4847 = vpop.permute.xlu0 %4846
        %4848 = vrot.lane.b32.xlu0 %v4754, 64
        %v4849 = vpop.permute.xlu0 %4848
        %4850 = vrot.lane.b32.xlu0 %v4727, 64
        %v4851 = vpop.permute.xlu0 %4850
        %4852 = vrot.lane.b32.xlu0 %v4755, 64
        %v4853 = vpop.permute.xlu0 %4852
        %4854 = vrot.lane.b32.xlu0 %v4730, 64
        %v4855 = vpop.permute.xlu0 %4854
        %4856 = vrot.lane.b32.xlu0 %v4756, 64
        %v4857 = vpop.permute.xlu0 %4856
        %4858 = vrot.lane.b32.xlu0 %v4733, 64
        %v4859 = vpop.permute.xlu0 %4858
        %4860 = vrot.lane.b32.xlu0 %v4757, 64
        %v4861 = vpop.permute.xlu0 %4860
        %4862 = vrot.lane.b32.xlu0 %v4736, 64
        %v4863 = vpop.permute.xlu0 %4862
        %4864 = vrot.lane.b32.xlu0 %v4758, 64
        %v4865 = vpop.permute.xlu0 %4864
        %4866 = vrot.lane.b32.xlu0 %v4739, 64
        %v4867 = vpop.permute.xlu0 %4866
        %4868 = vrot.lane.b32.xlu0 %v4759, 64
        %v4869 = vpop.permute.xlu0 %4868
        %v4890 = vsel %vm1362, %v4700, %v4761
        %v4891 = vsel %vm1362, %v4652, %v4763
        %v4892 = vsel %vm1362, %v4701, %v4765
        %v4893 = vsel %vm1362, %v4655, %v4767
        %v4894 = vsel %vm1362, %v4702, %v4769
        %v4895 = vsel %vm1362, %v4658, %v4771
        %v4896 = vsel %vm1362, %v4703, %v4773
        %v4897 = vsel %vm1362, %v4661, %v4775
        %v4898 = vsel %vm1362, %v4704, %v4777
        %v4899 = vsel %vm1362, %v4664, %v4779
        %v4900 = vsel %vm1362, %v4705, %v4781
        %v4901 = vsel %vm1362, %v4667, %v4783
        %v4902 = vsel %vm1362, %v4706, %v4785
        %v4903 = vsel %vm1362, %v4670, %v4787
        %v4904 = vsel %vm1362, %v4707, %v4789
        %v4905 = vsel %vm1362, %v4673, %v4791
        %v4906 = vsel %vm1362, %v4708, %v4793
        %v4907 = vsel %vm1362, %v4676, %v4795
        %v4908 = vsel %vm1362, %v4709, %v4797
        %v4909 = vsel %vm1362, %v4679, %v4799
        %v4910 = vsel %vm1114, %v4761, %v4831
        %v4911 = vsel %vm1114, %v4763, %v4833
        %v4912 = vsel %vm1114, %v4765, %v4835
        %v4913 = vsel %vm1114, %v4767, %v4837
        %v4914 = vsel %vm1114, %v4769, %v4839
        %v4915 = vsel %vm1114, %v4771, %v4841
        %v4916 = vsel %vm1114, %v4773, %v4843
        %v4917 = vsel %vm1114, %v4775, %v4845
        %v4918 = vsel %vm1114, %v4777, %v4847
        %v4919 = vsel %vm1114, %v4779, %v4849
        %v4920 = vsel %vm1114, %v4781, %v4851
        %v4921 = vsel %vm1114, %v4783, %v4853
        %v4922 = vsel %vm1114, %v4785, %v4855
        %v4923 = vsel %vm1114, %v4787, %v4857
        %v4924 = vsel %vm1114, %v4789, %v4859
        %v4925 = vsel %vm1114, %v4791, %v4861
        %v4926 = vsel %vm1114, %v4793, %v4863
        %v4927 = vsel %vm1114, %v4795, %v4865
        %v4928 = vsel %vm1114, %v4797, %v4867
        %v4929 = vsel %vm1114, %v4799, %v4869
        %v4930 = vpack.c.bf16 %v4910, %v4890
        %v4931 = vpack.c.bf16 %v4831, %v4831
        %v4932 = vpack.c.bf16 %v4911, %v4891
        %v4933 = vpack.c.bf16 %v4833, %v4833
        %v4934 = vpack.c.bf16 %v4912, %v4892
        %v4935 = vpack.c.bf16 %v4835, %v4835
        %v4936 = vpack.c.bf16 %v4913, %v4893
        %v4937 = vpack.c.bf16 %v4837, %v4837
        %v4938 = vpack.c.bf16 %v4914, %v4894
        %v4939 = vpack.c.bf16 %v4839, %v4839
        %v4940 = vpack.c.bf16 %v4915, %v4895
        %v4941 = vpack.c.bf16 %v4841, %v4841
        %v4942 = vpack.c.bf16 %v4916, %v4896
        %v4943 = vpack.c.bf16 %v4843, %v4843
        %v4944 = vpack.c.bf16 %v4917, %v4897
        %v4945 = vpack.c.bf16 %v4845, %v4845
        %v4946 = vpack.c.bf16 %v4918, %v4898
        %v4947 = vpack.c.bf16 %v4847, %v4847
        %v4948 = vpack.c.bf16 %v4919, %v4899
        %v4949 = vpack.c.bf16 %v4849, %v4849
        %v4950 = vpack.c.bf16 %v4920, %v4900
        %v4951 = vpack.c.bf16 %v4851, %v4851
        %v4952 = vpack.c.bf16 %v4921, %v4901
        %v4953 = vpack.c.bf16 %v4853, %v4853
        %v4954 = vpack.c.bf16 %v4922, %v4902
        %v4955 = vpack.c.bf16 %v4855, %v4855
        %v4956 = vpack.c.bf16 %v4923, %v4903
        %v4957 = vpack.c.bf16 %v4857, %v4857
        %v4958 = vpack.c.bf16 %v4924, %v4904
        %v4959 = vpack.c.bf16 %v4859, %v4859
        %v4960 = vpack.c.bf16 %v4925, %v4905
        %v4961 = vpack.c.bf16 %v4861, %v4861
        %v4962 = vpack.c.bf16 %v4926, %v4906
        %v4963 = vpack.c.bf16 %v4863, %v4863
        %v4964 = vpack.c.bf16 %v4927, %v4907
        %v4965 = vpack.c.bf16 %v4865, %v4865
        %v4966 = vpack.c.bf16 %v4928, %v4908
        %v4967 = vpack.c.bf16 %v4867, %v4867
        %v4968 = vpack.c.bf16 %v4929, %v4909
        %v4969 = vpack.c.bf16 %v4869, %v4869
        %4970 = vst [vmem:[#allocation3] sm:$0xff] %v4930
        %vm4971 = vcmask 257024
        %4972 = vst.msk [vmem:[#allocation3 + $0x8] sm:$0xf] %vm4971, %v4931
        %4973 = vst [vmem:[#allocation3 + $0xc] sm:$0xff] %v4932
        %4974 = vst.msk [vmem:[#allocation3 + $0x14] sm:$0xf] %vm4971, %v4933
        %4975 = vst [vmem:[#allocation3 + $0x18] sm:$0xff] %v4934
        %4976 = vst.msk [vmem:[#allocation3 + $0x20] sm:$0xf] %vm4971, %v4935
        %4977 = vst [vmem:[#allocation3 + $0x24] sm:$0xff] %v4936
        %4978 = vst.msk [vmem:[#allocation3 + $0x2c] sm:$0xf] %vm4971, %v4937
        %4979 = vst [vmem:[#allocation3 + $0x30] sm:$0xff] %v4938
        %4980 = vst.msk [vmem:[#allocation3 + $0x38] sm:$0xf] %vm4971, %v4939
        %4981 = vst [vmem:[#allocation3 + $0x3c] sm:$0xff] %v4940
        %4982 = vst.msk [vmem:[#allocation3 + $0x44] sm:$0xf] %vm4971, %v4941
        %4983 = vst [vmem:[#allocation3 + $0x48] sm:$0xff] %v4942
        %4984 = vst.msk [vmem:[#allocation3 + $0x50] sm:$0xf] %vm4971, %v4943
        %4985 = vst [vmem:[#allocation3 + $0x54] sm:$0xff] %v4944
        %4986 = vst.msk [vmem:[#allocation3 + $0x5c] sm:$0xf] %vm4971, %v4945
        %4987 = vst [vmem:[#allocation3 + $0x60] sm:$0xff] %v4946
        %4988 = vst.msk [vmem:[#allocation3 + $0x68] sm:$0xf] %vm4971, %v4947
        %4989 = vst [vmem:[#allocation3 + $0x6c] sm:$0xff] %v4948
        %4990 = vst.msk [vmem:[#allocation3 + $0x74] sm:$0xf] %vm4971, %v4949
        %4991 = vst [vmem:[#allocation3 + $0x78] sm:$0xff] %v4950
        %4992 = vst.msk [vmem:[#allocation3 + $0x80] sm:$0xf] %vm4971, %v4951
        %4993 = vst [vmem:[#allocation3 + $0x84] sm:$0xff] %v4952
        %4994 = vst.msk [vmem:[#allocation3 + $0x8c] sm:$0xf] %vm4971, %v4953
        %4995 = vst [vmem:[#allocation3 + $0x90] sm:$0xff] %v4954
        %4996 = vst.msk [vmem:[#allocation3 + $0x98] sm:$0xf] %vm4971, %v4955
        %4997 = vst [vmem:[#allocation3 + $0x9c] sm:$0xff] %v4956
        %4998 = vst.msk [vmem:[#allocation3 + $0xa4] sm:$0xf] %vm4971, %v4957
        %4999 = vst [vmem:[#allocation3 + $0xa8] sm:$0xff] %v4958
        %5000 = vst.msk [vmem:[#allocation3 + $0xb0] sm:$0xf] %vm4971, %v4959
        %5001 = vst [vmem:[#allocation3 + $0xb4] sm:$0xff] %v4960
        %5002 = vst.msk [vmem:[#allocation3 + $0xbc] sm:$0xf] %vm4971, %v4961
        %5003 = vst [vmem:[#allocation3 + $0xc0] sm:$0xff] %v4962
        %5004 = vst.msk [vmem:[#allocation3 + $0xc8] sm:$0xf] %vm4971, %v4963
        %5005 = vst [vmem:[#allocation3 + $0xcc] sm:$0xff] %v4964
        %5006 = vst.msk [vmem:[#allocation3 + $0xd4] sm:$0xf] %vm4971, %v4965
        %5007 = vst [vmem:[#allocation3 + $0xd8] sm:$0xff] %v4966
        %5008 = vst.msk [vmem:[#allocation3 + $0xe0] sm:$0xf] %vm4971, %v4967
        %5009 = vst [vmem:[#allocation3 + $0xe4] sm:$0xff] %v4968
        %5010 = vst.msk [vmem:[#allocation3 + $0xec] sm:$0xf] %vm4971, %v4969
        %v5011 = vld [vmem:[%s10] sm:$0x1]
        %v5013 = vperm.slane %v5011, 0
        %v5015 = vld [vmem:[#allocation3] sm:$0xff]
        %v5016 = vld [vmem:[#allocation3 + $0x8] sm:$0xf]
        %v5017 = vld [vmem:[#allocation3 + $0xc] sm:$0xff]
        %v5018 = vld [vmem:[#allocation3 + $0x14] sm:$0xf]
        %v5019 = vld [vmem:[#allocation3 + $0x18] sm:$0xff]
        %v5020 = vld [vmem:[#allocation3 + $0x20] sm:$0xf]
        %v5021 = vld [vmem:[#allocation3 + $0x24] sm:$0xff]
        %v5022 = vld [vmem:[#allocation3 + $0x2c] sm:$0xf]
        %v5023 = vld [vmem:[#allocation3 + $0x30] sm:$0xff]
        %v5024 = vld [vmem:[#allocation3 + $0x38] sm:$0xf]
        %v5025 = vld [vmem:[#allocation3 + $0x3c] sm:$0xff]
        %v5026 = vld [vmem:[#allocation3 + $0x44] sm:$0xf]
        %v5027 = vld [vmem:[#allocation3 + $0x48] sm:$0xff]
        %v5028 = vld [vmem:[#allocation3 + $0x50] sm:$0xf]
        %v5029 = vld [vmem:[#allocation3 + $0x54] sm:$0xff]
        %v5030 = vld [vmem:[#allocation3 + $0x5c] sm:$0xf]
        %v5031 = vld [vmem:[#allocation3 + $0x60] sm:$0xff]
        %v5032 = vld [vmem:[#allocation3 + $0x68] sm:$0xf]
        %v5033 = vld [vmem:[#allocation3 + $0x6c] sm:$0xff]
        %v5034 = vld [vmem:[#allocation3 + $0x74] sm:$0xf]
        %v5035 = vld [vmem:[#allocation3 + $0x78] sm:$0xff]
        %v5036 = vld [vmem:[#allocation3 + $0x80] sm:$0xf]
        %v5037 = vld [vmem:[#allocation3 + $0x84] sm:$0xff]
        %v5038 = vld [vmem:[#allocation3 + $0x8c] sm:$0xf]
        %v5039 = vld [vmem:[#allocation3 + $0x90] sm:$0xff]
        %v5040 = vld [vmem:[#allocation3 + $0x98] sm:$0xf]
        %v5041 = vld [vmem:[#allocation3 + $0x9c] sm:$0xff]
        %v5042 = vld [vmem:[#allocation3 + $0xa4] sm:$0xf]
        %v5043 = vld [vmem:[#allocation3 + $0xa8] sm:$0xff]
        %v5044 = vld [vmem:[#allocation3 + $0xb0] sm:$0xf]
        %v5045 = vld [vmem:[#allocation3 + $0xb4] sm:$0xff]
        %v5046 = vld [vmem:[#allocation3 + $0xbc] sm:$0xf]
        %v5047 = vld [vmem:[%s9] sm:$0xf]
        %v5048 = vld [vmem:[%s9 + $0x4] sm:$0xf]
        %v5049 = vld [vmem:[%s9 + $0x8] sm:$0xf]
        %v5050 = vld [vmem:[%s9 + $0xc] sm:$0xf]
        %v5051 = vld [vmem:[%s9 + $0x10] sm:$0xf]
        %v5052 = vld [vmem:[%s9 + $0x14] sm:$0xf]
        %v5053 = vld [vmem:[%s9 + $0x18] sm:$0xf]
        %v5054 = vld [vmem:[%s9 + $0x1c] sm:$0xf]
        %v5055 = vld [vmem:[%s9 + $0x20] sm:$0xf]
        %v5056 = vld [vmem:[%s9 + $0x24] sm:$0xf]
        %v5057 = vld [vmem:[%s9 + $0x28] sm:$0xf]
        %v5058 = vld [vmem:[%s9 + $0x2c] sm:$0xf]
        %v5059 = vld [vmem:[%s9 + $0x30] sm:$0xf]
        %v5060 = vld [vmem:[%s9 + $0x34] sm:$0xf]
        %v5061 = vld [vmem:[%s9 + $0x38] sm:$0xf]
        %v5062 = vld [vmem:[%s9 + $0x3c] sm:$0xf]
        %v5063 = vld [vmem:[%s9 + $0x40] sm:$0xf]
        %v5064 = vld [vmem:[%s9 + $0x44] sm:$0xf]
        %v5065 = vld [vmem:[%s9 + $0x48] sm:$0xf]
        %v5066 = vld [vmem:[%s9 + $0x4c] sm:$0xf]
        %v5067 = vld [vmem:[%s9 + $0x50] sm:$0xf]
        %v5068 = vld [vmem:[%s9 + $0x54] sm:$0xf]
        %v5069 = vld [vmem:[%s9 + $0x58] sm:$0xf]
        %v5070 = vld [vmem:[%s9 + $0x5c] sm:$0xf]
        %v5071 = vld [vmem:[%s9 + $0x60] sm:$0xf]
        %v5072 = vld [vmem:[%s9 + $0x64] sm:$0xf]
        %v5073 = vld [vmem:[%s9 + $0x68] sm:$0xf]
        %v5074 = vld [vmem:[%s9 + $0x6c] sm:$0xf]
        %v5075 = vld [vmem:[%s9 + $0x70] sm:$0xf]
        %v5076 = vld [vmem:[%s9 + $0x74] sm:$0xf]
        %v5077 = vld [vmem:[%s9 + $0x78] sm:$0xf]
        %v5078 = vld [vmem:[%s9 + $0x7c] sm:$0xf]
        %v5079 = vld [vmem:[%s9 + $0x80] sm:$0xf]
        %v5080 = vld [vmem:[%s9 + $0x84] sm:$0xf]
        %v5081 = vld [vmem:[%s9 + $0x88] sm:$0xf]
        %v5082 = vld [vmem:[%s9 + $0x8c] sm:$0xf]
        %v5115 = vunpack.c.l.b16 %v5015
        %v5116 = vunpack.c.h.b16 %v5015
        %v5117 = vunpack.c.l.b16 %v5016
        %v5118 = vunpack.c.l.b16 %v5017
        %v5119 = vunpack.c.h.b16 %v5017
        %v5120 = vunpack.c.l.b16 %v5018
        %v5121 = vunpack.c.l.b16 %v5019
        %v5122 = vunpack.c.h.b16 %v5019
        %v5123 = vunpack.c.l.b16 %v5020
        %v5124 = vunpack.c.l.b16 %v5021
        %v5125 = vunpack.c.h.b16 %v5021
        %v5126 = vunpack.c.l.b16 %v5022
        %v5127 = vunpack.c.l.b16 %v5023
        %v5128 = vunpack.c.h.b16 %v5023
        %v5129 = vunpack.c.l.b16 %v5024
        %v5130 = vunpack.c.l.b16 %v5025
        %v5131 = vunpack.c.h.b16 %v5025
        %v5132 = vunpack.c.l.b16 %v5026
        %v5133 = vunpack.c.l.b16 %v5027
        %v5134 = vunpack.c.h.b16 %v5027
        %v5135 = vunpack.c.l.b16 %v5028
        %v5136 = vunpack.c.l.b16 %v5029
        %v5137 = vunpack.c.h.b16 %v5029
        %v5138 = vunpack.c.l.b16 %v5030
        %v5139 = vunpack.c.l.b16 %v5031
        %v5140 = vunpack.c.h.b16 %v5031
        %v5141 = vunpack.c.l.b16 %v5032
        %v5142 = vunpack.c.l.b16 %v5033
        %v5143 = vunpack.c.h.b16 %v5033
        %v5144 = vunpack.c.l.b16 %v5034
        %v5145 = vunpack.c.l.b16 %v5035
        %v5146 = vunpack.c.h.b16 %v5035
        %v5147 = vunpack.c.l.b16 %v5036
        %v5148 = vunpack.c.l.b16 %v5037
        %v5149 = vunpack.c.h.b16 %v5037
        %v5150 = vunpack.c.l.b16 %v5038
        %v5151 = vunpack.c.l.b16 %v5039
        %v5152 = vunpack.c.h.b16 %v5039
        %v5153 = vunpack.c.l.b16 %v5040
        %v5154 = vunpack.c.l.b16 %v5041
        %v5155 = vunpack.c.h.b16 %v5041
        %v5156 = vunpack.c.l.b16 %v5042
        %v5157 = vunpack.c.l.b16 %v5043
        %v5158 = vunpack.c.h.b16 %v5043
        %v5159 = vunpack.c.l.b16 %v5044
        %v5160 = vunpack.c.l.b16 %v5045
        %v5161 = vunpack.c.h.b16 %v5045
        %v5162 = vunpack.c.l.b16 %v5046
        %v5163 = vpack.c.b16 %v5118, %v5115
        %v5164 = vpack.c.b16 %v5119, %v5116
        %v5165 = vpack.c.b16 %v5120, %v5117
        %v5166 = vpack.c.b16 %v5124, %v5121
        %v5167 = vpack.c.b16 %v5125, %v5122
        %v5168 = vpack.c.b16 %v5126, %v5123
        %v5169 = vpack.c.b16 %v5130, %v5127
        %v5170 = vpack.c.b16 %v5131, %v5128
        %v5171 = vpack.c.b16 %v5132, %v5129
        %v5172 = vpack.c.b16 %v5136, %v5133
        %v5173 = vpack.c.b16 %v5137, %v5134
        %v5174 = vpack.c.b16 %v5138, %v5135
        %v5175 = vpack.c.b16 %v5142, %v5139
        %v5176 = vpack.c.b16 %v5143, %v5140
        %v5177 = vpack.c.b16 %v5144, %v5141
        %v5178 = vpack.c.b16 %v5148, %v5145
        %v5179 = vpack.c.b16 %v5149, %v5146
        %v5180 = vpack.c.b16 %v5150, %v5147
        %v5181 = vpack.c.b16 %v5154, %v5151
        %v5182 = vpack.c.b16 %v5155, %v5152
        %v5183 = vpack.c.b16 %v5156, %v5153
        %v5184 = vpack.c.b16 %v5160, %v5157
        %v5185 = vpack.c.b16 %v5161, %v5158
        %v5186 = vpack.c.b16 %v5162, %v5159
        %v5239 = vunpack.c.l.b16 %v5047
        %v5240 = vunpack.c.l.b16 %v5048
        %v5241 = vunpack.c.l.b16 %v5049
        %v5242 = vunpack.c.l.b16 %v5050
        %v5243 = vunpack.c.l.b16 %v5051
        %v5244 = vunpack.c.l.b16 %v5052
        %v5245 = vunpack.c.l.b16 %v5053
        %v5246 = vunpack.c.l.b16 %v5054
        %v5247 = vunpack.c.l.b16 %v5055
        %v5248 = vunpack.c.l.b16 %v5056
        %v5249 = vunpack.c.l.b16 %v5057
        %v5250 = vunpack.c.l.b16 %v5058
        %v5251 = vunpack.c.l.b16 %v5059
        %v5252 = vunpack.c.l.b16 %v5060
        %v5253 = vunpack.c.l.b16 %v5061
        %v5254 = vunpack.c.l.b16 %v5062
        %v5255 = vunpack.c.l.b16 %v5063
        %v5256 = vunpack.c.l.b16 %v5064
        %v5257 = vunpack.c.l.b16 %v5065
        %v5258 = vunpack.c.l.b16 %v5066
        %v5259 = vunpack.c.l.b16 %v5067
        %v5260 = vunpack.c.l.b16 %v5068
        %v5261 = vunpack.c.l.b16 %v5069
        %v5262 = vunpack.c.l.b16 %v5070
        %v5263 = vunpack.c.l.b16 %v5071
        %v5264 = vunpack.c.l.b16 %v5072
        %v5265 = vunpack.c.l.b16 %v5073
        %v5266 = vunpack.c.l.b16 %v5074
        %v5267 = vunpack.c.l.b16 %v5075
        %v5268 = vunpack.c.l.b16 %v5076
        %v5269 = vunpack.c.l.b16 %v5077
        %v5270 = vunpack.c.l.b16 %v5078
        %v5271 = vunpack.c.l.b16 %v5079
        %v5272 = vunpack.c.l.b16 %v5080
        %v5273 = vunpack.c.l.b16 %v5081
        %v5274 = vunpack.c.l.b16 %v5082
        %v5275 = vpack.c.b16 %v5240, %v5239
        %v5276 = vpack.c.b16 %v5242, %v5241
        %v5277 = vpack.c.b16 %v5244, %v5243
        %v5278 = vpack.c.b16 %v5246, %v5245
        %v5279 = vpack.c.b16 %v5248, %v5247
        %v5280 = vpack.c.b16 %v5250, %v5249
        %v5281 = vpack.c.b16 %v5252, %v5251
        %v5282 = vpack.c.b16 %v5254, %v5253
        %v5283 = vpack.c.b16 %v5256, %v5255
        %v5284 = vpack.c.b16 %v5258, %v5257
        %v5285 = vpack.c.b16 %v5260, %v5259
        %v5286 = vpack.c.b16 %v5262, %v5261
        %v5287 = vpack.c.b16 %v5264, %v5263
        %v5288 = vpack.c.b16 %v5266, %v5265
        %v5289 = vpack.c.b16 %v5268, %v5267
        %v5290 = vpack.c.b16 %v5270, %v5269
        %v5291 = vpack.c.b16 %v5272, %v5271
        %v5292 = vpack.c.b16 %v5274, %v5273
        %v5312 = vsel %vm1081, %v5165, 0
        %v5315 = vsel %vm1081, %v5168, 0
        %v5318 = vsel %vm1081, %v5171, 0
        %v5321 = vsel %vm1081, %v5174, 0
        %v5324 = vsel %vm1081, %v5177, 0
        %v5327 = vsel %vm1081, %v5180, 0
        %v5330 = vsel %vm1081, %v5183, 0
        %v5333 = vsel %vm1081, %v5186, 0
        %5335 = vmatpush.bf16.msra.mxu0 %v5282
        %5336 = vmatpush.bf16.msra.mxu0 %v5281
        %5337 = vmatpush.bf16.msra.mxu0 %v5280
        %5338 = vmatpush.bf16.msra.mxu0 %v5279
        %5339 = vmatpush.bf16.msra.mxu0 %v5278
        %5340 = vmatpush.bf16.msra.mxu0 %v5277
        %5341 = vmatpush.bf16.msra.mxu0 %v5276
        %5342 = vmatpush.bf16.msra.mxu0 %v5275
        %5343 = vmatmul.bf16.gmra.mxu0 %v5163
        %v5344 = vpop.f32.mrf.mxu0
        %v5345 = vadd.f32 0.0, %v5344
        %v5346 = vpop.f32.mrf.mxu0
        %v5347 = vadd.f32 0.0, %v5346
        %5348 = vmatmul.bf16.gmra.mxu0 %v5166
        %v5349 = vpop.f32.mrf.mxu0
        %v5350 = vadd.f32 0.0, %v5349
        %v5351 = vpop.f32.mrf.mxu0
        %v5352 = vadd.f32 0.0, %v5351
        %5353 = vmatmul.bf16.gmra.mxu0 %v5169
        %v5354 = vpop.f32.mrf.mxu0
        %v5355 = vadd.f32 0.0, %v5354
        %v5356 = vpop.f32.mrf.mxu0
        %v5357 = vadd.f32 0.0, %v5356
        %5358 = vmatmul.bf16.gmra.mxu0 %v5172
        %v5359 = vpop.f32.mrf.mxu0
        %v5360 = vadd.f32 0.0, %v5359
        %v5361 = vpop.f32.mrf.mxu0
        %v5362 = vadd.f32 0.0, %v5361
        %5363 = vmatmul.bf16.gmra.mxu0 %v5175
        %v5364 = vpop.f32.mrf.mxu0
        %v5365 = vadd.f32 0.0, %v5364
        %v5366 = vpop.f32.mrf.mxu0
        %v5367 = vadd.f32 0.0, %v5366
        %5368 = vmatmul.bf16.gmra.mxu0 %v5178
        %v5369 = vpop.f32.mrf.mxu0
        %v5370 = vadd.f32 0.0, %v5369
        %v5371 = vpop.f32.mrf.mxu0
        %v5372 = vadd.f32 0.0, %v5371
        %5373 = vmatmul.bf16.gmra.mxu0 %v5181
        %v5374 = vpop.f32.mrf.mxu0
        %v5375 = vadd.f32 0.0, %v5374
        %v5376 = vpop.f32.mrf.mxu0
        %v5377 = vadd.f32 0.0, %v5376
        %5378 = vmatmul.bf16.gmra.mxu0 %v5184
        %v5379 = vpop.f32.mrf.mxu0
        %v5380 = vadd.f32 0.0, %v5379
        %v5381 = vpop.f32.mrf.mxu0
        %v5382 = vadd.f32 0.0, %v5381
        %5383 = vdwg.mxu0
        %5384 = vmatpush.bf16.msra.mxu0 %v5290
        %5385 = vmatpush.bf16.msra.mxu0 %v5289
        %5386 = vmatpush.bf16.msra.mxu0 %v5288
        %5387 = vmatpush.bf16.msra.mxu0 %v5287
        %5388 = vmatpush.bf16.msra.mxu0 %v5286
        %5389 = vmatpush.bf16.msra.mxu0 %v5285
        %5390 = vmatpush.bf16.msra.mxu0 %v5284
        %5391 = vmatpush.bf16.msra.mxu0 %v5283
        %5392 = vmatmul.bf16.gmra.mxu0 %v5164
        %v5393 = vpop.f32.mrf.mxu0
        %v5394 = vadd.f32 %v5345, %v5393
        %v5395 = vpop.f32.mrf.mxu0
        %v5396 = vadd.f32 %v5347, %v5395
        %5397 = vmatmul.bf16.gmra.mxu0 %v5167
        %v5398 = vpop.f32.mrf.mxu0
        %v5399 = vadd.f32 %v5350, %v5398
        %v5400 = vpop.f32.mrf.mxu0
        %v5401 = vadd.f32 %v5352, %v5400
        %5402 = vmatmul.bf16.gmra.mxu0 %v5170
        %v5403 = vpop.f32.mrf.mxu0
        %v5404 = vadd.f32 %v5355, %v5403
        %v5405 = vpop.f32.mrf.mxu0
        %v5406 = vadd.f32 %v5357, %v5405
        %5407 = vmatmul.bf16.gmra.mxu0 %v5173
        %v5408 = vpop.f32.mrf.mxu0
        %v5409 = vadd.f32 %v5360, %v5408
        %v5410 = vpop.f32.mrf.mxu0
        %v5411 = vadd.f32 %v5362, %v5410
        %5412 = vmatmul.bf16.gmra.mxu0 %v5176
        %v5413 = vpop.f32.mrf.mxu0
        %v5414 = vadd.f32 %v5365, %v5413
        %v5415 = vpop.f32.mrf.mxu0
        %v5416 = vadd.f32 %v5367, %v5415
        %5417 = vmatmul.bf16.gmra.mxu0 %v5179
        %v5418 = vpop.f32.mrf.mxu0
        %v5419 = vadd.f32 %v5370, %v5418
        %v5420 = vpop.f32.mrf.mxu0
        %v5421 = vadd.f32 %v5372, %v5420
        %5422 = vmatmul.bf16.gmra.mxu0 %v5182
        %v5423 = vpop.f32.mrf.mxu0
        %v5424 = vadd.f32 %v5375, %v5423
        %v5425 = vpop.f32.mrf.mxu0
        %v5426 = vadd.f32 %v5377, %v5425
        %5427 = vmatmul.bf16.gmra.mxu0 %v5185
        %v5428 = vpop.f32.mrf.mxu0
        %v5429 = vadd.f32 %v5380, %v5428
        %v5430 = vpop.f32.mrf.mxu0
        %v5431 = vadd.f32 %v5382, %v5430
        %5432 = vdwg.mxu0
        %5433 = vmatpush.bf16.msra.mxu0 0
        %5434 = vmatpush.bf16.msra.mxu0 0
        %5435 = vmatpush.bf16.msra.mxu0 0
        %5436 = vmatpush.bf16.msra.mxu0 0
        %5437 = vmatpush.bf16.msra.mxu0 0
        %5438 = vmatpush.bf16.msra.mxu0 0
        %5439 = vmatpush.bf16.msra.mxu0 %v5292
        %5440 = vmatpush.bf16.msra.mxu0 %v5291
        %5441 = vmatmul.bf16.gmra.mxu0 %v5312
        %v5442 = vpop.f32.mrf.mxu0
        %v5443 = vadd.f32 %v5394, %v5442
        %v5444 = vpop.f32.mrf.mxu0
        %v5445 = vadd.f32 %v5396, %v5444
        %5446 = vmatmul.bf16.gmra.mxu0 %v5315
        %v5447 = vpop.f32.mrf.mxu0
        %v5448 = vadd.f32 %v5399, %v5447
        %v5449 = vpop.f32.mrf.mxu0
        %v5450 = vadd.f32 %v5401, %v5449
        %5451 = vmatmul.bf16.gmra.mxu0 %v5318
        %v5452 = vpop.f32.mrf.mxu0
        %v5453 = vadd.f32 %v5404, %v5452
        %v5454 = vpop.f32.mrf.mxu0
        %v5455 = vadd.f32 %v5406, %v5454
        %5456 = vmatmul.bf16.gmra.mxu0 %v5321
        %v5457 = vpop.f32.mrf.mxu0
        %v5458 = vadd.f32 %v5409, %v5457
        %v5459 = vpop.f32.mrf.mxu0
        %v5460 = vadd.f32 %v5411, %v5459
        %5461 = vmatmul.bf16.gmra.mxu0 %v5324
        %v5462 = vpop.f32.mrf.mxu0
        %v5463 = vadd.f32 %v5414, %v5462
        %v5464 = vpop.f32.mrf.mxu0
        %v5465 = vadd.f32 %v5416, %v5464
        %5466 = vmatmul.bf16.gmra.mxu0 %v5327
        %v5467 = vpop.f32.mrf.mxu0
        %v5468 = vadd.f32 %v5419, %v5467
        %v5469 = vpop.f32.mrf.mxu0
        %v5470 = vadd.f32 %v5421, %v5469
        %5471 = vmatmul.bf16.gmra.mxu0 %v5330
        %v5472 = vpop.f32.mrf.mxu0
        %v5473 = vadd.f32 %v5424, %v5472
        %v5474 = vpop.f32.mrf.mxu0
        %v5475 = vadd.f32 %v5426, %v5474
        %5476 = vmatmul.bf16.gmra.mxu0 %v5333
        %v5477 = vpop.f32.mrf.mxu0
        %v5478 = vadd.f32 %v5429, %v5477
        %v5479 = vpop.f32.mrf.mxu0
        %v5480 = vadd.f32 %v5431, %v5479
        %5481 = vdwg.mxu0
        %v5482 = vadd.f32 %v5013, %v5443
        %v5483 = vadd.f32 %v5013, %v5445
        %v5484 = vadd.f32 %v5013, %v5448
        %v5485 = vadd.f32 %v5013, %v5450
        %v5486 = vadd.f32 %v5013, %v5453
        %v5487 = vadd.f32 %v5013, %v5455
        %v5488 = vadd.f32 %v5013, %v5458
        %v5489 = vadd.f32 %v5013, %v5460
        %v5490 = vadd.f32 %v5013, %v5463
        %v5491 = vadd.f32 %v5013, %v5465
        %v5492 = vadd.f32 %v5013, %v5468
        %v5493 = vadd.f32 %v5013, %v5470
        %v5494 = vadd.f32 %v5013, %v5473
        %v5495 = vadd.f32 %v5013, %v5475
        %v5496 = vadd.f32 %v5013, %v5478
        %v5497 = vadd.f32 %v5013, %v5480
        %s5498 = scalar_lea.vmem [#allocation3], 24
        %v5499 = vld [vmem:[%s5498] sm:$0xff]
        %v5500 = vld [vmem:[%s5498 + $0x8] sm:$0xf]
        %v5501 = vld [vmem:[%s5498 + $0xc] sm:$0xff]
        %v5502 = vld [vmem:[%s5498 + $0x14] sm:$0xf]
        %v5503 = vld [vmem:[%s5498 + $0x18] sm:$0xff]
        %v5504 = vld [vmem:[%s5498 + $0x20] sm:$0xf]
        %v5505 = vld [vmem:[%s5498 + $0x24] sm:$0xff]
        %v5506 = vld [vmem:[%s5498 + $0x2c] sm:$0xf]
        %v5507 = vld [vmem:[%s5498 + $0x30] sm:$0xff]
        %v5508 = vld [vmem:[%s5498 + $0x38] sm:$0xf]
        %v5509 = vld [vmem:[%s5498 + $0x3c] sm:$0xff]
        %v5510 = vld [vmem:[%s5498 + $0x44] sm:$0xf]
        %v5511 = vld [vmem:[%s5498 + $0x48] sm:$0xff]
        %v5512 = vld [vmem:[%s5498 + $0x50] sm:$0xf]
        %v5513 = vld [vmem:[%s5498 + $0x54] sm:$0xff]
        %v5514 = vld [vmem:[%s5498 + $0x5c] sm:$0xf]
        %v5515 = vld [vmem:[%s5498 + $0x60] sm:$0xff]
        %v5516 = vld [vmem:[%s5498 + $0x68] sm:$0xf]
        %v5517 = vld [vmem:[%s5498 + $0x6c] sm:$0xff]
        %v5518 = vld [vmem:[%s5498 + $0x74] sm:$0xf]
        %v5519 = vld [vmem:[%s5498 + $0x78] sm:$0xff]
        %v5520 = vld [vmem:[%s5498 + $0x80] sm:$0xf]
        %v5521 = vld [vmem:[%s5498 + $0x84] sm:$0xff]
        %v5522 = vld [vmem:[%s5498 + $0x8c] sm:$0xf]
        %v5523 = vld [vmem:[%s5498 + $0x90] sm:$0xff]
        %v5524 = vld [vmem:[%s5498 + $0x98] sm:$0xf]
        %v5525 = vld [vmem:[%s5498 + $0x9c] sm:$0xff]
        %v5526 = vld [vmem:[%s5498 + $0xa4] sm:$0xf]
        %v5527 = vld [vmem:[%s5498 + $0xa8] sm:$0xff]
        %v5528 = vld [vmem:[%s5498 + $0xb0] sm:$0xf]
        %v5529 = vld [vmem:[%s5498 + $0xb4] sm:$0xff]
        %v5530 = vld [vmem:[%s5498 + $0xbc] sm:$0xf]
        %s5531 = scalar_lea.vmem %s9, 144
        %v5532 = vld [vmem:[%s5531] sm:$0xf]
        %v5533 = vld [vmem:[%s5531 + $0x4] sm:$0xf]
        %v5534 = vld [vmem:[%s5531 + $0x8] sm:$0xf]
        %v5535 = vld [vmem:[%s5531 + $0xc] sm:$0xf]
        %v5536 = vld [vmem:[%s5531 + $0x10] sm:$0xf]
        %v5537 = vld [vmem:[%s5531 + $0x14] sm:$0xf]
        %v5538 = vld [vmem:[%s5531 + $0x18] sm:$0xf]
        %v5539 = vld [vmem:[%s5531 + $0x1c] sm:$0xf]
        %v5540 = vld [vmem:[%s5531 + $0x20] sm:$0xf]
        %v5541 = vld [vmem:[%s5531 + $0x24] sm:$0xf]
        %v5542 = vld [vmem:[%s5531 + $0x28] sm:$0xf]
        %v5543 = vld [vmem:[%s5531 + $0x2c] sm:$0xf]
        %v5544 = vld [vmem:[%s5531 + $0x30] sm:$0xf]
        %v5545 = vld [vmem:[%s5531 + $0x34] sm:$0xf]
        %v5546 = vld [vmem:[%s5531 + $0x38] sm:$0xf]
        %v5547 = vld [vmem:[%s5531 + $0x3c] sm:$0xf]
        %v5548 = vld [vmem:[%s5531 + $0x40] sm:$0xf]
        %v5549 = vld [vmem:[%s5531 + $0x44] sm:$0xf]
        %v5550 = vld [vmem:[%s5531 + $0x48] sm:$0xf]
        %v5551 = vld [vmem:[%s5531 + $0x4c] sm:$0xf]
        %v5552 = vld [vmem:[%s5531 + $0x50] sm:$0xf]
        %v5553 = vld [vmem:[%s5531 + $0x54] sm:$0xf]
        %v5554 = vld [vmem:[%s5531 + $0x58] sm:$0xf]
        %v5555 = vld [vmem:[%s5531 + $0x5c] sm:$0xf]
        %v5556 = vld [vmem:[%s5531 + $0x60] sm:$0xf]
        %v5557 = vld [vmem:[%s5531 + $0x64] sm:$0xf]
        %v5558 = vld [vmem:[%s5531 + $0x68] sm:$0xf]
        %v5559 = vld [vmem:[%s5531 + $0x6c] sm:$0xf]
        %v5560 = vld [vmem:[%s5531 + $0x70] sm:$0xf]
        %v5561 = vld [vmem:[%s5531 + $0x74] sm:$0xf]
        %v5562 = vld [vmem:[%s5531 + $0x78] sm:$0xf]
        %v5563 = vld [vmem:[%s5531 + $0x7c] sm:$0xf]
        %v5564 = vld [vmem:[%s5531 + $0x80] sm:$0xf]
        %v5565 = vld [vmem:[%s5531 + $0x84] sm:$0xf]
        %v5566 = vld [vmem:[%s5531 + $0x88] sm:$0xf]
        %v5567 = vld [vmem:[%s5531 + $0x8c] sm:$0xf]
        %v5600 = vunpack.c.l.b16 %v5499
        %v5601 = vunpack.c.h.b16 %v5499
        %v5602 = vunpack.c.l.b16 %v5500
        %v5603 = vunpack.c.l.b16 %v5501
        %v5604 = vunpack.c.h.b16 %v5501
        %v5605 = vunpack.c.l.b16 %v5502
        %v5606 = vunpack.c.l.b16 %v5503
        %v5607 = vunpack.c.h.b16 %v5503
        %v5608 = vunpack.c.l.b16 %v5504
        %v5609 = vunpack.c.l.b16 %v5505
        %v5610 = vunpack.c.h.b16 %v5505
        %v5611 = vunpack.c.l.b16 %v5506
        %v5612 = vunpack.c.l.b16 %v5507
        %v5613 = vunpack.c.h.b16 %v5507
        %v5614 = vunpack.c.l.b16 %v5508
        %v5615 = vunpack.c.l.b16 %v5509
        %v5616 = vunpack.c.h.b16 %v5509
        %v5617 = vunpack.c.l.b16 %v5510
        %v5618 = vunpack.c.l.b16 %v5511
        %v5619 = vunpack.c.h.b16 %v5511
        %v5620 = vunpack.c.l.b16 %v5512
        %v5621 = vunpack.c.l.b16 %v5513
        %v5622 = vunpack.c.h.b16 %v5513
        %v5623 = vunpack.c.l.b16 %v5514
        %v5624 = vunpack.c.l.b16 %v5515
        %v5625 = vunpack.c.h.b16 %v5515
        %v5626 = vunpack.c.l.b16 %v5516
        %v5627 = vunpack.c.l.b16 %v5517
        %v5628 = vunpack.c.h.b16 %v5517
        %v5629 = vunpack.c.l.b16 %v5518
        %v5630 = vunpack.c.l.b16 %v5519
        %v5631 = vunpack.c.h.b16 %v5519
        %v5632 = vunpack.c.l.b16 %v5520
        %v5633 = vunpack.c.l.b16 %v5521
        %v5634 = vunpack.c.h.b16 %v5521
        %v5635 = vunpack.c.l.b16 %v5522
        %v5636 = vunpack.c.l.b16 %v5523
        %v5637 = vunpack.c.h.b16 %v5523
        %v5638 = vunpack.c.l.b16 %v5524
        %v5639 = vunpack.c.l.b16 %v5525
        %v5640 = vunpack.c.h.b16 %v5525
        %v5641 = vunpack.c.l.b16 %v5526
        %v5642 = vunpack.c.l.b16 %v5527
        %v5643 = vunpack.c.h.b16 %v5527
        %v5644 = vunpack.c.l.b16 %v5528
        %v5645 = vunpack.c.l.b16 %v5529
        %v5646 = vunpack.c.h.b16 %v5529
        %v5647 = vunpack.c.l.b16 %v5530
        %v5648 = vpack.c.b16 %v5603, %v5600
        %v5649 = vpack.c.b16 %v5604, %v5601
        %v5650 = vpack.c.b16 %v5605, %v5602
        %v5651 = vpack.c.b16 %v5609, %v5606
        %v5652 = vpack.c.b16 %v5610, %v5607
        %v5653 = vpack.c.b16 %v5611, %v5608
        %v5654 = vpack.c.b16 %v5615, %v5612
        %v5655 = vpack.c.b16 %v5616, %v5613
        %v5656 = vpack.c.b16 %v5617, %v5614
        %v5657 = vpack.c.b16 %v5621, %v5618
        %v5658 = vpack.c.b16 %v5622, %v5619
        %v5659 = vpack.c.b16 %v5623, %v5620
        %v5660 = vpack.c.b16 %v5627, %v5624
        %v5661 = vpack.c.b16 %v5628, %v5625
        %v5662 = vpack.c.b16 %v5629, %v5626
        %v5663 = vpack.c.b16 %v5633, %v5630
        %v5664 = vpack.c.b16 %v5634, %v5631
        %v5665 = vpack.c.b16 %v5635, %v5632
        %v5666 = vpack.c.b16 %v5639, %v5636
        %v5667 = vpack.c.b16 %v5640, %v5637
        %v5668 = vpack.c.b16 %v5641, %v5638
        %v5669 = vpack.c.b16 %v5645, %v5642
        %v5670 = vpack.c.b16 %v5646, %v5643
        %v5671 = vpack.c.b16 %v5647, %v5644
        %v5724 = vunpack.c.l.b16 %v5532
        %v5725 = vunpack.c.l.b16 %v5533
        %v5726 = vunpack.c.l.b16 %v5534
        %v5727 = vunpack.c.l.b16 %v5535
        %v5728 = vunpack.c.l.b16 %v5536
        %v5729 = vunpack.c.l.b16 %v5537
        %v5730 = vunpack.c.l.b16 %v5538
        %v5731 = vunpack.c.l.b16 %v5539
        %v5732 = vunpack.c.l.b16 %v5540
        %v5733 = vunpack.c.l.b16 %v5541
        %v5734 = vunpack.c.l.b16 %v5542
        %v5735 = vunpack.c.l.b16 %v5543
        %v5736 = vunpack.c.l.b16 %v5544
        %v5737 = vunpack.c.l.b16 %v5545
        %v5738 = vunpack.c.l.b16 %v5546
        %v5739 = vunpack.c.l.b16 %v5547
        %v5740 = vunpack.c.l.b16 %v5548
        %v5741 = vunpack.c.l.b16 %v5549
        %v5742 = vunpack.c.l.b16 %v5550
        %v5743 = vunpack.c.l.b16 %v5551
        %v5744 = vunpack.c.l.b16 %v5552
        %v5745 = vunpack.c.l.b16 %v5553
        %v5746 = vunpack.c.l.b16 %v5554
        %v5747 = vunpack.c.l.b16 %v5555
        %v5748 = vunpack.c.l.b16 %v5556
        %v5749 = vunpack.c.l.b16 %v5557
        %v5750 = vunpack.c.l.b16 %v5558
        %v5751 = vunpack.c.l.b16 %v5559
        %v5752 = vunpack.c.l.b16 %v5560
        %v5753 = vunpack.c.l.b16 %v5561
        %v5754 = vunpack.c.l.b16 %v5562
        %v5755 = vunpack.c.l.b16 %v5563
        %v5756 = vunpack.c.l.b16 %v5564
        %v5757 = vunpack.c.l.b16 %v5565
        %v5758 = vunpack.c.l.b16 %v5566
        %v5759 = vunpack.c.l.b16 %v5567
        %v5760 = vpack.c.b16 %v5725, %v5724
        %v5761 = vpack.c.b16 %v5727, %v5726
        %v5762 = vpack.c.b16 %v5729, %v5728
        %v5763 = vpack.c.b16 %v5731, %v5730
        %v5764 = vpack.c.b16 %v5733, %v5732
        %v5765 = vpack.c.b16 %v5735, %v5734
        %v5766 = vpack.c.b16 %v5737, %v5736
        %v5767 = vpack.c.b16 %v5739, %v5738
        %v5768 = vpack.c.b16 %v5741, %v5740
        %v5769 = vpack.c.b16 %v5743, %v5742
        %v5770 = vpack.c.b16 %v5745, %v5744
        %v5771 = vpack.c.b16 %v5747, %v5746
        %v5772 = vpack.c.b16 %v5749, %v5748
        %v5773 = vpack.c.b16 %v5751, %v5750
        %v5774 = vpack.c.b16 %v5753, %v5752
        %v5775 = vpack.c.b16 %v5755, %v5754
        %v5776 = vpack.c.b16 %v5757, %v5756
        %v5777 = vpack.c.b16 %v5759, %v5758
        %v5797 = vsel %vm1081, %v5650, 0
        %v5800 = vsel %vm1081, %v5653, 0
        %v5803 = vsel %vm1081, %v5656, 0
        %v5806 = vsel %vm1081, %v5659, 0
        %v5809 = vsel %vm1081, %v5662, 0
        %v5812 = vsel %vm1081, %v5665, 0
        %v5815 = vsel %vm1081, %v5668, 0
        %v5818 = vsel %vm1081, %v5671, 0
        %5820 = vmatpush.bf16.msra.mxu0 %v5767
        %5821 = vmatpush.bf16.msra.mxu0 %v5766
        %5822 = vmatpush.bf16.msra.mxu0 %v5765
        %5823 = vmatpush.bf16.msra.mxu0 %v5764
        %5824 = vmatpush.bf16.msra.mxu0 %v5763
        %5825 = vmatpush.bf16.msra.mxu0 %v5762
        %5826 = vmatpush.bf16.msra.mxu0 %v5761
        %5827 = vmatpush.bf16.msra.mxu0 %v5760
        %5828 = vmatmul.bf16.gmra.mxu0 %v5648
        %v5829 = vpop.f32.mrf.mxu0
        %v5830 = vadd.f32 0.0, %v5829
        %v5831 = vpop.f32.mrf.mxu0
        %v5832 = vadd.f32 0.0, %v5831
        %5833 = vmatmul.bf16.gmra.mxu0 %v5651
        %v5834 = vpop.f32.mrf.mxu0
        %v5835 = vadd.f32 0.0, %v5834
        %v5836 = vpop.f32.mrf.mxu0
        %v5837 = vadd.f32 0.0, %v5836
        %5838 = vmatmul.bf16.gmra.mxu0 %v5654
        %v5839 = vpop.f32.mrf.mxu0
        %v5840 = vadd.f32 0.0, %v5839
        %v5841 = vpop.f32.mrf.mxu0
        %v5842 = vadd.f32 0.0, %v5841
        %5843 = vmatmul.bf16.gmra.mxu0 %v5657
        %v5844 = vpop.f32.mrf.mxu0
        %v5845 = vadd.f32 0.0, %v5844
        %v5846 = vpop.f32.mrf.mxu0
        %v5847 = vadd.f32 0.0, %v5846
        %5848 = vmatmul.bf16.gmra.mxu0 %v5660
        %v5849 = vpop.f32.mrf.mxu0
        %v5850 = vadd.f32 0.0, %v5849
        %v5851 = vpop.f32.mrf.mxu0
        %v5852 = vadd.f32 0.0, %v5851
        %5853 = vmatmul.bf16.gmra.mxu0 %v5663
        %v5854 = vpop.f32.mrf.mxu0
        %v5855 = vadd.f32 0.0, %v5854
        %v5856 = vpop.f32.mrf.mxu0
        %v5857 = vadd.f32 0.0, %v5856
        %5858 = vmatmul.bf16.gmra.mxu0 %v5666
        %v5859 = vpop.f32.mrf.mxu0
        %v5860 = vadd.f32 0.0, %v5859
        %v5861 = vpop.f32.mrf.mxu0
        %v5862 = vadd.f32 0.0, %v5861
        %5863 = vmatmul.bf16.gmra.mxu0 %v5669
        %v5864 = vpop.f32.mrf.mxu0
        %v5865 = vadd.f32 0.0, %v5864
        %v5866 = vpop.f32.mrf.mxu0
        %v5867 = vadd.f32 0.0, %v5866
        %5868 = vdwg.mxu0
        %5869 = vmatpush.bf16.msra.mxu0 %v5775
        %5870 = vmatpush.bf16.msra.mxu0 %v5774
        %5871 = vmatpush.bf16.msra.mxu0 %v5773
        %5872 = vmatpush.bf16.msra.mxu0 %v5772
        %5873 = vmatpush.bf16.msra.mxu0 %v5771
        %5874 = vmatpush.bf16.msra.mxu0 %v5770
        %5875 = vmatpush.bf16.msra.mxu0 %v5769
        %5876 = vmatpush.bf16.msra.mxu0 %v5768
        %5877 = vmatmul.bf16.gmra.mxu0 %v5649
        %v5878 = vpop.f32.mrf.mxu0
        %v5879 = vadd.f32 %v5830, %v5878
        %v5880 = vpop.f32.mrf.mxu0
        %v5881 = vadd.f32 %v5832, %v5880
        %5882 = vmatmul.bf16.gmra.mxu0 %v5652
        %v5883 = vpop.f32.mrf.mxu0
        %v5884 = vadd.f32 %v5835, %v5883
        %v5885 = vpop.f32.mrf.mxu0
        %v5886 = vadd.f32 %v5837, %v5885
        %5887 = vmatmul.bf16.gmra.mxu0 %v5655
        %v5888 = vpop.f32.mrf.mxu0
        %v5889 = vadd.f32 %v5840, %v5888
        %v5890 = vpop.f32.mrf.mxu0
        %v5891 = vadd.f32 %v5842, %v5890
        %5892 = vmatmul.bf16.gmra.mxu0 %v5658
        %v5893 = vpop.f32.mrf.mxu0
        %v5894 = vadd.f32 %v5845, %v5893
        %v5895 = vpop.f32.mrf.mxu0
        %v5896 = vadd.f32 %v5847, %v5895
        %5897 = vmatmul.bf16.gmra.mxu0 %v5661
        %v5898 = vpop.f32.mrf.mxu0
        %v5899 = vadd.f32 %v5850, %v5898
        %v5900 = vpop.f32.mrf.mxu0
        %v5901 = vadd.f32 %v5852, %v5900
        %5902 = vmatmul.bf16.gmra.mxu0 %v5664
        %v5903 = vpop.f32.mrf.mxu0
        %v5904 = vadd.f32 %v5855, %v5903
        %v5905 = vpop.f32.mrf.mxu0
        %v5906 = vadd.f32 %v5857, %v5905
        %5907 = vmatmul.bf16.gmra.mxu0 %v5667
        %v5908 = vpop.f32.mrf.mxu0
        %v5909 = vadd.f32 %v5860, %v5908
        %v5910 = vpop.f32.mrf.mxu0
        %v5911 = vadd.f32 %v5862, %v5910
        %5912 = vmatmul.bf16.gmra.mxu0 %v5670
        %v5913 = vpop.f32.mrf.mxu0
        %v5914 = vadd.f32 %v5865, %v5913
        %v5915 = vpop.f32.mrf.mxu0
        %v5916 = vadd.f32 %v5867, %v5915
        %5917 = vdwg.mxu0
        %5918 = vmatpush.bf16.msra.mxu0 0
        %5919 = vmatpush.bf16.msra.mxu0 0
        %5920 = vmatpush.bf16.msra.mxu0 0
        %5921 = vmatpush.bf16.msra.mxu0 0
        %5922 = vmatpush.bf16.msra.mxu0 0
        %5923 = vmatpush.bf16.msra.mxu0 0
        %5924 = vmatpush.bf16.msra.mxu0 %v5777
        %5925 = vmatpush.bf16.msra.mxu0 %v5776
        %5926 = vmatmul.bf16.gmra.mxu0 %v5797
        %v5927 = vpop.f32.mrf.mxu0
        %v5928 = vadd.f32 %v5879, %v5927
        %v5929 = vpop.f32.mrf.mxu0
        %v5930 = vadd.f32 %v5881, %v5929
        %5931 = vmatmul.bf16.gmra.mxu0 %v5800
        %v5932 = vpop.f32.mrf.mxu0
        %v5933 = vadd.f32 %v5884, %v5932
        %v5934 = vpop.f32.mrf.mxu0
        %v5935 = vadd.f32 %v5886, %v5934
        %5936 = vmatmul.bf16.gmra.mxu0 %v5803
        %v5937 = vpop.f32.mrf.mxu0
        %v5938 = vadd.f32 %v5889, %v5937
        %v5939 = vpop.f32.mrf.mxu0
        %v5940 = vadd.f32 %v5891, %v5939
        %5941 = vmatmul.bf16.gmra.mxu0 %v5806
        %v5942 = vpop.f32.mrf.mxu0
        %v5943 = vadd.f32 %v5894, %v5942
        %v5944 = vpop.f32.mrf.mxu0
        %v5945 = vadd.f32 %v5896, %v5944
        %5946 = vmatmul.bf16.gmra.mxu0 %v5809
        %v5947 = vpop.f32.mrf.mxu0
        %v5948 = vadd.f32 %v5899, %v5947
        %v5949 = vpop.f32.mrf.mxu0
        %v5950 = vadd.f32 %v5901, %v5949
        %5951 = vmatmul.bf16.gmra.mxu0 %v5812
        %v5952 = vpop.f32.mrf.mxu0
        %v5953 = vadd.f32 %v5904, %v5952
        %v5954 = vpop.f32.mrf.mxu0
        %v5955 = vadd.f32 %v5906, %v5954
        %5956 = vmatmul.bf16.gmra.mxu0 %v5815
        %v5957 = vpop.f32.mrf.mxu0
        %v5958 = vadd.f32 %v5909, %v5957
        %v5959 = vpop.f32.mrf.mxu0
        %v5960 = vadd.f32 %v5911, %v5959
        %5961 = vmatmul.bf16.gmra.mxu0 %v5818
        %v5962 = vpop.f32.mrf.mxu0
        %v5963 = vadd.f32 %v5914, %v5962
        %v5964 = vpop.f32.mrf.mxu0
        %v5965 = vadd.f32 %v5916, %v5964
        %5966 = vdwg.mxu0
        %v5967 = vadd.f32 %v5482, %v5928
        %v5968 = vadd.f32 %v5483, %v5930
        %v5969 = vadd.f32 %v5484, %v5933
        %v5970 = vadd.f32 %v5485, %v5935
        %v5971 = vadd.f32 %v5486, %v5938
        %v5972 = vadd.f32 %v5487, %v5940
        %v5973 = vadd.f32 %v5488, %v5943
        %v5974 = vadd.f32 %v5489, %v5945
        %v5975 = vadd.f32 %v5490, %v5948
        %v5976 = vadd.f32 %v5491, %v5950
        %v5977 = vadd.f32 %v5492, %v5953
        %v5978 = vadd.f32 %v5493, %v5955
        %v5979 = vadd.f32 %v5494, %v5958
        %v5980 = vadd.f32 %v5495, %v5960
        %v5981 = vadd.f32 %v5496, %v5963
        %v5982 = vadd.f32 %v5497, %v5965
        %s5983 = scalar_lea.vmem [#allocation3], 48
        %v5984 = vld [vmem:[%s5983] sm:$0xff]
        %v5985 = vld [vmem:[%s5983 + $0x8] sm:$0xf]
        %v5986 = vld [vmem:[%s5983 + $0xc] sm:$0xff]
        %v5987 = vld [vmem:[%s5983 + $0x14] sm:$0xf]
        %v5988 = vld [vmem:[%s5983 + $0x18] sm:$0xff]
        %v5989 = vld [vmem:[%s5983 + $0x20] sm:$0xf]
        %v5990 = vld [vmem:[%s5983 + $0x24] sm:$0xff]
        %v5991 = vld [vmem:[%s5983 + $0x2c] sm:$0xf]
        %v5992 = vld [vmem:[%s5983 + $0x30] sm:$0xff]
        %v5993 = vld [vmem:[%s5983 + $0x38] sm:$0xf]
        %v5994 = vld [vmem:[%s5983 + $0x3c] sm:$0xff]
        %v5995 = vld [vmem:[%s5983 + $0x44] sm:$0xf]
        %v5996 = vld [vmem:[%s5983 + $0x48] sm:$0xff]
        %v5997 = vld [vmem:[%s5983 + $0x50] sm:$0xf]
        %v5998 = vld [vmem:[%s5983 + $0x54] sm:$0xff]
        %v5999 = vld [vmem:[%s5983 + $0x5c] sm:$0xf]
        %v6000 = vld [vmem:[%s5983 + $0x60] sm:$0xff]
        %v6001 = vld [vmem:[%s5983 + $0x68] sm:$0xf]
        %v6002 = vld [vmem:[%s5983 + $0x6c] sm:$0xff]
        %v6003 = vld [vmem:[%s5983 + $0x74] sm:$0xf]
        %v6004 = vld [vmem:[%s5983 + $0x78] sm:$0xff]
        %v6005 = vld [vmem:[%s5983 + $0x80] sm:$0xf]
        %v6006 = vld [vmem:[%s5983 + $0x84] sm:$0xff]
        %v6007 = vld [vmem:[%s5983 + $0x8c] sm:$0xf]
        %v6008 = vld [vmem:[%s5983 + $0x90] sm:$0xff]
        %v6009 = vld [vmem:[%s5983 + $0x98] sm:$0xf]
        %v6010 = vld [vmem:[%s5983 + $0x9c] sm:$0xff]
        %v6011 = vld [vmem:[%s5983 + $0xa4] sm:$0xf]
        %v6012 = vld [vmem:[%s5983 + $0xa8] sm:$0xff]
        %v6013 = vld [vmem:[%s5983 + $0xb0] sm:$0xf]
        %v6014 = vld [vmem:[%s5983 + $0xb4] sm:$0xff]
        %v6015 = vld [vmem:[%s5983 + $0xbc] sm:$0xf]
        %s6016 = scalar_lea.vmem %s9, 288
        %v6017 = vld [vmem:[%s6016] sm:$0xf]
        %v6018 = vld [vmem:[%s6016 + $0x4] sm:$0xf]
        %v6019 = vld [vmem:[%s6016 + $0x8] sm:$0xf]
        %v6020 = vld [vmem:[%s6016 + $0xc] sm:$0xf]
        %v6021 = vld [vmem:[%s6016 + $0x10] sm:$0xf]
        %v6022 = vld [vmem:[%s6016 + $0x14] sm:$0xf]
        %v6023 = vld [vmem:[%s6016 + $0x18] sm:$0xf]
        %v6024 = vld [vmem:[%s6016 + $0x1c] sm:$0xf]
        %v6025 = vld [vmem:[%s6016 + $0x20] sm:$0xf]
        %v6026 = vld [vmem:[%s6016 + $0x24] sm:$0xf]
        %v6027 = vld [vmem:[%s6016 + $0x28] sm:$0xf]
        %v6028 = vld [vmem:[%s6016 + $0x2c] sm:$0xf]
        %v6029 = vld [vmem:[%s6016 + $0x30] sm:$0xf]
        %v6030 = vld [vmem:[%s6016 + $0x34] sm:$0xf]
        %v6031 = vld [vmem:[%s6016 + $0x38] sm:$0xf]
        %v6032 = vld [vmem:[%s6016 + $0x3c] sm:$0xf]
        %v6033 = vld [vmem:[%s6016 + $0x40] sm:$0xf]
        %v6034 = vld [vmem:[%s6016 + $0x44] sm:$0xf]
        %v6035 = vld [vmem:[%s6016 + $0x48] sm:$0xf]
        %v6036 = vld [vmem:[%s6016 + $0x4c] sm:$0xf]
        %v6037 = vld [vmem:[%s6016 + $0x50] sm:$0xf]
        %v6038 = vld [vmem:[%s6016 + $0x54] sm:$0xf]
        %v6039 = vld [vmem:[%s6016 + $0x58] sm:$0xf]
        %v6040 = vld [vmem:[%s6016 + $0x5c] sm:$0xf]
        %v6041 = vld [vmem:[%s6016 + $0x60] sm:$0xf]
        %v6042 = vld [vmem:[%s6016 + $0x64] sm:$0xf]
        %v6043 = vld [vmem:[%s6016 + $0x68] sm:$0xf]
        %v6044 = vld [vmem:[%s6016 + $0x6c] sm:$0xf]
        %v6045 = vld [vmem:[%s6016 + $0x70] sm:$0xf]
        %v6046 = vld [vmem:[%s6016 + $0x74] sm:$0xf]
        %v6047 = vld [vmem:[%s6016 + $0x78] sm:$0xf]
        %v6048 = vld [vmem:[%s6016 + $0x7c] sm:$0xf]
        %v6049 = vld [vmem:[%s6016 + $0x80] sm:$0xf]
        %v6050 = vld [vmem:[%s6016 + $0x84] sm:$0xf]
        %v6051 = vld [vmem:[%s6016 + $0x88] sm:$0xf]
        %v6052 = vld [vmem:[%s6016 + $0x8c] sm:$0xf]
        %v6085 = vunpack.c.l.b16 %v5984
        %v6086 = vunpack.c.h.b16 %v5984
        %v6087 = vunpack.c.l.b16 %v5985
        %v6088 = vunpack.c.l.b16 %v5986
        %v6089 = vunpack.c.h.b16 %v5986
        %v6090 = vunpack.c.l.b16 %v5987
        %v6091 = vunpack.c.l.b16 %v5988
        %v6092 = vunpack.c.h.b16 %v5988
        %v6093 = vunpack.c.l.b16 %v5989
        %v6094 = vunpack.c.l.b16 %v5990
        %v6095 = vunpack.c.h.b16 %v5990
        %v6096 = vunpack.c.l.b16 %v5991
        %v6097 = vunpack.c.l.b16 %v5992
        %v6098 = vunpack.c.h.b16 %v5992
        %v6099 = vunpack.c.l.b16 %v5993
        %v6100 = vunpack.c.l.b16 %v5994
        %v6101 = vunpack.c.h.b16 %v5994
        %v6102 = vunpack.c.l.b16 %v5995
        %v6103 = vunpack.c.l.b16 %v5996
        %v6104 = vunpack.c.h.b16 %v5996
        %v6105 = vunpack.c.l.b16 %v5997
        %v6106 = vunpack.c.l.b16 %v5998
        %v6107 = vunpack.c.h.b16 %v5998
        %v6108 = vunpack.c.l.b16 %v5999
        %v6109 = vunpack.c.l.b16 %v6000
        %v6110 = vunpack.c.h.b16 %v6000
        %v6111 = vunpack.c.l.b16 %v6001
        %v6112 = vunpack.c.l.b16 %v6002
        %v6113 = vunpack.c.h.b16 %v6002
        %v6114 = vunpack.c.l.b16 %v6003
        %v6115 = vunpack.c.l.b16 %v6004
        %v6116 = vunpack.c.h.b16 %v6004
        %v6117 = vunpack.c.l.b16 %v6005
        %v6118 = vunpack.c.l.b16 %v6006
        %v6119 = vunpack.c.h.b16 %v6006
        %v6120 = vunpack.c.l.b16 %v6007
        %v6121 = vunpack.c.l.b16 %v6008
        %v6122 = vunpack.c.h.b16 %v6008
        %v6123 = vunpack.c.l.b16 %v6009
        %v6124 = vunpack.c.l.b16 %v6010
        %v6125 = vunpack.c.h.b16 %v6010
        %v6126 = vunpack.c.l.b16 %v6011
        %v6127 = vunpack.c.l.b16 %v6012
        %v6128 = vunpack.c.h.b16 %v6012
        %v6129 = vunpack.c.l.b16 %v6013
        %v6130 = vunpack.c.l.b16 %v6014
        %v6131 = vunpack.c.h.b16 %v6014
        %v6132 = vunpack.c.l.b16 %v6015
        %v6133 = vpack.c.b16 %v6088, %v6085
        %v6134 = vpack.c.b16 %v6089, %v6086
        %v6135 = vpack.c.b16 %v6090, %v6087
        %v6136 = vpack.c.b16 %v6094, %v6091
        %v6137 = vpack.c.b16 %v6095, %v6092
        %v6138 = vpack.c.b16 %v6096, %v6093
        %v6139 = vpack.c.b16 %v6100, %v6097
        %v6140 = vpack.c.b16 %v6101, %v6098
        %v6141 = vpack.c.b16 %v6102, %v6099
        %v6142 = vpack.c.b16 %v6106, %v6103
        %v6143 = vpack.c.b16 %v6107, %v6104
        %v6144 = vpack.c.b16 %v6108, %v6105
        %v6145 = vpack.c.b16 %v6112, %v6109
        %v6146 = vpack.c.b16 %v6113, %v6110
        %v6147 = vpack.c.b16 %v6114, %v6111
        %v6148 = vpack.c.b16 %v6118, %v6115
        %v6149 = vpack.c.b16 %v6119, %v6116
        %v6150 = vpack.c.b16 %v6120, %v6117
        %v6151 = vpack.c.b16 %v6124, %v6121
        %v6152 = vpack.c.b16 %v6125, %v6122
        %v6153 = vpack.c.b16 %v6126, %v6123
        %v6154 = vpack.c.b16 %v6130, %v6127
        %v6155 = vpack.c.b16 %v6131, %v6128
        %v6156 = vpack.c.b16 %v6132, %v6129
        %v6209 = vunpack.c.l.b16 %v6017
        %v6210 = vunpack.c.l.b16 %v6018
        %v6211 = vunpack.c.l.b16 %v6019
        %v6212 = vunpack.c.l.b16 %v6020
        %v6213 = vunpack.c.l.b16 %v6021
        %v6214 = vunpack.c.l.b16 %v6022
        %v6215 = vunpack.c.l.b16 %v6023
        %v6216 = vunpack.c.l.b16 %v6024
        %v6217 = vunpack.c.l.b16 %v6025
        %v6218 = vunpack.c.l.b16 %v6026
        %v6219 = vunpack.c.l.b16 %v6027
        %v6220 = vunpack.c.l.b16 %v6028
        %v6221 = vunpack.c.l.b16 %v6029
        %v6222 = vunpack.c.l.b16 %v6030
        %v6223 = vunpack.c.l.b16 %v6031
        %v6224 = vunpack.c.l.b16 %v6032
        %v6225 = vunpack.c.l.b16 %v6033
        %v6226 = vunpack.c.l.b16 %v6034
        %v6227 = vunpack.c.l.b16 %v6035
        %v6228 = vunpack.c.l.b16 %v6036
        %v6229 = vunpack.c.l.b16 %v6037
        %v6230 = vunpack.c.l.b16 %v6038
        %v6231 = vunpack.c.l.b16 %v6039
        %v6232 = vunpack.c.l.b16 %v6040
        %v6233 = vunpack.c.l.b16 %v6041
        %v6234 = vunpack.c.l.b16 %v6042
        %v6235 = vunpack.c.l.b16 %v6043
        %v6236 = vunpack.c.l.b16 %v6044
        %v6237 = vunpack.c.l.b16 %v6045
        %v6238 = vunpack.c.l.b16 %v6046
        %v6239 = vunpack.c.l.b16 %v6047
        %v6240 = vunpack.c.l.b16 %v6048
        %v6241 = vunpack.c.l.b16 %v6049
        %v6242 = vunpack.c.l.b16 %v6050
        %v6243 = vunpack.c.l.b16 %v6051
        %v6244 = vunpack.c.l.b16 %v6052
        %v6245 = vpack.c.b16 %v6210, %v6209
        %v6246 = vpack.c.b16 %v6212, %v6211
        %v6247 = vpack.c.b16 %v6214, %v6213
        %v6248 = vpack.c.b16 %v6216, %v6215
        %v6249 = vpack.c.b16 %v6218, %v6217
        %v6250 = vpack.c.b16 %v6220, %v6219
        %v6251 = vpack.c.b16 %v6222, %v6221
        %v6252 = vpack.c.b16 %v6224, %v6223
        %v6253 = vpack.c.b16 %v6226, %v6225
        %v6254 = vpack.c.b16 %v6228, %v6227
        %v6255 = vpack.c.b16 %v6230, %v6229
        %v6256 = vpack.c.b16 %v6232, %v6231
        %v6257 = vpack.c.b16 %v6234, %v6233
        %v6258 = vpack.c.b16 %v6236, %v6235
        %v6259 = vpack.c.b16 %v6238, %v6237
        %v6260 = vpack.c.b16 %v6240, %v6239
        %v6261 = vpack.c.b16 %v6242, %v6241
        %v6262 = vpack.c.b16 %v6244, %v6243
        %v6282 = vsel %vm1081, %v6135, 0
        %v6285 = vsel %vm1081, %v6138, 0
        %v6288 = vsel %vm1081, %v6141, 0
        %v6291 = vsel %vm1081, %v6144, 0
        %v6294 = vsel %vm1081, %v6147, 0
        %v6297 = vsel %vm1081, %v6150, 0
        %v6300 = vsel %vm1081, %v6153, 0
        %v6303 = vsel %vm1081, %v6156, 0
        %6305 = vmatpush.bf16.msra.mxu0 %v6252
        %6306 = vmatpush.bf16.msra.mxu0 %v6251
        %6307 = vmatpush.bf16.msra.mxu0 %v6250
        %6308 = vmatpush.bf16.msra.mxu0 %v6249
        %6309 = vmatpush.bf16.msra.mxu0 %v6248
        %6310 = vmatpush.bf16.msra.mxu0 %v6247
        %6311 = vmatpush.bf16.msra.mxu0 %v6246
        %6312 = vmatpush.bf16.msra.mxu0 %v6245
        %6313 = vmatmul.bf16.gmra.mxu0 %v6133
        %v6314 = vpop.f32.mrf.mxu0
        %v6315 = vadd.f32 0.0, %v6314
        %v6316 = vpop.f32.mrf.mxu0
        %v6317 = vadd.f32 0.0, %v6316
        %6318 = vmatmul.bf16.gmra.mxu0 %v6136
        %v6319 = vpop.f32.mrf.mxu0
        %v6320 = vadd.f32 0.0, %v6319
        %v6321 = vpop.f32.mrf.mxu0
        %v6322 = vadd.f32 0.0, %v6321
        %6323 = vmatmul.bf16.gmra.mxu0 %v6139
        %v6324 = vpop.f32.mrf.mxu0
        %v6325 = vadd.f32 0.0, %v6324
        %v6326 = vpop.f32.mrf.mxu0
        %v6327 = vadd.f32 0.0, %v6326
        %6328 = vmatmul.bf16.gmra.mxu0 %v6142
        %v6329 = vpop.f32.mrf.mxu0
        %v6330 = vadd.f32 0.0, %v6329
        %v6331 = vpop.f32.mrf.mxu0
        %v6332 = vadd.f32 0.0, %v6331
        %6333 = vmatmul.bf16.gmra.mxu0 %v6145
        %v6334 = vpop.f32.mrf.mxu0
        %v6335 = vadd.f32 0.0, %v6334
        %v6336 = vpop.f32.mrf.mxu0
        %v6337 = vadd.f32 0.0, %v6336
        %6338 = vmatmul.bf16.gmra.mxu0 %v6148
        %v6339 = vpop.f32.mrf.mxu0
        %v6340 = vadd.f32 0.0, %v6339
        %v6341 = vpop.f32.mrf.mxu0
        %v6342 = vadd.f32 0.0, %v6341
        %6343 = vmatmul.bf16.gmra.mxu0 %v6151
        %v6344 = vpop.f32.mrf.mxu0
        %v6345 = vadd.f32 0.0, %v6344
        %v6346 = vpop.f32.mrf.mxu0
        %v6347 = vadd.f32 0.0, %v6346
        %6348 = vmatmul.bf16.gmra.mxu0 %v6154
        %v6349 = vpop.f32.mrf.mxu0
        %v6350 = vadd.f32 0.0, %v6349
        %v6351 = vpop.f32.mrf.mxu0
        %v6352 = vadd.f32 0.0, %v6351
        %6353 = vdwg.mxu0
        %6354 = vmatpush.bf16.msra.mxu0 %v6260
        %6355 = vmatpush.bf16.msra.mxu0 %v6259
        %6356 = vmatpush.bf16.msra.mxu0 %v6258
        %6357 = vmatpush.bf16.msra.mxu0 %v6257
        %6358 = vmatpush.bf16.msra.mxu0 %v6256
        %6359 = vmatpush.bf16.msra.mxu0 %v6255
        %6360 = vmatpush.bf16.msra.mxu0 %v6254
        %6361 = vmatpush.bf16.msra.mxu0 %v6253
        %6362 = vmatmul.bf16.gmra.mxu0 %v6134
        %v6363 = vpop.f32.mrf.mxu0
        %v6364 = vadd.f32 %v6315, %v6363
        %v6365 = vpop.f32.mrf.mxu0
        %v6366 = vadd.f32 %v6317, %v6365
        %6367 = vmatmul.bf16.gmra.mxu0 %v6137
        %v6368 = vpop.f32.mrf.mxu0
        %v6369 = vadd.f32 %v6320, %v6368
        %v6370 = vpop.f32.mrf.mxu0
        %v6371 = vadd.f32 %v6322, %v6370
        %6372 = vmatmul.bf16.gmra.mxu0 %v6140
        %v6373 = vpop.f32.mrf.mxu0
        %v6374 = vadd.f32 %v6325, %v6373
        %v6375 = vpop.f32.mrf.mxu0
        %v6376 = vadd.f32 %v6327, %v6375
        %6377 = vmatmul.bf16.gmra.mxu0 %v6143
        %v6378 = vpop.f32.mrf.mxu0
        %v6379 = vadd.f32 %v6330, %v6378
        %v6380 = vpop.f32.mrf.mxu0
        %v6381 = vadd.f32 %v6332, %v6380
        %6382 = vmatmul.bf16.gmra.mxu0 %v6146
        %v6383 = vpop.f32.mrf.mxu0
        %v6384 = vadd.f32 %v6335, %v6383
        %v6385 = vpop.f32.mrf.mxu0
        %v6386 = vadd.f32 %v6337, %v6385
        %6387 = vmatmul.bf16.gmra.mxu0 %v6149
        %v6388 = vpop.f32.mrf.mxu0
        %v6389 = vadd.f32 %v6340, %v6388
        %v6390 = vpop.f32.mrf.mxu0
        %v6391 = vadd.f32 %v6342, %v6390
        %6392 = vmatmul.bf16.gmra.mxu0 %v6152
        %v6393 = vpop.f32.mrf.mxu0
        %v6394 = vadd.f32 %v6345, %v6393
        %v6395 = vpop.f32.mrf.mxu0
        %v6396 = vadd.f32 %v6347, %v6395
        %6397 = vmatmul.bf16.gmra.mxu0 %v6155
        %v6398 = vpop.f32.mrf.mxu0
        %v6399 = vadd.f32 %v6350, %v6398
        %v6400 = vpop.f32.mrf.mxu0
        %v6401 = vadd.f32 %v6352, %v6400
        %6402 = vdwg.mxu0
        %6403 = vmatpush.bf16.msra.mxu0 0
        %6404 = vmatpush.bf16.msra.mxu0 0
        %6405 = vmatpush.bf16.msra.mxu0 0
        %6406 = vmatpush.bf16.msra.mxu0 0
        %6407 = vmatpush.bf16.msra.mxu0 0
        %6408 = vmatpush.bf16.msra.mxu0 0
        %6409 = vmatpush.bf16.msra.mxu0 %v6262
        %6410 = vmatpush.bf16.msra.mxu0 %v6261
        %6411 = vmatmul.bf16.gmra.mxu0 %v6282
        %v6412 = vpop.f32.mrf.mxu0
        %v6413 = vadd.f32 %v6364, %v6412
        %v6414 = vpop.f32.mrf.mxu0
        %v6415 = vadd.f32 %v6366, %v6414
        %6416 = vmatmul.bf16.gmra.mxu0 %v6285
        %v6417 = vpop.f32.mrf.mxu0
        %v6418 = vadd.f32 %v6369, %v6417
        %v6419 = vpop.f32.mrf.mxu0
        %v6420 = vadd.f32 %v6371, %v6419
        %6421 = vmatmul.bf16.gmra.mxu0 %v6288
        %v6422 = vpop.f32.mrf.mxu0
        %v6423 = vadd.f32 %v6374, %v6422
        %v6424 = vpop.f32.mrf.mxu0
        %v6425 = vadd.f32 %v6376, %v6424
        %6426 = vmatmul.bf16.gmra.mxu0 %v6291
        %v6427 = vpop.f32.mrf.mxu0
        %v6428 = vadd.f32 %v6379, %v6427
        %v6429 = vpop.f32.mrf.mxu0
        %v6430 = vadd.f32 %v6381, %v6429
        %6431 = vmatmul.bf16.gmra.mxu0 %v6294
        %v6432 = vpop.f32.mrf.mxu0
        %v6433 = vadd.f32 %v6384, %v6432
        %v6434 = vpop.f32.mrf.mxu0
        %v6435 = vadd.f32 %v6386, %v6434
        %6436 = vmatmul.bf16.gmra.mxu0 %v6297
        %v6437 = vpop.f32.mrf.mxu0
        %v6438 = vadd.f32 %v6389, %v6437
        %v6439 = vpop.f32.mrf.mxu0
        %v6440 = vadd.f32 %v6391, %v6439
        %6441 = vmatmul.bf16.gmra.mxu0 %v6300
        %v6442 = vpop.f32.mrf.mxu0
        %v6443 = vadd.f32 %v6394, %v6442
        %v6444 = vpop.f32.mrf.mxu0
        %v6445 = vadd.f32 %v6396, %v6444
        %6446 = vmatmul.bf16.gmra.mxu0 %v6303
        %v6447 = vpop.f32.mrf.mxu0
        %v6448 = vadd.f32 %v6399, %v6447
        %v6449 = vpop.f32.mrf.mxu0
        %v6450 = vadd.f32 %v6401, %v6449
        %6451 = vdwg.mxu0
        %v6452 = vadd.f32 %v5967, %v6413
        %v6453 = vadd.f32 %v5968, %v6415
        %v6454 = vadd.f32 %v5969, %v6418
        %v6455 = vadd.f32 %v5970, %v6420
        %v6456 = vadd.f32 %v5971, %v6423
        %v6457 = vadd.f32 %v5972, %v6425
        %v6458 = vadd.f32 %v5973, %v6428
        %v6459 = vadd.f32 %v5974, %v6430
        %v6460 = vadd.f32 %v5975, %v6433
        %v6461 = vadd.f32 %v5976, %v6435
        %v6462 = vadd.f32 %v5977, %v6438
        %v6463 = vadd.f32 %v5978, %v6440
        %v6464 = vadd.f32 %v5979, %v6443
        %v6465 = vadd.f32 %v5980, %v6445
        %v6466 = vadd.f32 %v5981, %v6448
        %v6467 = vadd.f32 %v5982, %v6450
        %vm6468 = vcmask 293888
        %6469 = vst.msk [vmem:[%s603] sm:$0xff] %vm6468, %v6452
        %6470 = vst.msk [vmem:[%s603 + $0x8] sm:$0xff] %vm6468, %v6453
        %6471 = vst.msk [vmem:[%s603 + $0x10] sm:$0xff] %vm6468, %v6454
        %6472 = vst.msk [vmem:[%s603 + $0x18] sm:$0xff] %vm6468, %v6455
        %6473 = vst.msk [vmem:[%s603 + $0x20] sm:$0xff] %vm6468, %v6456
        %6474 = vst.msk [vmem:[%s603 + $0x28] sm:$0xff] %vm6468, %v6457
        %6475 = vst.msk [vmem:[%s603 + $0x30] sm:$0xff] %vm6468, %v6458
        %6476 = vst.msk [vmem:[%s603 + $0x38] sm:$0xff] %vm6468, %v6459
        %6477 = vst.msk [vmem:[%s603 + $0x40] sm:$0xff] %vm6468, %v6460
        %6478 = vst.msk [vmem:[%s603 + $0x48] sm:$0xff] %vm6468, %v6461
        %6479 = vst.msk [vmem:[%s603 + $0x50] sm:$0xff] %vm6468, %v6462
        %6480 = vst.msk [vmem:[%s603 + $0x58] sm:$0xff] %vm6468, %v6463
        %6481 = vst.msk [vmem:[%s603 + $0x60] sm:$0xff] %vm6468, %v6464
        %6482 = vst.msk [vmem:[%s603 + $0x68] sm:$0xff] %vm6468, %v6465
        %6483 = vst.msk [vmem:[%s603 + $0x70] sm:$0xff] %vm6468, %v6466
        %6484 = vst.msk [vmem:[%s603 + $0x78] sm:$0xff] %vm6468, %v6467
        %s6485 = smul.u32 8, %s32
        %p6486 = scmp.lt.s32.totalorder %s31, 1
        %s6487 = scalar_select %p6486, %s31, 1
        %p6488 = scmp.lt.s32.totalorder %s6485, 15
        %s6489 = scalar_select %p6488, %s6485, 15
        %s6490 = smul.addr %s6489, 2
        %s6491 = smul.addr %s6487, 32
        %s6492 = sadd.s32 %s6490, %s6491
        %s6493 = smul.addr %s6492, 8
        %s6494 = scalar_lea.vmem %s11, %s6493
        %s6495 = sand.u32 %s345, 1
        %s6496 = scalar_lea.sflag [#allocation5], %s6495
        %s6497 = sand.u32 %s345, 1
        %s6498 = smul.addr %s6497, 128
        %s6499 = scalar_lea.vmem [#allocation4], %s6498
        // Predicated region
        $region65: #{residual_block_nobn_last.1} parent=63 // pred_check
          %p6500 = pneg %p327
        $region66: #{residual_block_nobn_last.1} parent=63 // pred_check_branch
          %6502 = sbr.rel (%p6500) target = $region68
        $region67: #{residual_block_nobn_last.1} parent=63 // pred_region
          %s6503 = smul.u32 8, %s32
        $region68: #{residual_block_nobn_last.1} parent=63 // pred_fallthru
          _
        // Predicated region
        $region69: #{residual_block_nobn_last.1} parent=63 // pred_check
          %p6504 = pneg %p355
        $region70: #{residual_block_nobn_last.1} parent=63 // pred_check_branch
          %6506 = sbr.rel (%p6504) target = $region72
        $region71: #{residual_block_nobn_last.1} parent=63 // pred_region
          %s6507 = smul.u32 8, %s32
          %6509 = vsyncadd %s6496, 0
          %s6510 = smul.addr %s6507, 2
          %s6511 = smul.addr %s31, 32
          %s6512 = sadd.s32 %s6510, %s6511
          %s6513 = smul.addr %s6512, 8
          %s6514 = scalar_lea.hbm %s12, %s6513
          %s6515 = sshll.u32 %s6499, 4
          %s6516 = int_to_ptr.vmem [resolvable:$true] %s6515
          %s6517 = sshll.u32 %s6514, 4
          %s6518 = int_to_ptr.hbm [resolvable:$true] %s6517
          %6523 = dma.vmem_to_hbm [thread:$0]  %s6516, 2048, %s6518, %s6496, 128, 128, 8
        $region72: #{residual_block_nobn_last.1} parent=63 // pred_fallthru
          _
      $region64: #{residual_block_nobn_last.1} parent=5 // pred_fallthru
        _
      %p6524 = scmp.le.s32.totalorder 2, %s22
      // Predicated region
      $region73: #{residual_block_nobn_last.1} parent=5 // pred_check
        %p6525 = pneg %p6524
      $region74: #{residual_block_nobn_last.1} parent=5 // pred_check_branch
        %6527 = sbr.rel (%p6525) target = $region76
      $region75: #{residual_block_nobn_last.1} parent=5 // pred_region
        %s6528 = ssub.s32 %s22, 2
        // Predicated region
        $region77: #{residual_block_nobn_last.1} parent=75 // pred_check
          %p6529 = pneg %p333
        $region78: #{residual_block_nobn_last.1} parent=75 // pred_check_branch
          %6531 = sbr.rel (%p6529) target = $region80
        $region79: #{residual_block_nobn_last.1} parent=75 // pred_region
          %s6532 = smul.u32 8, %s34
          %p6533 = scmp.lt.s32.totalorder %s33, 1
          %s6534 = scalar_select %p6533, %s33, 1
          %p6535 = scmp.lt.s32.totalorder %s6532, 15
          %s6536 = scalar_select %p6535, %s6532, 15
          %s6537 = smul.addr %s6536, 2
          %s6538 = smul.addr %s6534, 32
          %s6539 = sadd.s32 %s6537, %s6538
          %s6540 = smul.addr %s6539, 8
          %s6541 = scalar_lea.vmem %s11, %s6540
        $region80: #{residual_block_nobn_last.1} parent=75 // pred_fallthru
          _
        // Predicated region
        $region81: #{residual_block_nobn_last.1} parent=75 // pred_check
          %p6542 = pneg %p361
        $region82: #{residual_block_nobn_last.1} parent=75 // pred_check_branch
          %6544 = sbr.rel (%p6542) target = $region84
        $region83: #{residual_block_nobn_last.1} parent=75 // pred_region
          %s6545 = sand.u32 %s346, 1
          %s6546 = scalar_lea.sflag [#allocation5], %s6545
          %s6547 = sand.u32 %s346, 1
          %s6548 = smul.addr %s6547, 128
          %s6549 = scalar_lea.vmem [#allocation4], %s6548
          %6551 = dma.done %s6546, 2048
        $region84: #{residual_block_nobn_last.1} parent=75 // pred_fallthru
          _
      $region76: #{residual_block_nobn_last.1} parent=5 // pred_fallthru
        _
    $region6: #{residual_block_nobn_last.1} parent=1 // loop_footer
      %s26 = sadd.s32 1, %s22
    $region7: #{residual_block_nobn_last.1} parent=1 // loop_footer_branch
      %21 = sbr.rel target = $region3
    $region8: #{residual_block_nobn_last.1} parent=1 // loop_exit
      _
    %6552 = vsyncpa [#allocation5], 1
    %s6553 = scalar_lea.sflag [#allocation5], 1
    %6554 = vsyncpa %s6553, 1

</llo_original>
